<compile_context>
chip_gen: v7x
topology: tpu7x:2x2x1
jax: 0.10.0
libtpu: 0.0.40
codegen_flags: <defaults>
</compile_context>

<pallas_src>
import functools

import jax
import jax.numpy as jnp
from jax.experimental import pallas as pl
from jax.experimental.pallas import tpu as pltpu

_LANE = 128
_VMEM_LIMIT = 32 * 1024 * 1024          # explicit scoped-VMEM cap (safe on v5e/v6e/v7x)
_TILE_BUDGET = 4 * 1024 * 1024          # per-buffer-set budget for the K-tile picker


def _round_up(x, m):
    return (x + m - 1) // m * m


def _pick_tile_m(m_pad, cap=256):
    """Largest multiple of 128 <= cap that divides m_pad (m_pad is 128-aligned)."""
    tm = _LANE
    t = _LANE
    while t <= min(m_pad, cap):
        if m_pad % t == 0:
            tm = t
        t += _LANE
    return tm


def _pick_tile_k(k_total, tm, h_pad, budget_bytes=_TILE_BUDGET):
    """Largest 128-multiple dividing k_total whose (A-tile + Y-tile) bf16 bytes fit."""
    tk = _LANE
    t = _LANE
    while t <= k_total:
        if k_total % t == 0 and (tm * t + t * h_pad) * 2 <= budget_bytes:
            tk = t
        t += _LANE
    return tk


# ----------------------------- Pallas kernels ------------------------------ #

def _xw_kernel(x_ref, w_ref, o_ref):
    """Lane-dense stacked projection: o(TM, R*H) = X(TM, F) @ W_flat(F, R*H)."""
    o_ref[...] = jnp.dot(x_ref[...], w_ref[...],
                         preferred_element_type=jnp.float32).astype(o_ref.dtype)


def _ay_bias_kernel(a_ref, y_ref, b_ref, o_ref, *, apply_relu):
    """K-tiled matmul with output-resident f32 accumulator:
         o(TM, H) += A(TM, TK) @ Y(TK, H);  epilogue: + bias (and ReLU for layer 1)."""
    k = pl.program_id(1)

    @pl.when(k == 0)
    def _():
        o_ref[...] = jnp.zeros_like(o_ref)

    o_ref[...] += jnp.dot(a_ref[...], y_ref[...],
                          preferred_element_type=jnp.float32)

    @pl.when(k == pl.num_programs(1) - 1)
    def _():
        res = o_ref[...] + b_ref[...]
        if apply_relu:
            res = jnp.maximum(res, 0.0)
        o_ref[...] = res


def _rgc_layer(a_flat, x_pad, w_flat, bias_pad, *, relu):
    """One R-GCN layer: sum_r A[r] @ (X @ W[r]) + b  (optional fused ReLU).

    a_flat:   (N_pad, R*N_pad) bf16  -- per-relation adjacency blocks, lane-concatenated
    x_pad:    (N_pad, F_pad)   bf16
    w_flat:   (F_pad, R*H_pad) bf16  -- W transposed to (F, R, H) and flattened
    bias_pad: (1, H_pad)       f32
    returns:  (N_pad, H_pad)   f32
    """
    n_pad, f_pad = x_pad.shape
    rh_pad = w_flat.shape[1]
    h_pad = bias_pad.shape[1]
    k_total = a_flat.shape[1]
    r = rh_pad // h_pad
    assert k_total == r * n_pad

    tm = _pick_tile_m(n_pad)

    # Stage 1: Y = X @ [W_0 | W_1 | ... | W_{R-1}]  -> (N_pad, R*H_pad), lane-dense output.
    y_flat = pl.pallas_call(
        _xw_kernel,
        out_shape=jax.ShapeDtypeStruct((n_pad, rh_pad), jnp.bfloat16),
        grid_spec=pltpu.PrefetchScalarGridSpec(
            num_scalar_prefetch=0,
            grid=(n_pad // tm,),
            in_specs=[
                pl.BlockSpec((tm, f_pad), lambda m: (m, 0)),
                pl.BlockSpec((f_pad, rh_pad), lambda m: (0, 0)),
            ],
            out_specs=pl.BlockSpec((tm, rh_pad), lambda m: (m, 0)),
        ),
        compiler_params=pltpu.CompilerParams(
            dimension_semantics=("parallel",),
            vmem_limit_bytes=_VMEM_LIMIT),
    )(x_pad, w_flat)

    # Restack (N_pad, R, H_pad) -> (R*N_pad, H_pad): layout plumbing outside the kernel.
    y_stacked = (y_flat.reshape(n_pad, r, h_pad)
                 .transpose(1, 0, 2)
                 .reshape(r * n_pad, h_pad))

    tk = _pick_tile_k(k_total, tm, h_pad)
    kernel = functools.partial(_ay_bias_kernel, apply_relu=relu)

    # Stage 2: out = A_flat @ Y_stacked + b  (K-tiled reduction, f32 accumulate in o_ref).
    out = pl.pallas_call(
        kernel,
        out_shape=jax.ShapeDtypeStruct((n_pad, h_pad), jnp.float32),
        grid_spec=pltpu.PrefetchScalarGridSpec(
            num_scalar_prefetch=0,
            grid=(n_pad // tm, k_total // tk),
            in_specs=[
                pl.BlockSpec((tm, tk), lambda m, k: (m, k)),
                pl.BlockSpec((tk, h_pad), lambda m, k: (k, 0)),
                pl.BlockSpec((1, h_pad), lambda m, k: (0, 0)),
            ],
            out_specs=pl.BlockSpec((tm, h_pad), lambda m, k: (m, 0)),
        ),
        compiler_params=pltpu.CompilerParams(
            dimension_semantics=("parallel", "arbitrary"),
            vmem_limit_bytes=_VMEM_LIMIT),
    )(a_flat, y_stacked, bias_pad)
    return out


# ----------------------- graph preprocessing (glue) ------------------------ #

def add_inverse_and_self(triples, nnodes, nrel):
    s, p, o = triples[:, 0], triples[:, 1], triples[:, 2]
    inverse = jnp.stack([o, p + nrel, s], axis=1)
    ids = jnp.arange(nnodes, dtype=triples.dtype)
    self_loops = jnp.stack(
        [ids, jnp.full((nnodes,), 2 * nrel, dtype=triples.dtype), ids], axis=1)
    return jnp.concatenate([triples, inverse, self_loops], axis=0)


def build_dense_adjacencies(triples_plus, nnodes, nrel, num_general_edges):
    """Dense equivalents of torch_rgcn's stacked + normalised sparse adjacency.

    Returns:
      A_h: (R, N, N) per-relation slices of the horizontally stacked,
           column-normalised adjacency (layer 1, vertical_stacking=False).
      A_v: (R, N, N) per-relation slices of the vertically stacked,
           row-normalised adjacency (layer 2, vertical_stacking=True).
    """
    R = 2 * nrel + 1
    E = num_general_edges
    fr = triples_plus[:, 0]
    rel = triples_plus[:, 1]
    to = triples_plus[:, 2]

    # --- vertical stacking (R*N, N), row-normalised -------------------------
    row_v = rel * nnodes + fr
    rowsum = jnp.zeros((R * nnodes,), jnp.float32).at[row_v].add(1.0)
    vals_v = 1.0 / rowsum[row_v]
    A_v = jnp.zeros((R * nnodes, nnodes), jnp.float32).at[row_v, to].add(vals_v)
    A_v = A_v.reshape(R, nnodes, nnodes)

    # --- horizontal stacking (N, R*N), column-normalised ---------------------
    col_h = rel * nnodes + to
    colsum = jnp.zeros((R * nnodes,), jnp.float32).at[col_h].add(1.0)
    sums = colsum[col_h]
    # transpose trick reorder: original edges use inverse-edge sums & vice versa,
    # self-loop sums stay (matches torch_rgcn's torch.cat([sums[n:2n], sums[:n], sums[-i:]]))
    sums = jnp.concatenate([sums[E:2 * E], sums[:E], sums[2 * E:]], axis=0)
    vals_h = 1.0 / sums
    A_h = jnp.zeros((nnodes, R * nnodes), jnp.float32).at[fr, col_h].add(vals_h)
    A_h = A_h.reshape(nnodes, R, nnodes).transpose(1, 0, 2)

    return A_h, A_v


# ---------------------- padding / flattening helpers ------------------------ #

def _pad_and_flatten_adj(adj, n_pad):
    """(R, N, N) f32 -> (N_pad, R*N_pad) bf16 with relation blocks on the lane axis."""
    R, n, _ = adj.shape
    a_p = jnp.zeros((R, n_pad, n_pad), jnp.float32).at[:, :n, :n].set(adj)
    return a_p.transpose(1, 0, 2).reshape(n_pad, R * n_pad).astype(jnp.bfloat16)


def _pad_and_flatten_w(w, f_pad, h_pad):
    """(R, F, H) f32 -> (F_pad, R*H_pad) bf16 = [W_0 | W_1 | ... ] on the lane axis."""
    R, f, h = w.shape
    w_p = jnp.zeros((R, f_pad, h_pad), jnp.float32).at[:, :f, :h].set(w)
    return w_p.transpose(1, 0, 2).reshape(f_pad, R * h_pad).astype(jnp.bfloat16)


def _pad_bias(b, h_pad):
    return jnp.zeros((1, h_pad), jnp.float32).at[0, :b.shape[0]].set(b)


# --------------------------- parameter creation ----------------------------- #

def glorot_uniform(key, shape, fan_in, fan_out):
    limit = jnp.sqrt(6.0 / (fan_in + fan_out))
    return jax.random.uniform(key, shape, jnp.float32, -limit, limit)


def init_params(key, nnodes, nrel, nemb, nhid, nclass):
    R = 2 * nrel + 1
    k0, k1, k2 = jax.random.split(key, 3)
    node_embeddings = glorot_uniform(k0, (nnodes, nemb), nnodes, nemb)
    w1 = glorot_uniform(k1, (R, nemb, nhid), nemb, nhid)
    b1 = jnp.zeros((nhid,), jnp.float32)          # torch_rgcn zero-inits bias
    w2 = glorot_uniform(k2, (R, nhid, nclass), nhid, nclass)
    b2 = jnp.zeros((nclass,), jnp.float32)
    return node_embeddings, w1, b1, w2, b2


# ------------------------------- forward ------------------------------------ #

@functools.partial(jax.jit, static_argnames=("nnodes", "nrel"))
def embedding_node_classifier_forward(triples, node_embeddings, w1, b1, w2, b2,
                                      *, nnodes, nrel):
    triples_plus = add_inverse_and_self(triples, nnodes, nrel)
    A_h, A_v = build_dense_adjacencies(triples_plus, nnodes, nrel,
                                       num_general_edges=triples.shape[0])

    nemb = node_embeddings.shape[1]
    nhid = w1.shape[2]
    nclass = w2.shape[2]
    n_pad = _round_up(nnodes, _LANE)
    f_pad = _round_up(nemb, _LANE)
    h_pad = _round_up(nhid, _LANE)
    c_pad = _round_up(nclass, _LANE)

    a_h_flat = _pad_and_flatten_adj(A_h, n_pad)
    a_v_flat = _pad_and_flatten_adj(A_v, n_pad)

    x_pad = (jnp.zeros((n_pad, f_pad), jnp.float32)
             .at[:nnodes, :nemb].set(node_embeddings)).astype(jnp.bfloat16)

    # Layer 1 (horizontal stacking) with fused ReLU epilogue, f32 output.
    h = _rgc_layer(a_h_flat, x_pad,
                   _pad_and_flatten_w(w1, f_pad, h_pad),
                   _pad_bias(b1, h_pad), relu=True)

    # Layer 2 (vertical stacking): sum_r (A_v[r] @ h) @ W2[r] == sum_r A_v[r] @ (h @ W2[r]).
    out = _rgc_layer(a_v_flat, h.astype(jnp.bfloat16),
                     _pad_and_flatten_w(w2, h_pad, c_pad),
                     _pad_bias(b2, c_pad), relu=False)

    return out[:nnodes, :nclass]


def reference_forward(triples, node_embeddings, w1, b1, w2, b2, nnodes, nrel):
    triples_plus = add_inverse_and_self(triples, nnodes, nrel)
    A_h, A_v = build_dense_adjacencies(triples_plus, nnodes, nrel,
                                       num_general_edges=triples.shape[0])
    fw = jnp.einsum('ni,rio->rno', node_embeddings, w1)
    x = jnp.einsum('rmn,rno->mo', A_h, fw) + b1
    x = jnp.maximum(x, 0.0)
    af = jnp.einsum('rmn,ni->rmi', A_v, x)
    x = jnp.einsum('rio,rni->no', w2, af) + b2
    return x


# --------------------------------- main -------------------------------------- #

if __name__ == "__main__":
    nnodes, nrel = 64, 4
    nemb, nhid, nclass = 32, 16, 8
    num_edges = 96

    key = jax.random.PRNGKey(0)
    k_s, k_p, k_o, k_params = jax.random.split(key, 4)
    triples = jnp.stack([
        jax.random.randint(k_s, (num_edges,), 0, nnodes, dtype=jnp.int32),
        jax.random.randint(k_p, (num_edges,), 0, nrel, dtype=jnp.int32),
        jax.random.randint(k_o, (num_edges,), 0, nnodes, dtype=jnp.int32),
    ], axis=1)

    node_embeddings, w1, b1, w2, b2 = init_params(
        k_params, nnodes, nrel, nemb, nhid, nclass)

    out = embedding_node_classifier_forward(
        triples, node_embeddings, w1, b1, w2, b2, nnodes=nnodes, nrel=nrel)
    out = jax.block_until_ready(out)
    assert out.shape == (nnodes, nclass), out.shape

    ref = reference_forward(triples, node_embeddings, w1, b1, w2, b2, nnodes, nrel)
    # bf16 MXU operands (f32 accumulation / bias) -> slightly looser tolerance than f32.
    assert jnp.allclose(out, ref, rtol=2e-2, atol=2e-2), \
        float(jnp.max(jnp.abs(out - ref)))

    print("KERNEL_OK")
</pallas_src>

<mosaic_0001>
module attributes {stable_mosaic.version = 11 : i64} {
  func.func private @main(%arg0: i32) attributes {dimension_semantics = [#tpu.dimension_semantics<core_parallel>], iteration_bounds = array<i64: 2>, tpu.core_type = #tpu.core_type<sc_scalar_subcore>, window_params = []} {
    return
  }
}

module attributes {stable_mosaic.version = 11 : i64} {
  func.func private @main(%arg0: i32) attributes {dimension_semantics = [#tpu.dimension_semantics<core_parallel>], iteration_bounds = array<i64: 2>, tpu.core_type = #tpu.core_type<sc_scalar_subcore>, window_params = []} {
    return
  }
}

module attributes {stable_mosaic.version = 11 : i64} {
  func.func @_xw_kernel(%arg0: i32, %arg1: memref<128x128xbf16, #tpu.memory_space<vmem>>, %arg2: memref<128x1152xbf16, #tpu.memory_space<vmem>>, %arg3: memref<128x1152xbf16, #tpu.memory_space<vmem>>) attributes {dimension_semantics = [#tpu.dimension_semantics<parallel>], iteration_bounds = array<i64: 1>, scalar_prefetch = 0 : i64, scratch_operands = 0 : i64, tpu.core_type = #tpu.core_type<tc>, window_params = [{transform_indices = @transform_0, window_bounds = array<i64: 128, 128>}, {pipeline_mode = #tpu.pipeline_mode<synchronous>, transform_indices = @transform_1, window_bounds = array<i64: 128, 1152>}, {transform_indices = @transform_2, window_bounds = array<i64: 128, 1152>}]} {
    %c0 = arith.constant 0 : index
    %c0_0 = arith.constant 0 : index
    %0 = vector.load %arg1[%c0, %c0_0] : memref<128x128xbf16, #tpu.memory_space<vmem>>, vector<128x128xbf16>
    %c0_1 = arith.constant 0 : index
    %c0_2 = arith.constant 0 : index
    %1 = vector.load %arg2[%c0_1, %c0_2] : memref<128x1152xbf16, #tpu.memory_space<vmem>>, vector<128x1152xbf16>
    %cst = arith.constant dense<0.000000e+00> : vector<128x1152xf32>
    %2 = tpu.matmul %0, %1, %cst {dimension_numbers = #tpu.dot_dimension_numbers<[1], [0], [0], [1], [0, 0, 1, 1], [], []>} : vector<128x128xbf16>, vector<128x1152xbf16>, vector<128x1152xf32> -> vector<128x1152xf32>
    %3 = arith.truncf %2 : vector<128x1152xf32> to vector<128x1152xbf16>
    %c0_3 = arith.constant 0 : index
    %c0_4 = arith.constant 0 : index
    %4 = vector.load %arg3[%c0_3, %c0_4] : memref<128x1152xbf16, #tpu.memory_space<vmem>>, vector<128x1152xbf16>
    tpu.vector_store %arg3[%c0_3, %c0_4], %3 {strides = array<i32>} : memref<128x1152xbf16, #tpu.memory_space<vmem>>, vector<128x1152xbf16>,
    return
  }
  func.func @transform_0(%arg0: i32) -> (i32, i32) {
    %c0_i32 = arith.constant 0 : i32
    %c0_i32_0 = arith.constant 0 : i32
    return %arg0, %c0_i32 : i32, i32
  }
  func.func @transform_1(%arg0: i32) -> (i32, i32) {
    %c0_i32 = arith.constant 0 : i32
    %c0_i32_0 = arith.constant 0 : i32
    %c0_i32_1 = arith.constant 0 : i32
    return %c0_i32, %c0_i32_0 : i32, i32
  }
  func.func @transform_2(%arg0: i32) -> (i32, i32) {
    %c0_i32 = arith.constant 0 : i32
    %c0_i32_0 = arith.constant 0 : i32
    return %arg0, %c0_i32 : i32, i32
  }
}

module attributes {stable_mosaic.version = 11 : i64} {
  func.func @_ay_bias_kernel(%arg0: i32, %arg1: i32, %arg2: memref<128x1152xbf16, #tpu.memory_space<vmem>>, %arg3: memref<1152x128xbf16, #tpu.memory_space<vmem>>, %arg4: memref<1x128xf32, #tpu.memory_space<vmem>>, %arg5: memref<128x128xf32, #tpu.memory_space<vmem>>) attributes {dimension_semantics = [#tpu.dimension_semantics<parallel>, #tpu.dimension_semantics<arbitrary>], iteration_bounds = array<i64: 1, 1>, scalar_prefetch = 0 : i64, scratch_operands = 0 : i64, tpu.core_type = #tpu.core_type<tc>, window_params = [{transform_indices = @transform_0, window_bounds = array<i64: 128, 1152>}, {transform_indices = @transform_1, window_bounds = array<i64: 1152, 128>}, {pipeline_mode = #tpu.pipeline_mode<synchronous>, transform_indices = @transform_2, window_bounds = array<i64: 1, 128>}, {transform_indices = @transform_3, window_bounds = array<i64: 128, 128>}]} {
    %c0_i32 = arith.constant 0 : i32
    %0 = arith.cmpi eq, %arg1, %c0_i32 : i32
    %1 = arith.extui %0 : i1 to i32
    %c0_i32_0 = arith.constant 0 : i32
    %2 = arith.cmpi ne, %1, %c0_i32_0 : i32
    scf.if %2 {
      %cst_10 = arith.constant 0.000000e+00 : f32
      %12 = vector.broadcast %cst_10 : f32 to vector<128x128xf32>
      %c0_11 = arith.constant 0 : index
      %c0_12 = arith.constant 0 : index
      %13 = vector.load %arg5[%c0_11, %c0_12] : memref<128x128xf32, #tpu.memory_space<vmem>>, vector<128x128xf32>
      tpu.vector_store %arg5[%c0_11, %c0_12], %12 {strides = array<i32>} : memref<128x128xf32, #tpu.memory_space<vmem>>, vector<128x128xf32>,
    } else {
    }
    %c0 = arith.constant 0 : index
    %c0_1 = arith.constant 0 : index
    %3 = vector.load %arg5[%c0, %c0_1] : memref<128x128xf32, #tpu.memory_space<vmem>>, vector<128x128xf32>
    %c0_2 = arith.constant 0 : index
    %c0_3 = arith.constant 0 : index
    %4 = vector.load %arg2[%c0_2, %c0_3] : memref<128x1152xbf16, #tpu.memory_space<vmem>>, vector<128x1152xbf16>
    %c0_4 = arith.constant 0 : index
    %c0_5 = arith.constant 0 : index
    %5 = vector.load %arg3[%c0_4, %c0_5] : memref<1152x128xbf16, #tpu.memory_space<vmem>>, vector<1152x128xbf16>
    %cst = arith.constant dense<0.000000e+00> : vector<128x128xf32>
    %6 = tpu.matmul %4, %5, %cst {dimension_numbers = #tpu.dot_dimension_numbers<[1], [0], [0], [1], [0, 0, 1, 1], [], []>} : vector<128x1152xbf16>, vector<1152x128xbf16>, vector<128x128xf32> -> vector<128x128xf32>
    %7 = arith.addf %3, %6 : vector<128x128xf32>
    %c0_6 = arith.constant 0 : index
    %c0_7 = arith.constant 0 : index
    %8 = vector.load %arg5[%c0_6, %c0_7] : memref<128x128xf32, #tpu.memory_space<vmem>>, vector<128x128xf32>
    tpu.vector_store %arg5[%c0_6, %c0_7], %7 {strides = array<i32>} : memref<128x128xf32, #tpu.memory_space<vmem>>, vector<128x128xf32>,
    %c0_i32_8 = arith.constant 0 : i32
    %9 = arith.cmpi eq, %arg1, %c0_i32_8 : i32
    %10 = arith.extui %9 : i1 to i32
    %c0_i32_9 = arith.constant 0 : i32
    %11 = arith.cmpi ne, %10, %c0_i32_9 : i32
    scf.if %11 {
      %c0_10 = arith.constant 0 : index
      %c0_11 = arith.constant 0 : index
      %12 = vector.load %arg5[%c0_10, %c0_11] : memref<128x128xf32, #tpu.memory_space<vmem>>, vector<128x128xf32>
      %c0_12 = arith.constant 0 : index
      %c0_13 = arith.constant 0 : index
      %13 = vector.load %arg4[%c0_12, %c0_13] : memref<1x128xf32, #tpu.memory_space<vmem>>, vector<1x128xf32>
      %14 = vector.broadcast %13 : vector<1x128xf32> to vector<128x128xf32>
      %15 = arith.addf %12, %14 : vector<128x128xf32>
      %cst_14 = arith.constant 0.000000e+00 : f32
      %16 = vector.broadcast %cst_14 : f32 to vector<128x128xf32>
      %17 = arith.maximumf %15, %16 : vector<128x128xf32>
      %c0_15 = arith.constant 0 : index
      %c0_16 = arith.constant 0 : index
      %18 = vector.load %arg5[%c0_15, %c0_16] : memref<128x128xf32, #tpu.memory_space<vmem>>, vector<128x128xf32>
      tpu.vector_store %arg5[%c0_15, %c0_16], %17 {strides = array<i32>} : memref<128x128xf32, #tpu.memory_space<vmem>>, vector<128x128xf32>,
    } else {
    }
    return
  }
  func.func @transform_0(%arg0: i32, %arg1: i32) -> (i32, i32) {
    %c0_i32 = arith.constant 0 : i32
    return %arg0, %arg1 : i32, i32
  }
  func.func @transform_1(%arg0: i32, %arg1: i32) -> (i32, i32) {
    %c0_i32 = arith.constant 0 : i32
    %c0_i32_0 = arith.constant 0 : i32
    return %arg1, %c0_i32 : i32, i32
  }
  func.func @transform_2(%arg0: i32, %arg1: i32) -> (i32, i32) {
    %c0_i32 = arith.constant 0 : i32
    %c0_i32_0 = arith.constant 0 : i32
    %c0_i32_1 = arith.constant 0 : i32
    return %c0_i32, %c0_i32_0 : i32, i32
  }
  func.func @transform_3(%arg0: i32, %arg1: i32) -> (i32, i32) {
    %c0_i32 = arith.constant 0 : i32
    %c0_i32_0 = arith.constant 0 : i32
    return %arg0, %c0_i32 : i32, i32
  }
}

module attributes {stable_mosaic.version = 11 : i64} {
  func.func @_ay_bias_kernel(%arg0: i32, %arg1: i32, %arg2: memref<128x1152xbf16, #tpu.memory_space<vmem>>, %arg3: memref<1152x128xbf16, #tpu.memory_space<vmem>>, %arg4: memref<1x128xf32, #tpu.memory_space<vmem>>, %arg5: memref<128x128xf32, #tpu.memory_space<vmem>>) attributes {dimension_semantics = [#tpu.dimension_semantics<parallel>, #tpu.dimension_semantics<arbitrary>], iteration_bounds = array<i64: 1, 1>, scalar_prefetch = 0 : i64, scratch_operands = 0 : i64, tpu.core_type = #tpu.core_type<tc>, window_params = [{transform_indices = @transform_0, window_bounds = array<i64: 128, 1152>}, {transform_indices = @transform_1, window_bounds = array<i64: 1152, 128>}, {pipeline_mode = #tpu.pipeline_mode<synchronous>, transform_indices = @transform_2, window_bounds = array<i64: 1, 128>}, {transform_indices = @transform_3, window_bounds = array<i64: 128, 128>}]} {
    %c0_i32 = arith.constant 0 : i32
    %0 = arith.cmpi eq, %arg1, %c0_i32 : i32
    %1 = arith.extui %0 : i1 to i32
    %c0_i32_0 = arith.constant 0 : i32
    %2 = arith.cmpi ne, %1, %c0_i32_0 : i32
    scf.if %2 {
      %cst_10 = arith.constant 0.000000e+00 : f32
      %12 = vector.broadcast %cst_10 : f32 to vector<128x128xf32>
      %c0_11 = arith.constant 0 : index
      %c0_12 = arith.constant 0 : index
      %13 = vector.load %arg5[%c0_11, %c0_12] : memref<128x128xf32, #tpu.memory_space<vmem>>, vector<128x128xf32>
      tpu.vector_store %arg5[%c0_11, %c0_12], %12 {strides = array<i32>} : memref<128x128xf32, #tpu.memory_space<vmem>>, vector<128x128xf32>,
    } else {
    }
    %c0 = arith.constant 0 : index
    %c0_1 = arith.constant 0 : index
    %3 = vector.load %arg5[%c0, %c0_1] : memref<128x128xf32, #tpu.memory_space<vmem>>, vector<128x128xf32>
    %c0_2 = arith.constant 0 : index
    %c0_3 = arith.constant 0 : index
    %4 = vector.load %arg2[%c0_2, %c0_3] : memref<128x1152xbf16, #tpu.memory_space<vmem>>, vector<128x1152xbf16>
    %c0_4 = arith.constant 0 : index
    %c0_5 = arith.constant 0 : index
    %5 = vector.load %arg3[%c0_4, %c0_5] : memref<1152x128xbf16, #tpu.memory_space<vmem>>, vector<1152x128xbf16>
    %cst = arith.constant dense<0.000000e+00> : vector<128x128xf32>
    %6 = tpu.matmul %4, %5, %cst {dimension_numbers = #tpu.dot_dimension_numbers<[1], [0], [0], [1], [0, 0, 1, 1], [], []>} : vector<128x1152xbf16>, vector<1152x128xbf16>, vector<128x128xf32> -> vector<128x128xf32>
    %7 = arith.addf %3, %6 : vector<128x128xf32>
    %c0_6 = arith.constant 0 : index
    %c0_7 = arith.constant 0 : index
    %8 = vector.load %arg5[%c0_6, %c0_7] : memref<128x128xf32, #tpu.memory_space<vmem>>, vector<128x128xf32>
    tpu.vector_store %arg5[%c0_6, %c0_7], %7 {strides = array<i32>} : memref<128x128xf32, #tpu.memory_space<vmem>>, vector<128x128xf32>,
    %c0_i32_8 = arith.constant 0 : i32
    %9 = arith.cmpi eq, %arg1, %c0_i32_8 : i32
    %10 = arith.extui %9 : i1 to i32
    %c0_i32_9 = arith.constant 0 : i32
    %11 = arith.cmpi ne, %10, %c0_i32_9 : i32
    scf.if %11 {
      %c0_10 = arith.constant 0 : index
      %c0_11 = arith.constant 0 : index
      %12 = vector.load %arg5[%c0_10, %c0_11] : memref<128x128xf32, #tpu.memory_space<vmem>>, vector<128x128xf32>
      %c0_12 = arith.constant 0 : index
      %c0_13 = arith.constant 0 : index
      %13 = vector.load %arg4[%c0_12, %c0_13] : memref<1x128xf32, #tpu.memory_space<vmem>>, vector<1x128xf32>
      %14 = vector.broadcast %13 : vector<1x128xf32> to vector<128x128xf32>
      %15 = arith.addf %12, %14 : vector<128x128xf32>
      %c0_14 = arith.constant 0 : index
      %c0_15 = arith.constant 0 : index
      %16 = vector.load %arg5[%c0_14, %c0_15] : memref<128x128xf32, #tpu.memory_space<vmem>>, vector<128x128xf32>
      tpu.vector_store %arg5[%c0_14, %c0_15], %15 {strides = array<i32>} : memref<128x128xf32, #tpu.memory_space<vmem>>, vector<128x128xf32>,
    } else {
    }
    return
  }
  func.func @transform_0(%arg0: i32, %arg1: i32) -> (i32, i32) {
    %c0_i32 = arith.constant 0 : i32
    return %arg0, %arg1 : i32, i32
  }
  func.func @transform_1(%arg0: i32, %arg1: i32) -> (i32, i32) {
    %c0_i32 = arith.constant 0 : i32
    %c0_i32_0 = arith.constant 0 : i32
    return %arg1, %c0_i32 : i32, i32
  }
  func.func @transform_2(%arg0: i32, %arg1: i32) -> (i32, i32) {
    %c0_i32 = arith.constant 0 : i32
    %c0_i32_0 = arith.constant 0 : i32
    %c0_i32_1 = arith.constant 0 : i32
    return %c0_i32, %c0_i32_0 : i32, i32
  }
  func.func @transform_3(%arg0: i32, %arg1: i32) -> (i32, i32) {
    %c0_i32 = arith.constant 0 : i32
    %c0_i32_0 = arith.constant 0 : i32
    return %arg0, %c0_i32 : i32, i32
  }
}

</mosaic_0001>

<llo_original>
// kernel: embedding_node_classifier_forward.4
$region0: #{embedding_node_classifier_forward.4}
  #allocation0 [shape = 'u32[]', space=smem, size = 0x4, offset = 0x4, fixed_abs, tag = 'smem constant byte address 0x4 - core index']
  #allocation1 [shape = 'u32[144,128]{1,0:T(1,128)}', space=vmem, size = 0x12000, scoped, tag = 'internal scratch']
  %s0 = inlined_call_operand.vmem [shape: bf16[128,128], index: 0, kind: input, shape index: {}]
  %s1 = inlined_call_operand.vmem [shape: bf16[128,1152], index: 1, kind: input, shape index: {}]
  %s2 = inlined_call_operand.vmem [shape: bf16[128,1152], index: 2, kind: output, shape index: {}]
  %s3 = sld [smem:[#allocation0]]
  $region18: #{embedding_node_classifier_forward.4} parent=0
    _
  %s5 = ssub.s32 1, %s3
  %s6 = scalar_select 0, %s5, %s3
  // Predicated region
  $region2: #{embedding_node_classifier_forward.4} parent=0 // pred_check
    _
  $region3: #{embedding_node_classifier_forward.4} parent=0 // pred_check_branch
    %8 = sbr.rel (0) target = $region5
  $region4: #{embedding_node_classifier_forward.4} parent=0 // pred_region
    _
  $region5: #{embedding_node_classifier_forward.4} parent=0 // pred_fallthru
    _
  // Predicated region
  $region6: #{embedding_node_classifier_forward.4} parent=0 // pred_check
    _
  $region7: #{embedding_node_classifier_forward.4} parent=0 // pred_check_branch
    %10 = sbr.rel (0) target = $region9
  $region8: #{embedding_node_classifier_forward.4} parent=0 // pred_region
    _
  $region9: #{embedding_node_classifier_forward.4} parent=0 // pred_fallthru
    _
  %v12 = vld [vmem:[%s0] sm:$0xf]
  %v13 = vld [vmem:[%s0 + $0x4] sm:$0xf]
  %v14 = vld [vmem:[%s0 + $0x8] sm:$0xf]
  %v15 = vld [vmem:[%s0 + $0xc] sm:$0xf]
  %v16 = vld [vmem:[%s0 + $0x10] sm:$0xf]
  %v17 = vld [vmem:[%s0 + $0x14] sm:$0xf]
  %v18 = vld [vmem:[%s0 + $0x18] sm:$0xf]
  %v19 = vld [vmem:[%s0 + $0x1c] sm:$0xf]
  %v20 = vld [vmem:[%s0 + $0x20] sm:$0xf]
  %v21 = vld [vmem:[%s0 + $0x24] sm:$0xf]
  %v22 = vld [vmem:[%s0 + $0x28] sm:$0xf]
  %v23 = vld [vmem:[%s0 + $0x2c] sm:$0xf]
  %v24 = vld [vmem:[%s0 + $0x30] sm:$0xf]
  %v25 = vld [vmem:[%s0 + $0x34] sm:$0xf]
  %v26 = vld [vmem:[%s0 + $0x38] sm:$0xf]
  %v27 = vld [vmem:[%s0 + $0x3c] sm:$0xf]
  %v28 = vld [vmem:[%s1] sm:$0xff]
  %v29 = vld [vmem:[%s1 + $0x8] sm:$0xff]
  %v30 = vld [vmem:[%s1 + $0x10] sm:$0xff]
  %v31 = vld [vmem:[%s1 + $0x18] sm:$0xff]
  %v32 = vld [vmem:[%s1 + $0x20] sm:$0xf]
  %v33 = vld [vmem:[%s1 + $0x24] sm:$0xff]
  %v34 = vld [vmem:[%s1 + $0x2c] sm:$0xff]
  %v35 = vld [vmem:[%s1 + $0x34] sm:$0xff]
  %v36 = vld [vmem:[%s1 + $0x3c] sm:$0xff]
  %v37 = vld [vmem:[%s1 + $0x44] sm:$0xf]
  %v38 = vld [vmem:[%s1 + $0x48] sm:$0xff]
  %v39 = vld [vmem:[%s1 + $0x50] sm:$0xff]
  %v40 = vld [vmem:[%s1 + $0x58] sm:$0xff]
  %v41 = vld [vmem:[%s1 + $0x60] sm:$0xff]
  %v42 = vld [vmem:[%s1 + $0x68] sm:$0xf]
  %v43 = vld [vmem:[%s1 + $0x6c] sm:$0xff]
  %v44 = vld [vmem:[%s1 + $0x74] sm:$0xff]
  %v45 = vld [vmem:[%s1 + $0x7c] sm:$0xff]
  %v46 = vld [vmem:[%s1 + $0x84] sm:$0xff]
  %v47 = vld [vmem:[%s1 + $0x8c] sm:$0xf]
  %v48 = vld [vmem:[%s1 + $0x90] sm:$0xff]
  %v49 = vld [vmem:[%s1 + $0x98] sm:$0xff]
  %v50 = vld [vmem:[%s1 + $0xa0] sm:$0xff]
  %v51 = vld [vmem:[%s1 + $0xa8] sm:$0xff]
  %v52 = vld [vmem:[%s1 + $0xb0] sm:$0xf]
  %v53 = vld [vmem:[%s1 + $0xb4] sm:$0xff]
  %v54 = vld [vmem:[%s1 + $0xbc] sm:$0xff]
  %v55 = vld [vmem:[%s1 + $0xc4] sm:$0xff]
  %v56 = vld [vmem:[%s1 + $0xcc] sm:$0xff]
  %v57 = vld [vmem:[%s1 + $0xd4] sm:$0xf]
  %v58 = vld [vmem:[%s1 + $0xd8] sm:$0xff]
  %v59 = vld [vmem:[%s1 + $0xe0] sm:$0xff]
  %v60 = vld [vmem:[%s1 + $0xe8] sm:$0xff]
  %v61 = vld [vmem:[%s1 + $0xf0] sm:$0xff]
  %v62 = vld [vmem:[%s1 + $0xf8] sm:$0xf]
  %v63 = vld [vmem:[%s1 + $0xfc] sm:$0xff]
  %v64 = vld [vmem:[%s1 + $0x104] sm:$0xff]
  %v65 = vld [vmem:[%s1 + $0x10c] sm:$0xff]
  %v66 = vld [vmem:[%s1 + $0x114] sm:$0xff]
  %v67 = vld [vmem:[%s1 + $0x11c] sm:$0xf]
  %v68 = vld [vmem:[%s1 + $0x120] sm:$0xff]
  %v69 = vld [vmem:[%s1 + $0x128] sm:$0xff]
  %v70 = vld [vmem:[%s1 + $0x130] sm:$0xff]
  %v71 = vld [vmem:[%s1 + $0x138] sm:$0xff]
  %v72 = vld [vmem:[%s1 + $0x140] sm:$0xf]
  %v73 = vld [vmem:[%s1 + $0x144] sm:$0xff]
  %v74 = vld [vmem:[%s1 + $0x14c] sm:$0xff]
  %v75 = vld [vmem:[%s1 + $0x154] sm:$0xff]
  %v76 = vld [vmem:[%s1 + $0x15c] sm:$0xff]
  %v77 = vld [vmem:[%s1 + $0x164] sm:$0xf]
  %v78 = vld [vmem:[%s1 + $0x168] sm:$0xff]
  %v79 = vld [vmem:[%s1 + $0x170] sm:$0xff]
  %v80 = vld [vmem:[%s1 + $0x178] sm:$0xff]
  %v81 = vld [vmem:[%s1 + $0x180] sm:$0xff]
  %v82 = vld [vmem:[%s1 + $0x188] sm:$0xf]
  %v83 = vld [vmem:[%s1 + $0x18c] sm:$0xff]
  %v84 = vld [vmem:[%s1 + $0x194] sm:$0xff]
  %v85 = vld [vmem:[%s1 + $0x19c] sm:$0xff]
  %v86 = vld [vmem:[%s1 + $0x1a4] sm:$0xff]
  %v87 = vld [vmem:[%s1 + $0x1ac] sm:$0xf]
  %v88 = vld [vmem:[%s1 + $0x1b0] sm:$0xff]
  %v89 = vld [vmem:[%s1 + $0x1b8] sm:$0xff]
  %v90 = vld [vmem:[%s1 + $0x1c0] sm:$0xff]
  %v91 = vld [vmem:[%s1 + $0x1c8] sm:$0xff]
  %v92 = vld [vmem:[%s1 + $0x1d0] sm:$0xf]
  %v93 = vld [vmem:[%s1 + $0x1d4] sm:$0xff]
  %v94 = vld [vmem:[%s1 + $0x1dc] sm:$0xff]
  %v95 = vld [vmem:[%s1 + $0x1e4] sm:$0xff]
  %v96 = vld [vmem:[%s1 + $0x1ec] sm:$0xff]
  %v97 = vld [vmem:[%s1 + $0x1f4] sm:$0xf]
  %v98 = vld [vmem:[%s1 + $0x1f8] sm:$0xff]
  %v99 = vld [vmem:[%s1 + $0x200] sm:$0xff]
  %v100 = vld [vmem:[%s1 + $0x208] sm:$0xff]
  %v101 = vld [vmem:[%s1 + $0x210] sm:$0xff]
  %v102 = vld [vmem:[%s1 + $0x218] sm:$0xf]
  %v103 = vld [vmem:[%s1 + $0x21c] sm:$0xff]
  %v104 = vld [vmem:[%s1 + $0x224] sm:$0xff]
  %v105 = vld [vmem:[%s1 + $0x22c] sm:$0xff]
  %v106 = vld [vmem:[%s1 + $0x234] sm:$0xff]
  %v107 = vld [vmem:[%s1 + $0x23c] sm:$0xf]
  %v124 = vunpack.c.l.b16 %v12
  %v125 = vunpack.c.l.b16 %v13
  %v126 = vunpack.c.l.b16 %v14
  %v127 = vunpack.c.l.b16 %v15
  %v128 = vunpack.c.l.b16 %v16
  %v129 = vunpack.c.l.b16 %v17
  %v130 = vunpack.c.l.b16 %v18
  %v131 = vunpack.c.l.b16 %v19
  %v132 = vunpack.c.l.b16 %v20
  %v133 = vunpack.c.l.b16 %v21
  %v134 = vunpack.c.l.b16 %v22
  %v135 = vunpack.c.l.b16 %v23
  %v136 = vunpack.c.l.b16 %v24
  %v137 = vunpack.c.l.b16 %v25
  %v138 = vunpack.c.l.b16 %v26
  %v139 = vunpack.c.l.b16 %v27
  %v140 = vpack.c.b16 %v125, %v124
  %v141 = vpack.c.b16 %v127, %v126
  %v142 = vpack.c.b16 %v129, %v128
  %v143 = vpack.c.b16 %v131, %v130
  %v144 = vpack.c.b16 %v133, %v132
  %v145 = vpack.c.b16 %v135, %v134
  %v146 = vpack.c.b16 %v137, %v136
  %v147 = vpack.c.b16 %v139, %v138
  %v236 = vunpack.c.l.b16 %v28
  %v237 = vunpack.c.h.b16 %v28
  %v238 = vunpack.c.l.b16 %v29
  %v239 = vunpack.c.h.b16 %v29
  %v240 = vunpack.c.l.b16 %v30
  %v241 = vunpack.c.h.b16 %v30
  %v242 = vunpack.c.l.b16 %v31
  %v243 = vunpack.c.h.b16 %v31
  %v244 = vunpack.c.l.b16 %v32
  %v245 = vunpack.c.l.b16 %v33
  %v246 = vunpack.c.h.b16 %v33
  %v247 = vunpack.c.l.b16 %v34
  %v248 = vunpack.c.h.b16 %v34
  %v249 = vunpack.c.l.b16 %v35
  %v250 = vunpack.c.h.b16 %v35
  %v251 = vunpack.c.l.b16 %v36
  %v252 = vunpack.c.h.b16 %v36
  %v253 = vunpack.c.l.b16 %v37
  %v254 = vunpack.c.l.b16 %v38
  %v255 = vunpack.c.h.b16 %v38
  %v256 = vunpack.c.l.b16 %v39
  %v257 = vunpack.c.h.b16 %v39
  %v258 = vunpack.c.l.b16 %v40
  %v259 = vunpack.c.h.b16 %v40
  %v260 = vunpack.c.l.b16 %v41
  %v261 = vunpack.c.h.b16 %v41
  %v262 = vunpack.c.l.b16 %v42
  %v263 = vunpack.c.l.b16 %v43
  %v264 = vunpack.c.h.b16 %v43
  %v265 = vunpack.c.l.b16 %v44
  %v266 = vunpack.c.h.b16 %v44
  %v267 = vunpack.c.l.b16 %v45
  %v268 = vunpack.c.h.b16 %v45
  %v269 = vunpack.c.l.b16 %v46
  %v270 = vunpack.c.h.b16 %v46
  %v271 = vunpack.c.l.b16 %v47
  %v272 = vunpack.c.l.b16 %v48
  %v273 = vunpack.c.h.b16 %v48
  %v274 = vunpack.c.l.b16 %v49
  %v275 = vunpack.c.h.b16 %v49
  %v276 = vunpack.c.l.b16 %v50
  %v277 = vunpack.c.h.b16 %v50
  %v278 = vunpack.c.l.b16 %v51
  %v279 = vunpack.c.h.b16 %v51
  %v280 = vunpack.c.l.b16 %v52
  %v281 = vunpack.c.l.b16 %v53
  %v282 = vunpack.c.h.b16 %v53
  %v283 = vunpack.c.l.b16 %v54
  %v284 = vunpack.c.h.b16 %v54
  %v285 = vunpack.c.l.b16 %v55
  %v286 = vunpack.c.h.b16 %v55
  %v287 = vunpack.c.l.b16 %v56
  %v288 = vunpack.c.h.b16 %v56
  %v289 = vunpack.c.l.b16 %v57
  %v290 = vunpack.c.l.b16 %v58
  %v291 = vunpack.c.h.b16 %v58
  %v292 = vunpack.c.l.b16 %v59
  %v293 = vunpack.c.h.b16 %v59
  %v294 = vunpack.c.l.b16 %v60
  %v295 = vunpack.c.h.b16 %v60
  %v296 = vunpack.c.l.b16 %v61
  %v297 = vunpack.c.h.b16 %v61
  %v298 = vunpack.c.l.b16 %v62
  %v299 = vunpack.c.l.b16 %v63
  %v300 = vunpack.c.h.b16 %v63
  %v301 = vunpack.c.l.b16 %v64
  %v302 = vunpack.c.h.b16 %v64
  %v303 = vunpack.c.l.b16 %v65
  %v304 = vunpack.c.h.b16 %v65
  %v305 = vunpack.c.l.b16 %v66
  %v306 = vunpack.c.h.b16 %v66
  %v307 = vunpack.c.l.b16 %v67
  %v308 = vunpack.c.l.b16 %v68
  %v309 = vunpack.c.h.b16 %v68
  %v310 = vunpack.c.l.b16 %v69
  %v311 = vunpack.c.h.b16 %v69
  %v312 = vunpack.c.l.b16 %v70
  %v313 = vunpack.c.h.b16 %v70
  %v314 = vunpack.c.l.b16 %v71
  %v315 = vunpack.c.h.b16 %v71
  %v316 = vunpack.c.l.b16 %v72
  %v317 = vunpack.c.l.b16 %v73
  %v318 = vunpack.c.h.b16 %v73
  %v319 = vunpack.c.l.b16 %v74
  %v320 = vunpack.c.h.b16 %v74
  %v321 = vunpack.c.l.b16 %v75
  %v322 = vunpack.c.h.b16 %v75
  %v323 = vunpack.c.l.b16 %v76
  %v324 = vunpack.c.h.b16 %v76
  %v325 = vunpack.c.l.b16 %v77
  %v326 = vunpack.c.l.b16 %v78
  %v327 = vunpack.c.h.b16 %v78
  %v328 = vunpack.c.l.b16 %v79
  %v329 = vunpack.c.h.b16 %v79
  %v330 = vunpack.c.l.b16 %v80
  %v331 = vunpack.c.h.b16 %v80
  %v332 = vunpack.c.l.b16 %v81
  %v333 = vunpack.c.h.b16 %v81
  %v334 = vunpack.c.l.b16 %v82
  %v335 = vunpack.c.l.b16 %v83
  %v336 = vunpack.c.h.b16 %v83
  %v337 = vunpack.c.l.b16 %v84
  %v338 = vunpack.c.h.b16 %v84
  %v339 = vunpack.c.l.b16 %v85
  %v340 = vunpack.c.h.b16 %v85
  %v341 = vunpack.c.l.b16 %v86
  %v342 = vunpack.c.h.b16 %v86
  %v343 = vunpack.c.l.b16 %v87
  %v344 = vunpack.c.l.b16 %v88
  %v345 = vunpack.c.h.b16 %v88
  %v346 = vunpack.c.l.b16 %v89
  %v347 = vunpack.c.h.b16 %v89
  %v348 = vunpack.c.l.b16 %v90
  %v349 = vunpack.c.h.b16 %v90
  %v350 = vunpack.c.l.b16 %v91
  %v351 = vunpack.c.h.b16 %v91
  %v352 = vunpack.c.l.b16 %v92
  %v353 = vunpack.c.l.b16 %v93
  %v354 = vunpack.c.h.b16 %v93
  %v355 = vunpack.c.l.b16 %v94
  %v356 = vunpack.c.h.b16 %v94
  %v357 = vunpack.c.l.b16 %v95
  %v358 = vunpack.c.h.b16 %v95
  %v359 = vunpack.c.l.b16 %v96
  %v360 = vunpack.c.h.b16 %v96
  %v361 = vunpack.c.l.b16 %v97
  %v362 = vunpack.c.l.b16 %v98
  %v363 = vunpack.c.h.b16 %v98
  %v364 = vunpack.c.l.b16 %v99
  %v365 = vunpack.c.h.b16 %v99
  %v366 = vunpack.c.l.b16 %v100
  %v367 = vunpack.c.h.b16 %v100
  %v368 = vunpack.c.l.b16 %v101
  %v369 = vunpack.c.h.b16 %v101
  %v370 = vunpack.c.l.b16 %v102
  %v371 = vunpack.c.l.b16 %v103
  %v372 = vunpack.c.h.b16 %v103
  %v373 = vunpack.c.l.b16 %v104
  %v374 = vunpack.c.h.b16 %v104
  %v375 = vunpack.c.l.b16 %v105
  %v376 = vunpack.c.h.b16 %v105
  %v377 = vunpack.c.l.b16 %v106
  %v378 = vunpack.c.h.b16 %v106
  %v379 = vunpack.c.l.b16 %v107
  %v380 = vpack.c.b16 %v245, %v236
  %v381 = vpack.c.b16 %v246, %v237
  %v382 = vpack.c.b16 %v247, %v238
  %v383 = vpack.c.b16 %v248, %v239
  %v384 = vpack.c.b16 %v249, %v240
  %v385 = vpack.c.b16 %v250, %v241
  %v386 = vpack.c.b16 %v251, %v242
  %v387 = vpack.c.b16 %v252, %v243
  %v388 = vpack.c.b16 %v253, %v244
  %v389 = vpack.c.b16 %v263, %v254
  %v390 = vpack.c.b16 %v264, %v255
  %v391 = vpack.c.b16 %v265, %v256
  %v392 = vpack.c.b16 %v266, %v257
  %v393 = vpack.c.b16 %v267, %v258
  %v394 = vpack.c.b16 %v268, %v259
  %v395 = vpack.c.b16 %v269, %v260
  %v396 = vpack.c.b16 %v270, %v261
  %v397 = vpack.c.b16 %v271, %v262
  %v398 = vpack.c.b16 %v281, %v272
  %v399 = vpack.c.b16 %v282, %v273
  %v400 = vpack.c.b16 %v283, %v274
  %v401 = vpack.c.b16 %v284, %v275
  %v402 = vpack.c.b16 %v285, %v276
  %v403 = vpack.c.b16 %v286, %v277
  %v404 = vpack.c.b16 %v287, %v278
  %v405 = vpack.c.b16 %v288, %v279
  %v406 = vpack.c.b16 %v289, %v280
  %v407 = vpack.c.b16 %v299, %v290
  %v408 = vpack.c.b16 %v300, %v291
  %v409 = vpack.c.b16 %v301, %v292
  %v410 = vpack.c.b16 %v302, %v293
  %v411 = vpack.c.b16 %v303, %v294
  %v412 = vpack.c.b16 %v304, %v295
  %v413 = vpack.c.b16 %v305, %v296
  %v414 = vpack.c.b16 %v306, %v297
  %v415 = vpack.c.b16 %v307, %v298
  %v416 = vpack.c.b16 %v317, %v308
  %v417 = vpack.c.b16 %v318, %v309
  %v418 = vpack.c.b16 %v319, %v310
  %v419 = vpack.c.b16 %v320, %v311
  %v420 = vpack.c.b16 %v321, %v312
  %v421 = vpack.c.b16 %v322, %v313
  %v422 = vpack.c.b16 %v323, %v314
  %v423 = vpack.c.b16 %v324, %v315
  %v424 = vpack.c.b16 %v325, %v316
  %v425 = vpack.c.b16 %v335, %v326
  %v426 = vpack.c.b16 %v336, %v327
  %v427 = vpack.c.b16 %v337, %v328
  %v428 = vpack.c.b16 %v338, %v329
  %v429 = vpack.c.b16 %v339, %v330
  %v430 = vpack.c.b16 %v340, %v331
  %v431 = vpack.c.b16 %v341, %v332
  %v432 = vpack.c.b16 %v342, %v333
  %v433 = vpack.c.b16 %v343, %v334
  %v434 = vpack.c.b16 %v353, %v344
  %v435 = vpack.c.b16 %v354, %v345
  %v436 = vpack.c.b16 %v355, %v346
  %v437 = vpack.c.b16 %v356, %v347
  %v438 = vpack.c.b16 %v357, %v348
  %v439 = vpack.c.b16 %v358, %v349
  %v440 = vpack.c.b16 %v359, %v350
  %v441 = vpack.c.b16 %v360, %v351
  %v442 = vpack.c.b16 %v361, %v352
  %v443 = vpack.c.b16 %v371, %v362
  %v444 = vpack.c.b16 %v372, %v363
  %v445 = vpack.c.b16 %v373, %v364
  %v446 = vpack.c.b16 %v374, %v365
  %v447 = vpack.c.b16 %v375, %v366
  %v448 = vpack.c.b16 %v376, %v367
  %v449 = vpack.c.b16 %v377, %v368
  %v450 = vpack.c.b16 %v378, %v369
  %v451 = vpack.c.b16 %v379, %v370
  %524 = vmatprep.subr.bf16.mxu0 %v381
  %525 = vmatpush1.bf16.msra.mxu0 %v380
  %526 = vmatprep.subr.bf16.mxu0 %v390
  %527 = vmatpush1.bf16.msra.mxu0 %v389
  %528 = vmatprep.subr.bf16.mxu0 %v399
  %529 = vmatpush1.bf16.msra.mxu0 %v398
  %530 = vmatprep.subr.bf16.mxu0 %v408
  %531 = vmatpush1.bf16.msra.mxu0 %v407
  %532 = vmatprep.subr.bf16.mxu0 %v417
  %533 = vmatpush1.bf16.msra.mxu0 %v416
  %534 = vmatprep.subr.bf16.mxu0 %v426
  %535 = vmatpush1.bf16.msra.mxu0 %v425
  %536 = vmatprep.subr.bf16.mxu0 %v435
  %537 = vmatpush1.bf16.msra.mxu0 %v434
  %538 = vmatprep.subr.bf16.mxu0 %v444
  %539 = vmatpush1.bf16.msra.mxu0 %v443
  %540 = vmatprep.subr.bf16.mxu0 0
  %541 = vmatpush1.bf16.msra.mxu0 0
  %542 = vmatprep.subr.bf16.mxu0 0
  %543 = vmatpush1.bf16.msra.mxu0 0
  %544 = vmatprep.subr.bf16.mxu0 0
  %545 = vmatpush1.bf16.msra.mxu0 0
  %546 = vmatprep.subr.bf16.mxu0 0
  %547 = vmatpush1.bf16.msra.mxu0 0
  %548 = vmatprep.subr.bf16.mxu0 0
  %549 = vmatpush1.bf16.msra.mxu0 0
  %550 = vmatprep.subr.bf16.mxu0 0
  %551 = vmatpush1.bf16.msra.mxu0 0
  %552 = vmatprep.subr.bf16.mxu0 0
  %553 = vmatpush1.bf16.msra.mxu0 0
  %554 = vmatprep.subr.bf16.mxu0 0
  %555 = vmatpush1.bf16.msra.mxu0 0
  %556 = vmatprep.mubr.bf16.mxu0 0
  %557 = vmatmul.mubr.bf16.gmra.mrb[0].mxu0 %v140
  %v558 = vpop.f32.mrb[0].mxu0
  %v559 = vadd.f32 0.0, %v558
  %v560 = vpop.f32.mrb[0].mxu0
  %v561 = vadd.f32 0.0, %v560
  %v562 = vpop.f32.mrb[0].mxu0
  %v563 = vadd.f32 0.0, %v562
  %v564 = vpop.f32.mrb[0].mxu0
  %v565 = vadd.f32 0.0, %v564
  %566 = vmatprep.mubr.bf16.mxu0 0
  %567 = vmatmul.mubr.bf16.gmra.mrb[0].mxu0 %v141
  %v568 = vpop.f32.mrb[0].mxu0
  %v569 = vadd.f32 0.0, %v568
  %v570 = vpop.f32.mrb[0].mxu0
  %v571 = vadd.f32 0.0, %v570
  %v572 = vpop.f32.mrb[0].mxu0
  %v573 = vadd.f32 0.0, %v572
  %v574 = vpop.f32.mrb[0].mxu0
  %v575 = vadd.f32 0.0, %v574
  %576 = vmatprep.mubr.bf16.mxu0 0
  %577 = vmatmul.mubr.bf16.gmra.mrb[0].mxu0 %v142
  %v578 = vpop.f32.mrb[0].mxu0
  %v579 = vadd.f32 0.0, %v578
  %v580 = vpop.f32.mrb[0].mxu0
  %v581 = vadd.f32 0.0, %v580
  %v582 = vpop.f32.mrb[0].mxu0
  %v583 = vadd.f32 0.0, %v582
  %v584 = vpop.f32.mrb[0].mxu0
  %v585 = vadd.f32 0.0, %v584
  %586 = vmatprep.mubr.bf16.mxu0 0
  %587 = vmatmul.mubr.bf16.gmra.mrb[0].mxu0 %v143
  %v588 = vpop.f32.mrb[0].mxu0
  %v589 = vadd.f32 0.0, %v588
  %v590 = vpop.f32.mrb[0].mxu0
  %v591 = vadd.f32 0.0, %v590
  %v592 = vpop.f32.mrb[0].mxu0
  %v593 = vadd.f32 0.0, %v592
  %v594 = vpop.f32.mrb[0].mxu0
  %v595 = vadd.f32 0.0, %v594
  %596 = vmatprep.mubr.bf16.mxu0 0
  %597 = vmatmul.mubr.bf16.gmra.mrb[0].mxu0 %v144
  %v598 = vpop.f32.mrb[0].mxu0
  %v599 = vadd.f32 0.0, %v598
  %v600 = vpop.f32.mrb[0].mxu0
  %v601 = vadd.f32 0.0, %v600
  %v602 = vpop.f32.mrb[0].mxu0
  %v603 = vadd.f32 0.0, %v602
  %v604 = vpop.f32.mrb[0].mxu0
  %v605 = vadd.f32 0.0, %v604
  %606 = vmatprep.mubr.bf16.mxu0 0
  %607 = vmatmul.mubr.bf16.gmra.mrb[0].mxu0 %v145
  %v608 = vpop.f32.mrb[0].mxu0
  %v609 = vadd.f32 0.0, %v608
  %v610 = vpop.f32.mrb[0].mxu0
  %v611 = vadd.f32 0.0, %v610
  %v612 = vpop.f32.mrb[0].mxu0
  %v613 = vadd.f32 0.0, %v612
  %v614 = vpop.f32.mrb[0].mxu0
  %v615 = vadd.f32 0.0, %v614
  %616 = vmatprep.mubr.bf16.mxu0 0
  %617 = vmatmul.mubr.bf16.gmra.mrb[0].mxu0 %v146
  %v618 = vpop.f32.mrb[0].mxu0
  %v619 = vadd.f32 0.0, %v618
  %v620 = vpop.f32.mrb[0].mxu0
  %v621 = vadd.f32 0.0, %v620
  %v622 = vpop.f32.mrb[0].mxu0
  %v623 = vadd.f32 0.0, %v622
  %v624 = vpop.f32.mrb[0].mxu0
  %v625 = vadd.f32 0.0, %v624
  %626 = vmatprep.mubr.bf16.mxu0 0
  %627 = vmatmul.mubr.bf16.gmra.mrb[0].mxu0 %v147
  %v628 = vpop.f32.mrb[0].mxu0
  %v629 = vadd.f32 0.0, %v628
  %v630 = vpop.f32.mrb[0].mxu0
  %v631 = vadd.f32 0.0, %v630
  %v632 = vpop.f32.mrb[0].mxu0
  %v633 = vadd.f32 0.0, %v632
  %v634 = vpop.f32.mrb[0].mxu0
  %v635 = vadd.f32 0.0, %v634
  %636 = vdwg.mxu0
  %637 = vmatprep.subr.bf16.mxu0 %v383
  %638 = vmatpush1.bf16.msra.mxu0 %v382
  %639 = vmatprep.subr.bf16.mxu0 %v392
  %640 = vmatpush1.bf16.msra.mxu0 %v391
  %641 = vmatprep.subr.bf16.mxu0 %v401
  %642 = vmatpush1.bf16.msra.mxu0 %v400
  %643 = vmatprep.subr.bf16.mxu0 %v410
  %644 = vmatpush1.bf16.msra.mxu0 %v409
  %645 = vmatprep.subr.bf16.mxu0 %v419
  %646 = vmatpush1.bf16.msra.mxu0 %v418
  %647 = vmatprep.subr.bf16.mxu0 %v428
  %648 = vmatpush1.bf16.msra.mxu0 %v427
  %649 = vmatprep.subr.bf16.mxu0 %v437
  %650 = vmatpush1.bf16.msra.mxu0 %v436
  %651 = vmatprep.subr.bf16.mxu0 %v446
  %652 = vmatpush1.bf16.msra.mxu0 %v445
  %653 = vmatprep.subr.bf16.mxu0 0
  %654 = vmatpush1.bf16.msra.mxu0 0
  %655 = vmatprep.subr.bf16.mxu0 0
  %656 = vmatpush1.bf16.msra.mxu0 0
  %657 = vmatprep.subr.bf16.mxu0 0
  %658 = vmatpush1.bf16.msra.mxu0 0
  %659 = vmatprep.subr.bf16.mxu0 0
  %660 = vmatpush1.bf16.msra.mxu0 0
  %661 = vmatprep.subr.bf16.mxu0 0
  %662 = vmatpush1.bf16.msra.mxu0 0
  %663 = vmatprep.subr.bf16.mxu0 0
  %664 = vmatpush1.bf16.msra.mxu0 0
  %665 = vmatprep.subr.bf16.mxu0 0
  %666 = vmatpush1.bf16.msra.mxu0 0
  %667 = vmatprep.subr.bf16.mxu0 0
  %668 = vmatpush1.bf16.msra.mxu0 0
  %669 = vmatprep.mubr.bf16.mxu0 0
  %670 = vmatmul.mubr.bf16.gmra.mrb[0].mxu0 %v140
  %v671 = vpop.f32.mrb[0].mxu0
  %v672 = vadd.f32 0.0, %v671
  %v673 = vpop.f32.mrb[0].mxu0
  %v674 = vadd.f32 0.0, %v673
  %v675 = vpop.f32.mrb[0].mxu0
  %v676 = vadd.f32 0.0, %v675
  %v677 = vpop.f32.mrb[0].mxu0
  %v678 = vadd.f32 0.0, %v677
  %679 = vmatprep.mubr.bf16.mxu0 0
  %680 = vmatmul.mubr.bf16.gmra.mrb[0].mxu0 %v141
  %v681 = vpop.f32.mrb[0].mxu0
  %v682 = vadd.f32 0.0, %v681
  %v683 = vpop.f32.mrb[0].mxu0
  %v684 = vadd.f32 0.0, %v683
  %v685 = vpop.f32.mrb[0].mxu0
  %v686 = vadd.f32 0.0, %v685
  %v687 = vpop.f32.mrb[0].mxu0
  %v688 = vadd.f32 0.0, %v687
  %689 = vmatprep.mubr.bf16.mxu0 0
  %690 = vmatmul.mubr.bf16.gmra.mrb[0].mxu0 %v142
  %v691 = vpop.f32.mrb[0].mxu0
  %v692 = vadd.f32 0.0, %v691
  %v693 = vpop.f32.mrb[0].mxu0
  %v694 = vadd.f32 0.0, %v693
  %v695 = vpop.f32.mrb[0].mxu0
  %v696 = vadd.f32 0.0, %v695
  %v697 = vpop.f32.mrb[0].mxu0
  %v698 = vadd.f32 0.0, %v697
  %699 = vmatprep.mubr.bf16.mxu0 0
  %700 = vmatmul.mubr.bf16.gmra.mrb[0].mxu0 %v143
  %v701 = vpop.f32.mrb[0].mxu0
  %v702 = vadd.f32 0.0, %v701
  %v703 = vpop.f32.mrb[0].mxu0
  %v704 = vadd.f32 0.0, %v703
  %v705 = vpop.f32.mrb[0].mxu0
  %v706 = vadd.f32 0.0, %v705
  %v707 = vpop.f32.mrb[0].mxu0
  %v708 = vadd.f32 0.0, %v707
  %709 = vmatprep.mubr.bf16.mxu0 0
  %710 = vmatmul.mubr.bf16.gmra.mrb[0].mxu0 %v144
  %v711 = vpop.f32.mrb[0].mxu0
  %v712 = vadd.f32 0.0, %v711
  %v713 = vpop.f32.mrb[0].mxu0
  %v714 = vadd.f32 0.0, %v713
  %v715 = vpop.f32.mrb[0].mxu0
  %v716 = vadd.f32 0.0, %v715
  %v717 = vpop.f32.mrb[0].mxu0
  %v718 = vadd.f32 0.0, %v717
  %719 = vmatprep.mubr.bf16.mxu0 0
  %720 = vmatmul.mubr.bf16.gmra.mrb[0].mxu0 %v145
  %v721 = vpop.f32.mrb[0].mxu0
  %v722 = vadd.f32 0.0, %v721
  %v723 = vpop.f32.mrb[0].mxu0
  %v724 = vadd.f32 0.0, %v723
  %v725 = vpop.f32.mrb[0].mxu0
  %v726 = vadd.f32 0.0, %v725
  %v727 = vpop.f32.mrb[0].mxu0
  %v728 = vadd.f32 0.0, %v727
  %729 = vmatprep.mubr.bf16.mxu0 0
  %730 = vmatmul.mubr.bf16.gmra.mrb[0].mxu0 %v146
  %v731 = vpop.f32.mrb[0].mxu0
  %v732 = vadd.f32 0.0, %v731
  %v733 = vpop.f32.mrb[0].mxu0
  %v734 = vadd.f32 0.0, %v733
  %v735 = vpop.f32.mrb[0].mxu0
  %v736 = vadd.f32 0.0, %v735
  %v737 = vpop.f32.mrb[0].mxu0
  %v738 = vadd.f32 0.0, %v737
  %739 = vmatprep.mubr.bf16.mxu0 0
  %740 = vmatmul.mubr.bf16.gmra.mrb[0].mxu0 %v147
  %v741 = vpop.f32.mrb[0].mxu0
  %v742 = vadd.f32 0.0, %v741
  %v743 = vpop.f32.mrb[0].mxu0
  %v744 = vadd.f32 0.0, %v743
  %v745 = vpop.f32.mrb[0].mxu0
  %v746 = vadd.f32 0.0, %v745
  %v747 = vpop.f32.mrb[0].mxu0
  %v748 = vadd.f32 0.0, %v747
  %749 = vdwg.mxu0
  %750 = vmatprep.subr.bf16.mxu0 %v385
  %751 = vmatpush1.bf16.msra.mxu0 %v384
  %752 = vmatprep.subr.bf16.mxu0 %v394
  %753 = vmatpush1.bf16.msra.mxu0 %v393
  %754 = vmatprep.subr.bf16.mxu0 %v403
  %755 = vmatpush1.bf16.msra.mxu0 %v402
  %756 = vmatprep.subr.bf16.mxu0 %v412
  %757 = vmatpush1.bf16.msra.mxu0 %v411
  %758 = vmatprep.subr.bf16.mxu0 %v421
  %759 = vmatpush1.bf16.msra.mxu0 %v420
  %760 = vmatprep.subr.bf16.mxu0 %v430
  %761 = vmatpush1.bf16.msra.mxu0 %v429
  %762 = vmatprep.subr.bf16.mxu0 %v439
  %763 = vmatpush1.bf16.msra.mxu0 %v438
  %764 = vmatprep.subr.bf16.mxu0 %v448
  %765 = vmatpush1.bf16.msra.mxu0 %v447
  %766 = vmatprep.subr.bf16.mxu0 0
  %767 = vmatpush1.bf16.msra.mxu0 0
  %768 = vmatprep.subr.bf16.mxu0 0
  %769 = vmatpush1.bf16.msra.mxu0 0
  %770 = vmatprep.subr.bf16.mxu0 0
  %771 = vmatpush1.bf16.msra.mxu0 0
  %772 = vmatprep.subr.bf16.mxu0 0
  %773 = vmatpush1.bf16.msra.mxu0 0
  %774 = vmatprep.subr.bf16.mxu0 0
  %775 = vmatpush1.bf16.msra.mxu0 0
  %776 = vmatprep.subr.bf16.mxu0 0
  %777 = vmatpush1.bf16.msra.mxu0 0
  %778 = vmatprep.subr.bf16.mxu0 0
  %779 = vmatpush1.bf16.msra.mxu0 0
  %780 = vmatprep.subr.bf16.mxu0 0
  %781 = vmatpush1.bf16.msra.mxu0 0
  %782 = vmatprep.mubr.bf16.mxu0 0
  %783 = vmatmul.mubr.bf16.gmra.mrb[0].mxu0 %v140
  %v784 = vpop.f32.mrb[0].mxu0
  %v785 = vadd.f32 0.0, %v784
  %v786 = vpop.f32.mrb[0].mxu0
  %v787 = vadd.f32 0.0, %v786
  %v788 = vpop.f32.mrb[0].mxu0
  %v789 = vadd.f32 0.0, %v788
  %v790 = vpop.f32.mrb[0].mxu0
  %v791 = vadd.f32 0.0, %v790
  %792 = vmatprep.mubr.bf16.mxu0 0
  %793 = vmatmul.mubr.bf16.gmra.mrb[0].mxu0 %v141
  %v794 = vpop.f32.mrb[0].mxu0
  %v795 = vadd.f32 0.0, %v794
  %v796 = vpop.f32.mrb[0].mxu0
  %v797 = vadd.f32 0.0, %v796
  %v798 = vpop.f32.mrb[0].mxu0
  %v799 = vadd.f32 0.0, %v798
  %v800 = vpop.f32.mrb[0].mxu0
  %v801 = vadd.f32 0.0, %v800
  %802 = vmatprep.mubr.bf16.mxu0 0
  %803 = vmatmul.mubr.bf16.gmra.mrb[0].mxu0 %v142
  %v804 = vpop.f32.mrb[0].mxu0
  %v805 = vadd.f32 0.0, %v804
  %v806 = vpop.f32.mrb[0].mxu0
  %v807 = vadd.f32 0.0, %v806
  %v808 = vpop.f32.mrb[0].mxu0
  %v809 = vadd.f32 0.0, %v808
  %v810 = vpop.f32.mrb[0].mxu0
  %v811 = vadd.f32 0.0, %v810
  %812 = vmatprep.mubr.bf16.mxu0 0
  %813 = vmatmul.mubr.bf16.gmra.mrb[0].mxu0 %v143
  %v814 = vpop.f32.mrb[0].mxu0
  %v815 = vadd.f32 0.0, %v814
  %v816 = vpop.f32.mrb[0].mxu0
  %v817 = vadd.f32 0.0, %v816
  %v818 = vpop.f32.mrb[0].mxu0
  %v819 = vadd.f32 0.0, %v818
  %v820 = vpop.f32.mrb[0].mxu0
  %v821 = vadd.f32 0.0, %v820
  %822 = vmatprep.mubr.bf16.mxu0 0
  %823 = vmatmul.mubr.bf16.gmra.mrb[0].mxu0 %v144
  %v824 = vpop.f32.mrb[0].mxu0
  %v825 = vadd.f32 0.0, %v824
  %v826 = vpop.f32.mrb[0].mxu0
  %v827 = vadd.f32 0.0, %v826
  %v828 = vpop.f32.mrb[0].mxu0
  %v829 = vadd.f32 0.0, %v828
  %v830 = vpop.f32.mrb[0].mxu0
  %v831 = vadd.f32 0.0, %v830
  %832 = vmatprep.mubr.bf16.mxu0 0
  %833 = vmatmul.mubr.bf16.gmra.mrb[0].mxu0 %v145
  %v834 = vpop.f32.mrb[0].mxu0
  %v835 = vadd.f32 0.0, %v834
  %v836 = vpop.f32.mrb[0].mxu0
  %v837 = vadd.f32 0.0, %v836
  %v838 = vpop.f32.mrb[0].mxu0
  %v839 = vadd.f32 0.0, %v838
  %v840 = vpop.f32.mrb[0].mxu0
  %v841 = vadd.f32 0.0, %v840
  %842 = vmatprep.mubr.bf16.mxu0 0
  %843 = vmatmul.mubr.bf16.gmra.mrb[0].mxu0 %v146
  %v844 = vpop.f32.mrb[0].mxu0
  %v845 = vadd.f32 0.0, %v844
  %v846 = vpop.f32.mrb[0].mxu0
  %v847 = vadd.f32 0.0, %v846
  %v848 = vpop.f32.mrb[0].mxu0
  %v849 = vadd.f32 0.0, %v848
  %v850 = vpop.f32.mrb[0].mxu0
  %v851 = vadd.f32 0.0, %v850
  %852 = vmatprep.mubr.bf16.mxu0 0
  %853 = vmatmul.mubr.bf16.gmra.mrb[0].mxu0 %v147
  %v854 = vpop.f32.mrb[0].mxu0
  %v855 = vadd.f32 0.0, %v854
  %v856 = vpop.f32.mrb[0].mxu0
  %v857 = vadd.f32 0.0, %v856
  %v858 = vpop.f32.mrb[0].mxu0
  %v859 = vadd.f32 0.0, %v858
  %v860 = vpop.f32.mrb[0].mxu0
  %v861 = vadd.f32 0.0, %v860
  %862 = vdwg.mxu0
  %863 = vmatprep.subr.bf16.mxu0 %v387
  %864 = vmatpush1.bf16.msra.mxu0 %v386
  %865 = vmatprep.subr.bf16.mxu0 %v396
  %866 = vmatpush1.bf16.msra.mxu0 %v395
  %867 = vmatprep.subr.bf16.mxu0 %v405
  %868 = vmatpush1.bf16.msra.mxu0 %v404
  %869 = vmatprep.subr.bf16.mxu0 %v414
  %870 = vmatpush1.bf16.msra.mxu0 %v413
  %871 = vmatprep.subr.bf16.mxu0 %v423
  %872 = vmatpush1.bf16.msra.mxu0 %v422
  %873 = vmatprep.subr.bf16.mxu0 %v432
  %874 = vmatpush1.bf16.msra.mxu0 %v431
  %875 = vmatprep.subr.bf16.mxu0 %v441
  %876 = vmatpush1.bf16.msra.mxu0 %v440
  %877 = vmatprep.subr.bf16.mxu0 %v450
  %878 = vmatpush1.bf16.msra.mxu0 %v449
  %879 = vmatprep.subr.bf16.mxu0 0
  %880 = vmatpush1.bf16.msra.mxu0 0
  %881 = vmatprep.subr.bf16.mxu0 0
  %882 = vmatpush1.bf16.msra.mxu0 0
  %883 = vmatprep.subr.bf16.mxu0 0
  %884 = vmatpush1.bf16.msra.mxu0 0
  %885 = vmatprep.subr.bf16.mxu0 0
  %886 = vmatpush1.bf16.msra.mxu0 0
  %887 = vmatprep.subr.bf16.mxu0 0
  %888 = vmatpush1.bf16.msra.mxu0 0
  %889 = vmatprep.subr.bf16.mxu0 0
  %890 = vmatpush1.bf16.msra.mxu0 0
  %891 = vmatprep.subr.bf16.mxu0 0
  %892 = vmatpush1.bf16.msra.mxu0 0
  %893 = vmatprep.subr.bf16.mxu0 0
  %894 = vmatpush1.bf16.msra.mxu0 0
  %895 = vmatprep.mubr.bf16.mxu0 0
  %896 = vmatmul.mubr.bf16.gmra.mrb[0].mxu0 %v140
  %v897 = vpop.f32.mrb[0].mxu0
  %v898 = vadd.f32 0.0, %v897
  %v899 = vpop.f32.mrb[0].mxu0
  %v900 = vadd.f32 0.0, %v899
  %v901 = vpop.f32.mrb[0].mxu0
  %v902 = vadd.f32 0.0, %v901
  %v903 = vpop.f32.mrb[0].mxu0
  %v904 = vadd.f32 0.0, %v903
  %905 = vmatprep.mubr.bf16.mxu0 0
  %906 = vmatmul.mubr.bf16.gmra.mrb[0].mxu0 %v141
  %v907 = vpop.f32.mrb[0].mxu0
  %v908 = vadd.f32 0.0, %v907
  %v909 = vpop.f32.mrb[0].mxu0
  %v910 = vadd.f32 0.0, %v909
  %v911 = vpop.f32.mrb[0].mxu0
  %v912 = vadd.f32 0.0, %v911
  %v913 = vpop.f32.mrb[0].mxu0
  %v914 = vadd.f32 0.0, %v913
  %915 = vmatprep.mubr.bf16.mxu0 0
  %916 = vmatmul.mubr.bf16.gmra.mrb[0].mxu0 %v142
  %v917 = vpop.f32.mrb[0].mxu0
  %v918 = vadd.f32 0.0, %v917
  %v919 = vpop.f32.mrb[0].mxu0
  %v920 = vadd.f32 0.0, %v919
  %v921 = vpop.f32.mrb[0].mxu0
  %v922 = vadd.f32 0.0, %v921
  %v923 = vpop.f32.mrb[0].mxu0
  %v924 = vadd.f32 0.0, %v923
  %925 = vmatprep.mubr.bf16.mxu0 0
  %926 = vmatmul.mubr.bf16.gmra.mrb[0].mxu0 %v143
  %v927 = vpop.f32.mrb[0].mxu0
  %v928 = vadd.f32 0.0, %v927
  %v929 = vpop.f32.mrb[0].mxu0
  %v930 = vadd.f32 0.0, %v929
  %v931 = vpop.f32.mrb[0].mxu0
  %v932 = vadd.f32 0.0, %v931
  %v933 = vpop.f32.mrb[0].mxu0
  %v934 = vadd.f32 0.0, %v933
  %935 = vmatprep.mubr.bf16.mxu0 0
  %936 = vmatmul.mubr.bf16.gmra.mrb[0].mxu0 %v144
  %v937 = vpop.f32.mrb[0].mxu0
  %v938 = vadd.f32 0.0, %v937
  %v939 = vpop.f32.mrb[0].mxu0
  %v940 = vadd.f32 0.0, %v939
  %v941 = vpop.f32.mrb[0].mxu0
  %v942 = vadd.f32 0.0, %v941
  %v943 = vpop.f32.mrb[0].mxu0
  %v944 = vadd.f32 0.0, %v943
  %945 = vmatprep.mubr.bf16.mxu0 0
  %946 = vmatmul.mubr.bf16.gmra.mrb[0].mxu0 %v145
  %v947 = vpop.f32.mrb[0].mxu0
  %v948 = vadd.f32 0.0, %v947
  %v949 = vpop.f32.mrb[0].mxu0
  %v950 = vadd.f32 0.0, %v949
  %v951 = vpop.f32.mrb[0].mxu0
  %v952 = vadd.f32 0.0, %v951
  %v953 = vpop.f32.mrb[0].mxu0
  %v954 = vadd.f32 0.0, %v953
  %955 = vmatprep.mubr.bf16.mxu0 0
  %956 = vmatmul.mubr.bf16.gmra.mrb[0].mxu0 %v146
  %v957 = vpop.f32.mrb[0].mxu0
  %v958 = vadd.f32 0.0, %v957
  %v959 = vpop.f32.mrb[0].mxu0
  %v960 = vadd.f32 0.0, %v959
  %v961 = vpop.f32.mrb[0].mxu0
  %v962 = vadd.f32 0.0, %v961
  %v963 = vpop.f32.mrb[0].mxu0
  %v964 = vadd.f32 0.0, %v963
  %965 = vmatprep.mubr.bf16.mxu0 0
  %966 = vmatmul.mubr.bf16.gmra.mrb[0].mxu0 %v147
  %v967 = vpop.f32.mrb[0].mxu0
  %v968 = vadd.f32 0.0, %v967
  %v969 = vpop.f32.mrb[0].mxu0
  %v970 = vadd.f32 0.0, %v969
  %v971 = vpop.f32.mrb[0].mxu0
  %v972 = vadd.f32 0.0, %v971
  %v973 = vpop.f32.mrb[0].mxu0
  %v974 = vadd.f32 0.0, %v973
  %975 = vdwg.mxu0
  %976 = vmatprep.subr.bf16.mxu0 0
  %977 = vmatpush1.bf16.msra.mxu0 %v388
  %978 = vmatprep.subr.bf16.mxu0 0
  %979 = vmatpush1.bf16.msra.mxu0 %v397
  %980 = vmatprep.subr.bf16.mxu0 0
  %981 = vmatpush1.bf16.msra.mxu0 %v406
  %982 = vmatprep.subr.bf16.mxu0 0
  %983 = vmatpush1.bf16.msra.mxu0 %v415
  %984 = vmatprep.subr.bf16.mxu0 0
  %985 = vmatpush1.bf16.msra.mxu0 %v424
  %986 = vmatprep.subr.bf16.mxu0 0
  %987 = vmatpush1.bf16.msra.mxu0 %v433
  %988 = vmatprep.subr.bf16.mxu0 0
  %989 = vmatpush1.bf16.msra.mxu0 %v442
  %990 = vmatprep.subr.bf16.mxu0 0
  %991 = vmatpush1.bf16.msra.mxu0 %v451
  %992 = vmatprep.subr.bf16.mxu0 0
  %993 = vmatpush1.bf16.msra.mxu0 0
  %994 = vmatprep.subr.bf16.mxu0 0
  %995 = vmatpush1.bf16.msra.mxu0 0
  %996 = vmatprep.subr.bf16.mxu0 0
  %997 = vmatpush1.bf16.msra.mxu0 0
  %998 = vmatprep.subr.bf16.mxu0 0
  %999 = vmatpush1.bf16.msra.mxu0 0
  %1000 = vmatprep.subr.bf16.mxu0 0
  %1001 = vmatpush1.bf16.msra.mxu0 0
  %1002 = vmatprep.subr.bf16.mxu0 0
  %1003 = vmatpush1.bf16.msra.mxu0 0
  %1004 = vmatprep.subr.bf16.mxu0 0
  %1005 = vmatpush1.bf16.msra.mxu0 0
  %1006 = vmatprep.subr.bf16.mxu0 0
  %1007 = vmatpush1.bf16.msra.mxu0 0
  %1008 = vmatprep.mubr.bf16.mxu0 0
  %1009 = vmatmul.mubr.bf16.gmra.mrb[0].mxu0 %v140
  %v1010 = vpop.f32.mrb[0].mxu0
  %v1011 = vadd.f32 0.0, %v1010
  %v1012 = vpop.f32.mrb[0].mxu0
  %v1013 = vpop.f32.mrb[0].mxu0
  %v1014 = vadd.f32 0.0, %v1013
  %v1015 = vpop.f32.mrb[0].mxu0
  %1016 = vmatprep.mubr.bf16.mxu0 0
  %1017 = vmatmul.mubr.bf16.gmra.mrb[0].mxu0 %v141
  %v1018 = vpop.f32.mrb[0].mxu0
  %v1019 = vadd.f32 0.0, %v1018
  %v1020 = vpop.f32.mrb[0].mxu0
  %v1021 = vpop.f32.mrb[0].mxu0
  %v1022 = vadd.f32 0.0, %v1021
  %v1023 = vpop.f32.mrb[0].mxu0
  %1024 = vmatprep.mubr.bf16.mxu0 0
  %1025 = vmatmul.mubr.bf16.gmra.mrb[0].mxu0 %v142
  %v1026 = vpop.f32.mrb[0].mxu0
  %v1027 = vadd.f32 0.0, %v1026
  %v1028 = vpop.f32.mrb[0].mxu0
  %v1029 = vpop.f32.mrb[0].mxu0
  %v1030 = vadd.f32 0.0, %v1029
  %v1031 = vpop.f32.mrb[0].mxu0
  %1032 = vmatprep.mubr.bf16.mxu0 0
  %1033 = vmatmul.mubr.bf16.gmra.mrb[0].mxu0 %v143
  %v1034 = vpop.f32.mrb[0].mxu0
  %v1035 = vadd.f32 0.0, %v1034
  %v1036 = vpop.f32.mrb[0].mxu0
  %v1037 = vpop.f32.mrb[0].mxu0
  %v1038 = vadd.f32 0.0, %v1037
  %v1039 = vpop.f32.mrb[0].mxu0
  %1040 = vmatprep.mubr.bf16.mxu0 0
  %1041 = vmatmul.mubr.bf16.gmra.mrb[0].mxu0 %v144
  %v1042 = vpop.f32.mrb[0].mxu0
  %v1043 = vadd.f32 0.0, %v1042
  %v1044 = vpop.f32.mrb[0].mxu0
  %v1045 = vpop.f32.mrb[0].mxu0
  %v1046 = vadd.f32 0.0, %v1045
  %v1047 = vpop.f32.mrb[0].mxu0
  %1048 = vmatprep.mubr.bf16.mxu0 0
  %1049 = vmatmul.mubr.bf16.gmra.mrb[0].mxu0 %v145
  %v1050 = vpop.f32.mrb[0].mxu0
  %v1051 = vadd.f32 0.0, %v1050
  %v1052 = vpop.f32.mrb[0].mxu0
  %v1053 = vpop.f32.mrb[0].mxu0
  %v1054 = vadd.f32 0.0, %v1053
  %v1055 = vpop.f32.mrb[0].mxu0
  %1056 = vmatprep.mubr.bf16.mxu0 0
  %1057 = vmatmul.mubr.bf16.gmra.mrb[0].mxu0 %v146
  %v1058 = vpop.f32.mrb[0].mxu0
  %v1059 = vadd.f32 0.0, %v1058
  %v1060 = vpop.f32.mrb[0].mxu0
  %v1061 = vpop.f32.mrb[0].mxu0
  %v1062 = vadd.f32 0.0, %v1061
  %v1063 = vpop.f32.mrb[0].mxu0
  %1064 = vmatprep.mubr.bf16.mxu0 0
  %1065 = vmatmul.mubr.bf16.gmra.mrb[0].mxu0 %v147
  %v1066 = vpop.f32.mrb[0].mxu0
  %v1067 = vadd.f32 0.0, %v1066
  %v1068 = vpop.f32.mrb[0].mxu0
  %v1069 = vpop.f32.mrb[0].mxu0
  %v1070 = vadd.f32 0.0, %v1069
  %v1071 = vpop.f32.mrb[0].mxu0
  %1072 = vdwg.mxu0
  %v1073 = vpack.c.bf16 %v563, %v559
  %v1074 = vpack.c.bf16 %v565, %v561
  %v1075 = vpack.c.bf16 %v676, %v672
  %v1076 = vpack.c.bf16 %v678, %v674
  %v1077 = vpack.c.bf16 %v789, %v785
  %v1078 = vpack.c.bf16 %v791, %v787
  %v1079 = vpack.c.bf16 %v902, %v898
  %v1080 = vpack.c.bf16 %v904, %v900
  %v1081 = vpack.c.bf16 %v1014, %v1011
  %v1082 = vpack.c.bf16 %v573, %v569
  %v1083 = vpack.c.bf16 %v575, %v571
  %v1084 = vpack.c.bf16 %v686, %v682
  %v1085 = vpack.c.bf16 %v688, %v684
  %v1086 = vpack.c.bf16 %v799, %v795
  %v1087 = vpack.c.bf16 %v801, %v797
  %v1088 = vpack.c.bf16 %v912, %v908
  %v1089 = vpack.c.bf16 %v914, %v910
  %v1090 = vpack.c.bf16 %v1022, %v1019
  %v1091 = vpack.c.bf16 %v583, %v579
  %v1092 = vpack.c.bf16 %v585, %v581
  %v1093 = vpack.c.bf16 %v696, %v692
  %v1094 = vpack.c.bf16 %v698, %v694
  %v1095 = vpack.c.bf16 %v809, %v805
  %v1096 = vpack.c.bf16 %v811, %v807
  %v1097 = vpack.c.bf16 %v922, %v918
  %v1098 = vpack.c.bf16 %v924, %v920
  %v1099 = vpack.c.bf16 %v1030, %v1027
  %v1100 = vpack.c.bf16 %v593, %v589
  %v1101 = vpack.c.bf16 %v595, %v591
  %v1102 = vpack.c.bf16 %v706, %v702
  %v1103 = vpack.c.bf16 %v708, %v704
  %v1104 = vpack.c.bf16 %v819, %v815
  %v1105 = vpack.c.bf16 %v821, %v817
  %v1106 = vpack.c.bf16 %v932, %v928
  %v1107 = vpack.c.bf16 %v934, %v930
  %v1108 = vpack.c.bf16 %v1038, %v1035
  %v1109 = vpack.c.bf16 %v603, %v599
  %v1110 = vpack.c.bf16 %v605, %v601
  %v1111 = vpack.c.bf16 %v716, %v712
  %v1112 = vpack.c.bf16 %v718, %v714
  %v1113 = vpack.c.bf16 %v829, %v825
  %v1114 = vpack.c.bf16 %v831, %v827
  %v1115 = vpack.c.bf16 %v942, %v938
  %v1116 = vpack.c.bf16 %v944, %v940
  %v1117 = vpack.c.bf16 %v1046, %v1043
  %v1118 = vpack.c.bf16 %v613, %v609
  %v1119 = vpack.c.bf16 %v615, %v611
  %v1120 = vpack.c.bf16 %v726, %v722
  %v1121 = vpack.c.bf16 %v728, %v724
  %v1122 = vpack.c.bf16 %v839, %v835
  %v1123 = vpack.c.bf16 %v841, %v837
  %v1124 = vpack.c.bf16 %v952, %v948
  %v1125 = vpack.c.bf16 %v954, %v950
  %v1126 = vpack.c.bf16 %v1054, %v1051
  %v1127 = vpack.c.bf16 %v623, %v619
  %v1128 = vpack.c.bf16 %v625, %v621
  %v1129 = vpack.c.bf16 %v736, %v732
  %v1130 = vpack.c.bf16 %v738, %v734
  %v1131 = vpack.c.bf16 %v849, %v845
  %v1132 = vpack.c.bf16 %v851, %v847
  %v1133 = vpack.c.bf16 %v962, %v958
  %v1134 = vpack.c.bf16 %v964, %v960
  %v1135 = vpack.c.bf16 %v1062, %v1059
  %v1136 = vpack.c.bf16 %v633, %v629
  %v1137 = vpack.c.bf16 %v635, %v631
  %v1138 = vpack.c.bf16 %v746, %v742
  %v1139 = vpack.c.bf16 %v748, %v744
  %v1140 = vpack.c.bf16 %v859, %v855
  %v1141 = vpack.c.bf16 %v861, %v857
  %v1142 = vpack.c.bf16 %v972, %v968
  %v1143 = vpack.c.bf16 %v974, %v970
  %v1144 = vpack.c.bf16 %v1070, %v1067
  %v1217 = vunpack.c.l.b16 %v1073
  %v1218 = vunpack.c.l.b16 %v1074
  %v1219 = vunpack.c.l.b16 %v1075
  %v1220 = vunpack.c.l.b16 %v1076
  %v1221 = vunpack.c.l.b16 %v1077
  %v1222 = vunpack.c.l.b16 %v1078
  %v1223 = vunpack.c.l.b16 %v1079
  %v1224 = vunpack.c.l.b16 %v1080
  %v1225 = vunpack.c.l.b16 %v1081
  %v1226 = vunpack.c.h.b16 %v1073
  %v1227 = vunpack.c.h.b16 %v1074
  %v1228 = vunpack.c.h.b16 %v1075
  %v1229 = vunpack.c.h.b16 %v1076
  %v1230 = vunpack.c.h.b16 %v1077
  %v1231 = vunpack.c.h.b16 %v1078
  %v1232 = vunpack.c.h.b16 %v1079
  %v1233 = vunpack.c.h.b16 %v1080
  %v1234 = vunpack.c.h.b16 %v1081
  %v1235 = vunpack.c.l.b16 %v1082
  %v1236 = vunpack.c.l.b16 %v1083
  %v1237 = vunpack.c.l.b16 %v1084
  %v1238 = vunpack.c.l.b16 %v1085
  %v1239 = vunpack.c.l.b16 %v1086
  %v1240 = vunpack.c.l.b16 %v1087
  %v1241 = vunpack.c.l.b16 %v1088
  %v1242 = vunpack.c.l.b16 %v1089
  %v1243 = vunpack.c.l.b16 %v1090
  %v1244 = vunpack.c.h.b16 %v1082
  %v1245 = vunpack.c.h.b16 %v1083
  %v1246 = vunpack.c.h.b16 %v1084
  %v1247 = vunpack.c.h.b16 %v1085
  %v1248 = vunpack.c.h.b16 %v1086
  %v1249 = vunpack.c.h.b16 %v1087
  %v1250 = vunpack.c.h.b16 %v1088
  %v1251 = vunpack.c.h.b16 %v1089
  %v1252 = vunpack.c.h.b16 %v1090
  %v1253 = vunpack.c.l.b16 %v1091
  %v1254 = vunpack.c.l.b16 %v1092
  %v1255 = vunpack.c.l.b16 %v1093
  %v1256 = vunpack.c.l.b16 %v1094
  %v1257 = vunpack.c.l.b16 %v1095
  %v1258 = vunpack.c.l.b16 %v1096
  %v1259 = vunpack.c.l.b16 %v1097
  %v1260 = vunpack.c.l.b16 %v1098
  %v1261 = vunpack.c.l.b16 %v1099
  %v1262 = vunpack.c.h.b16 %v1091
  %v1263 = vunpack.c.h.b16 %v1092
  %v1264 = vunpack.c.h.b16 %v1093
  %v1265 = vunpack.c.h.b16 %v1094
  %v1266 = vunpack.c.h.b16 %v1095
  %v1267 = vunpack.c.h.b16 %v1096
  %v1268 = vunpack.c.h.b16 %v1097
  %v1269 = vunpack.c.h.b16 %v1098
  %v1270 = vunpack.c.h.b16 %v1099
  %v1271 = vunpack.c.l.b16 %v1100
  %v1272 = vunpack.c.l.b16 %v1101
  %v1273 = vunpack.c.l.b16 %v1102
  %v1274 = vunpack.c.l.b16 %v1103
  %v1275 = vunpack.c.l.b16 %v1104
  %v1276 = vunpack.c.l.b16 %v1105
  %v1277 = vunpack.c.l.b16 %v1106
  %v1278 = vunpack.c.l.b16 %v1107
  %v1279 = vunpack.c.l.b16 %v1108
  %v1280 = vunpack.c.h.b16 %v1100
  %v1281 = vunpack.c.h.b16 %v1101
  %v1282 = vunpack.c.h.b16 %v1102
  %v1283 = vunpack.c.h.b16 %v1103
  %v1284 = vunpack.c.h.b16 %v1104
  %v1285 = vunpack.c.h.b16 %v1105
  %v1286 = vunpack.c.h.b16 %v1106
  %v1287 = vunpack.c.h.b16 %v1107
  %v1288 = vunpack.c.h.b16 %v1108
  %v1289 = vunpack.c.l.b16 %v1109
  %v1290 = vunpack.c.l.b16 %v1110
  %v1291 = vunpack.c.l.b16 %v1111
  %v1292 = vunpack.c.l.b16 %v1112
  %v1293 = vunpack.c.l.b16 %v1113
  %v1294 = vunpack.c.l.b16 %v1114
  %v1295 = vunpack.c.l.b16 %v1115
  %v1296 = vunpack.c.l.b16 %v1116
  %v1297 = vunpack.c.l.b16 %v1117
  %v1298 = vunpack.c.h.b16 %v1109
  %v1299 = vunpack.c.h.b16 %v1110
  %v1300 = vunpack.c.h.b16 %v1111
  %v1301 = vunpack.c.h.b16 %v1112
  %v1302 = vunpack.c.h.b16 %v1113
  %v1303 = vunpack.c.h.b16 %v1114
  %v1304 = vunpack.c.h.b16 %v1115
  %v1305 = vunpack.c.h.b16 %v1116
  %v1306 = vunpack.c.h.b16 %v1117
  %v1307 = vunpack.c.l.b16 %v1118
  %v1308 = vunpack.c.l.b16 %v1119
  %v1309 = vunpack.c.l.b16 %v1120
  %v1310 = vunpack.c.l.b16 %v1121
  %v1311 = vunpack.c.l.b16 %v1122
  %v1312 = vunpack.c.l.b16 %v1123
  %v1313 = vunpack.c.l.b16 %v1124
  %v1314 = vunpack.c.l.b16 %v1125
  %v1315 = vunpack.c.l.b16 %v1126
  %v1316 = vunpack.c.h.b16 %v1118
  %v1317 = vunpack.c.h.b16 %v1119
  %v1318 = vunpack.c.h.b16 %v1120
  %v1319 = vunpack.c.h.b16 %v1121
  %v1320 = vunpack.c.h.b16 %v1122
  %v1321 = vunpack.c.h.b16 %v1123
  %v1322 = vunpack.c.h.b16 %v1124
  %v1323 = vunpack.c.h.b16 %v1125
  %v1324 = vunpack.c.h.b16 %v1126
  %v1325 = vunpack.c.l.b16 %v1127
  %v1326 = vunpack.c.l.b16 %v1128
  %v1327 = vunpack.c.l.b16 %v1129
  %v1328 = vunpack.c.l.b16 %v1130
  %v1329 = vunpack.c.l.b16 %v1131
  %v1330 = vunpack.c.l.b16 %v1132
  %v1331 = vunpack.c.l.b16 %v1133
  %v1332 = vunpack.c.l.b16 %v1134
  %v1333 = vunpack.c.l.b16 %v1135
  %v1334 = vunpack.c.h.b16 %v1127
  %v1335 = vunpack.c.h.b16 %v1128
  %v1336 = vunpack.c.h.b16 %v1129
  %v1337 = vunpack.c.h.b16 %v1130
  %v1338 = vunpack.c.h.b16 %v1131
  %v1339 = vunpack.c.h.b16 %v1132
  %v1340 = vunpack.c.h.b16 %v1133
  %v1341 = vunpack.c.h.b16 %v1134
  %v1342 = vunpack.c.h.b16 %v1135
  %v1343 = vunpack.c.l.b16 %v1136
  %v1344 = vunpack.c.l.b16 %v1137
  %v1345 = vunpack.c.l.b16 %v1138
  %v1346 = vunpack.c.l.b16 %v1139
  %v1347 = vunpack.c.l.b16 %v1140
  %v1348 = vunpack.c.l.b16 %v1141
  %v1349 = vunpack.c.l.b16 %v1142
  %v1350 = vunpack.c.l.b16 %v1143
  %v1351 = vunpack.c.l.b16 %v1144
  %v1352 = vunpack.c.h.b16 %v1136
  %v1353 = vunpack.c.h.b16 %v1137
  %v1354 = vunpack.c.h.b16 %v1138
  %v1355 = vunpack.c.h.b16 %v1139
  %v1356 = vunpack.c.h.b16 %v1140
  %v1357 = vunpack.c.h.b16 %v1141
  %v1358 = vunpack.c.h.b16 %v1142
  %v1359 = vunpack.c.h.b16 %v1143
  %v1360 = vunpack.c.h.b16 %v1144
  %v1361 = vpack.c.b16 %v1218, %v1217
  %v1362 = vpack.c.b16 %v1220, %v1219
  %v1363 = vpack.c.b16 %v1222, %v1221
  %v1364 = vpack.c.b16 %v1224, %v1223
  %v1365 = vpack.c.b16 %v1225, %v1225
  %v1366 = vpack.c.b16 %v1227, %v1226
  %v1367 = vpack.c.b16 %v1229, %v1228
  %v1368 = vpack.c.b16 %v1231, %v1230
  %v1369 = vpack.c.b16 %v1233, %v1232
  %v1370 = vpack.c.b16 %v1234, %v1234
  %v1371 = vpack.c.b16 %v1236, %v1235
  %v1372 = vpack.c.b16 %v1238, %v1237
  %v1373 = vpack.c.b16 %v1240, %v1239
  %v1374 = vpack.c.b16 %v1242, %v1241
  %v1375 = vpack.c.b16 %v1243, %v1243
  %v1376 = vpack.c.b16 %v1245, %v1244
  %v1377 = vpack.c.b16 %v1247, %v1246
  %v1378 = vpack.c.b16 %v1249, %v1248
  %v1379 = vpack.c.b16 %v1251, %v1250
  %v1380 = vpack.c.b16 %v1252, %v1252
  %v1381 = vpack.c.b16 %v1254, %v1253
  %v1382 = vpack.c.b16 %v1256, %v1255
  %v1383 = vpack.c.b16 %v1258, %v1257
  %v1384 = vpack.c.b16 %v1260, %v1259
  %v1385 = vpack.c.b16 %v1261, %v1261
  %v1386 = vpack.c.b16 %v1263, %v1262
  %v1387 = vpack.c.b16 %v1265, %v1264
  %v1388 = vpack.c.b16 %v1267, %v1266
  %v1389 = vpack.c.b16 %v1269, %v1268
  %v1390 = vpack.c.b16 %v1270, %v1270
  %v1391 = vpack.c.b16 %v1272, %v1271
  %v1392 = vpack.c.b16 %v1274, %v1273
  %v1393 = vpack.c.b16 %v1276, %v1275
  %v1394 = vpack.c.b16 %v1278, %v1277
  %v1395 = vpack.c.b16 %v1279, %v1279
  %v1396 = vpack.c.b16 %v1281, %v1280
  %v1397 = vpack.c.b16 %v1283, %v1282
  %v1398 = vpack.c.b16 %v1285, %v1284
  %v1399 = vpack.c.b16 %v1287, %v1286
  %v1400 = vpack.c.b16 %v1288, %v1288
  %v1401 = vpack.c.b16 %v1290, %v1289
  %v1402 = vpack.c.b16 %v1292, %v1291
  %v1403 = vpack.c.b16 %v1294, %v1293
  %v1404 = vpack.c.b16 %v1296, %v1295
  %v1405 = vpack.c.b16 %v1297, %v1297
  %v1406 = vpack.c.b16 %v1299, %v1298
  %v1407 = vpack.c.b16 %v1301, %v1300
  %v1408 = vpack.c.b16 %v1303, %v1302
  %v1409 = vpack.c.b16 %v1305, %v1304
  %v1410 = vpack.c.b16 %v1306, %v1306
  %v1411 = vpack.c.b16 %v1308, %v1307
  %v1412 = vpack.c.b16 %v1310, %v1309
  %v1413 = vpack.c.b16 %v1312, %v1311
  %v1414 = vpack.c.b16 %v1314, %v1313
  %v1415 = vpack.c.b16 %v1315, %v1315
  %v1416 = vpack.c.b16 %v1317, %v1316
  %v1417 = vpack.c.b16 %v1319, %v1318
  %v1418 = vpack.c.b16 %v1321, %v1320
  %v1419 = vpack.c.b16 %v1323, %v1322
  %v1420 = vpack.c.b16 %v1324, %v1324
  %v1421 = vpack.c.b16 %v1326, %v1325
  %v1422 = vpack.c.b16 %v1328, %v1327
  %v1423 = vpack.c.b16 %v1330, %v1329
  %v1424 = vpack.c.b16 %v1332, %v1331
  %v1425 = vpack.c.b16 %v1333, %v1333
  %v1426 = vpack.c.b16 %v1335, %v1334
  %v1427 = vpack.c.b16 %v1337, %v1336
  %v1428 = vpack.c.b16 %v1339, %v1338
  %v1429 = vpack.c.b16 %v1341, %v1340
  %v1430 = vpack.c.b16 %v1342, %v1342
  %v1431 = vpack.c.b16 %v1344, %v1343
  %v1432 = vpack.c.b16 %v1346, %v1345
  %v1433 = vpack.c.b16 %v1348, %v1347
  %v1434 = vpack.c.b16 %v1350, %v1349
  %v1435 = vpack.c.b16 %v1351, %v1351
  %v1436 = vpack.c.b16 %v1353, %v1352
  %v1437 = vpack.c.b16 %v1355, %v1354
  %v1438 = vpack.c.b16 %v1357, %v1356
  %v1439 = vpack.c.b16 %v1359, %v1358
  %v1440 = vpack.c.b16 %v1360, %v1360
  %1521 = vst [vmem:[%s2] sm:$0xff] %v1361
  %1522 = vst [vmem:[%s2 + $0x8] sm:$0xff] %v1362
  %1523 = vst [vmem:[%s2 + $0x10] sm:$0xff] %v1363
  %1524 = vst [vmem:[%s2 + $0x18] sm:$0xff] %v1364
  %1525 = vst [vmem:[%s2 + $0x20] sm:$0xf] %v1365
  %1526 = vst [vmem:[%s2 + $0x24] sm:$0xff] %v1366
  %1527 = vst [vmem:[%s2 + $0x2c] sm:$0xff] %v1367
  %1528 = vst [vmem:[%s2 + $0x34] sm:$0xff] %v1368
  %1529 = vst [vmem:[%s2 + $0x3c] sm:$0xff] %v1369
  %1530 = vst [vmem:[%s2 + $0x44] sm:$0xf] %v1370
  %1531 = vst [vmem:[%s2 + $0x48] sm:$0xff] %v1371
  %1532 = vst [vmem:[%s2 + $0x50] sm:$0xff] %v1372
  %1533 = vst [vmem:[%s2 + $0x58] sm:$0xff] %v1373
  %1534 = vst [vmem:[%s2 + $0x60] sm:$0xff] %v1374
  %1535 = vst [vmem:[%s2 + $0x68] sm:$0xf] %v1375
  %1536 = vst [vmem:[%s2 + $0x6c] sm:$0xff] %v1376
  %1537 = vst [vmem:[%s2 + $0x74] sm:$0xff] %v1377
  %1538 = vst [vmem:[%s2 + $0x7c] sm:$0xff] %v1378
  %1539 = vst [vmem:[%s2 + $0x84] sm:$0xff] %v1379
  %1540 = vst [vmem:[%s2 + $0x8c] sm:$0xf] %v1380
  %1541 = vst [vmem:[%s2 + $0x90] sm:$0xff] %v1381
  %1542 = vst [vmem:[%s2 + $0x98] sm:$0xff] %v1382
  %1543 = vst [vmem:[%s2 + $0xa0] sm:$0xff] %v1383
  %1544 = vst [vmem:[%s2 + $0xa8] sm:$0xff] %v1384
  %1545 = vst [vmem:[%s2 + $0xb0] sm:$0xf] %v1385
  %1546 = vst [vmem:[%s2 + $0xb4] sm:$0xff] %v1386
  %1547 = vst [vmem:[%s2 + $0xbc] sm:$0xff] %v1387
  %1548 = vst [vmem:[%s2 + $0xc4] sm:$0xff] %v1388
  %1549 = vst [vmem:[%s2 + $0xcc] sm:$0xff] %v1389
  %1550 = vst [vmem:[%s2 + $0xd4] sm:$0xf] %v1390
  %1551 = vst [vmem:[%s2 + $0xd8] sm:$0xff] %v1391
  %1552 = vst [vmem:[%s2 + $0xe0] sm:$0xff] %v1392
  %1553 = vst [vmem:[%s2 + $0xe8] sm:$0xff] %v1393
  %1554 = vst [vmem:[%s2 + $0xf0] sm:$0xff] %v1394
  %1555 = vst [vmem:[%s2 + $0xf8] sm:$0xf] %v1395
  %1556 = vst [vmem:[%s2 + $0xfc] sm:$0xff] %v1396
  %1557 = vst [vmem:[%s2 + $0x104] sm:$0xff] %v1397
  %1558 = vst [vmem:[%s2 + $0x10c] sm:$0xff] %v1398
  %1559 = vst [vmem:[%s2 + $0x114] sm:$0xff] %v1399
  %1560 = vst [vmem:[%s2 + $0x11c] sm:$0xf] %v1400
  %1561 = vst [vmem:[%s2 + $0x120] sm:$0xff] %v1401
  %1562 = vst [vmem:[%s2 + $0x128] sm:$0xff] %v1402
  %1563 = vst [vmem:[%s2 + $0x130] sm:$0xff] %v1403
  %1564 = vst [vmem:[%s2 + $0x138] sm:$0xff] %v1404
  %1565 = vst [vmem:[%s2 + $0x140] sm:$0xf] %v1405
  %1566 = vst [vmem:[%s2 + $0x144] sm:$0xff] %v1406
  %1567 = vst [vmem:[%s2 + $0x14c] sm:$0xff] %v1407
  %1568 = vst [vmem:[%s2 + $0x154] sm:$0xff] %v1408
  %1569 = vst [vmem:[%s2 + $0x15c] sm:$0xff] %v1409
  %1570 = vst [vmem:[%s2 + $0x164] sm:$0xf] %v1410
  %1571 = vst [vmem:[%s2 + $0x168] sm:$0xff] %v1411
  %1572 = vst [vmem:[%s2 + $0x170] sm:$0xff] %v1412
  %1573 = vst [vmem:[%s2 + $0x178] sm:$0xff] %v1413
  %1574 = vst [vmem:[%s2 + $0x180] sm:$0xff] %v1414
  %1575 = vst [vmem:[%s2 + $0x188] sm:$0xf] %v1415
  %1576 = vst [vmem:[%s2 + $0x18c] sm:$0xff] %v1416
  %1577 = vst [vmem:[%s2 + $0x194] sm:$0xff] %v1417
  %1578 = vst [vmem:[%s2 + $0x19c] sm:$0xff] %v1418
  %1579 = vst [vmem:[%s2 + $0x1a4] sm:$0xff] %v1419
  %1580 = vst [vmem:[%s2 + $0x1ac] sm:$0xf] %v1420
  %1581 = vst [vmem:[%s2 + $0x1b0] sm:$0xff] %v1421
  %1582 = vst [vmem:[%s2 + $0x1b8] sm:$0xff] %v1422
  %1583 = vst [vmem:[%s2 + $0x1c0] sm:$0xff] %v1423
  %1584 = vst [vmem:[%s2 + $0x1c8] sm:$0xff] %v1424
  %1585 = vst [vmem:[%s2 + $0x1d0] sm:$0xf] %v1425
  %1586 = vst [vmem:[%s2 + $0x1d4] sm:$0xff] %v1426
  %1587 = vst [vmem:[%s2 + $0x1dc] sm:$0xff] %v1427
  %1588 = vst [vmem:[%s2 + $0x1e4] sm:$0xff] %v1428
  %1589 = vst [vmem:[%s2 + $0x1ec] sm:$0xff] %v1429
  %1590 = vst [vmem:[%s2 + $0x1f4] sm:$0xf] %v1430
  %1591 = vst [vmem:[%s2 + $0x1f8] sm:$0xff] %v1431
  %1592 = vst [vmem:[%s2 + $0x200] sm:$0xff] %v1432
  %1593 = vst [vmem:[%s2 + $0x208] sm:$0xff] %v1433
  %1594 = vst [vmem:[%s2 + $0x210] sm:$0xff] %v1434
  %1595 = vst [vmem:[%s2 + $0x218] sm:$0xf] %v1435
  %1596 = vst [vmem:[%s2 + $0x21c] sm:$0xff] %v1436
  %1597 = vst [vmem:[%s2 + $0x224] sm:$0xff] %v1437
  %1598 = vst [vmem:[%s2 + $0x22c] sm:$0xff] %v1438
  %1599 = vst [vmem:[%s2 + $0x234] sm:$0xff] %v1439
  %1600 = vst [vmem:[%s2 + $0x23c] sm:$0xf] %v1440
  // Predicated region
  $region10: #{embedding_node_classifier_forward.4} parent=0 // pred_check
    _
  $region11: #{embedding_node_classifier_forward.4} parent=0 // pred_check_branch
    %1602 = sbr.rel (0) target = $region13
  $region12: #{embedding_node_classifier_forward.4} parent=0 // pred_region
    _
  $region13: #{embedding_node_classifier_forward.4} parent=0 // pred_fallthru
    _
  // Predicated region
  $region14: #{embedding_node_classifier_forward.4} parent=0 // pred_check
    _
  $region15: #{embedding_node_classifier_forward.4} parent=0 // pred_check_branch
    %1604 = sbr.rel (0) target = $region17
  $region16: #{embedding_node_classifier_forward.4} parent=0 // pred_region
    _
  $region17: #{embedding_node_classifier_forward.4} parent=0 // pred_fallthru
    _

// kernel: embedding_node_classifier_forward.5
$region0: #{embedding_node_classifier_forward.5}
  #allocation0 [shape = 'u32[]', space=smem, size = 0x4, offset = 0x4, fixed_abs, tag = 'smem constant byte address 0x4 - core index']
  #allocation1 [shape = 'u32[144,128]{1,0:T(1,128)}', space=vmem, size = 0x12000, scoped, tag = 'internal scratch']
  %s0 = inlined_call_operand.vmem [shape: bf16[128,1152], index: 0, kind: input, shape index: {}]
  %s1 = inlined_call_operand.vmem [shape: bf16[1152,128], index: 1, kind: input, shape index: {}]
  %s2 = inlined_call_operand.vmem [shape: f32[1,128], index: 2, kind: input, shape index: {}]
  %s3 = inlined_call_operand.vmem [shape: f32[128,128], index: 3, kind: output, shape index: {}]
  %s4 = sld [smem:[#allocation0]]
  $region30: #{embedding_node_classifier_forward.5} parent=0
    _
  %s6 = ssub.s32 1, %s4
  %s7 = scalar_select 0, %s6, %s4
  // Predicated region
  $region2: #{embedding_node_classifier_forward.5} parent=0 // pred_check
    _
  $region3: #{embedding_node_classifier_forward.5} parent=0 // pred_check_branch
    %9 = sbr.rel (0) target = $region5
  $region4: #{embedding_node_classifier_forward.5} parent=0 // pred_region
    _
  $region5: #{embedding_node_classifier_forward.5} parent=0 // pred_fallthru
    _
  // Predicated region
  $region6: #{embedding_node_classifier_forward.5} parent=0 // pred_check
    _
  $region7: #{embedding_node_classifier_forward.5} parent=0 // pred_check_branch
    %11 = sbr.rel (0) target = $region9
  $region8: #{embedding_node_classifier_forward.5} parent=0 // pred_region
    _
  $region9: #{embedding_node_classifier_forward.5} parent=0 // pred_fallthru
    _
  // Predicated region
  $region10: #{embedding_node_classifier_forward.5} parent=0 // pred_check
    _
  $region11: #{embedding_node_classifier_forward.5} parent=0 // pred_check_branch
    %13 = sbr.rel (0) target = $region13
  $region12: #{embedding_node_classifier_forward.5} parent=0 // pred_region
    _
  $region13: #{embedding_node_classifier_forward.5} parent=0 // pred_fallthru
    _
  %p15 = scmp.eq.s32.totalorder 0, 0
  // Predicated region
  $region14: #{embedding_node_classifier_forward.5} parent=0 // pred_check
    %p16 = pneg %p15
  $region15: #{embedding_node_classifier_forward.5} parent=0 // pred_check_branch
    %18 = sbr.rel (%p16) target = $region17
  $region16: #{embedding_node_classifier_forward.5} parent=0 // pred_region
    %19 = vst [vmem:[%s3] sm:$0xff] 0.0
    %20 = vst [vmem:[%s3 + $0x8] sm:$0xff] 0.0
    %21 = vst [vmem:[%s3 + $0x10] sm:$0xff] 0.0
    %22 = vst [vmem:[%s3 + $0x18] sm:$0xff] 0.0
    %23 = vst [vmem:[%s3 + $0x20] sm:$0xff] 0.0
    %24 = vst [vmem:[%s3 + $0x28] sm:$0xff] 0.0
    %25 = vst [vmem:[%s3 + $0x30] sm:$0xff] 0.0
    %26 = vst [vmem:[%s3 + $0x38] sm:$0xff] 0.0
    %27 = vst [vmem:[%s3 + $0x40] sm:$0xff] 0.0
    %28 = vst [vmem:[%s3 + $0x48] sm:$0xff] 0.0
    %29 = vst [vmem:[%s3 + $0x50] sm:$0xff] 0.0
    %30 = vst [vmem:[%s3 + $0x58] sm:$0xff] 0.0
    %31 = vst [vmem:[%s3 + $0x60] sm:$0xff] 0.0
    %32 = vst [vmem:[%s3 + $0x68] sm:$0xff] 0.0
    %33 = vst [vmem:[%s3 + $0x70] sm:$0xff] 0.0
    %34 = vst [vmem:[%s3 + $0x78] sm:$0xff] 0.0
  $region17: #{embedding_node_classifier_forward.5} parent=0 // pred_fallthru
    _
  %v35 = vld [vmem:[%s3] sm:$0xff]
  %v36 = vld [vmem:[%s3 + $0x8] sm:$0xff]
  %v37 = vld [vmem:[%s3 + $0x10] sm:$0xff]
  %v38 = vld [vmem:[%s3 + $0x18] sm:$0xff]
  %v39 = vld [vmem:[%s3 + $0x20] sm:$0xff]
  %v40 = vld [vmem:[%s3 + $0x28] sm:$0xff]
  %v41 = vld [vmem:[%s3 + $0x30] sm:$0xff]
  %v42 = vld [vmem:[%s3 + $0x38] sm:$0xff]
  %v43 = vld [vmem:[%s3 + $0x40] sm:$0xff]
  %v44 = vld [vmem:[%s3 + $0x48] sm:$0xff]
  %v45 = vld [vmem:[%s3 + $0x50] sm:$0xff]
  %v46 = vld [vmem:[%s3 + $0x58] sm:$0xff]
  %v47 = vld [vmem:[%s3 + $0x60] sm:$0xff]
  %v48 = vld [vmem:[%s3 + $0x68] sm:$0xff]
  %v49 = vld [vmem:[%s3 + $0x70] sm:$0xff]
  %v50 = vld [vmem:[%s3 + $0x78] sm:$0xff]
  %v51 = vld [vmem:[%s0] sm:$0xff]
  %v52 = vld [vmem:[%s0 + $0x8] sm:$0xff]
  %v53 = vld [vmem:[%s0 + $0x10] sm:$0xff]
  %v54 = vld [vmem:[%s0 + $0x18] sm:$0xff]
  %v55 = vld [vmem:[%s0 + $0x20] sm:$0xf]
  %v56 = vld [vmem:[%s0 + $0x24] sm:$0xff]
  %v57 = vld [vmem:[%s0 + $0x2c] sm:$0xff]
  %v58 = vld [vmem:[%s0 + $0x34] sm:$0xff]
  %v59 = vld [vmem:[%s0 + $0x3c] sm:$0xff]
  %v60 = vld [vmem:[%s0 + $0x44] sm:$0xf]
  %v61 = vld [vmem:[%s0 + $0x48] sm:$0xff]
  %v62 = vld [vmem:[%s0 + $0x50] sm:$0xff]
  %v63 = vld [vmem:[%s0 + $0x58] sm:$0xff]
  %v64 = vld [vmem:[%s0 + $0x60] sm:$0xff]
  %v65 = vld [vmem:[%s0 + $0x68] sm:$0xf]
  %v66 = vld [vmem:[%s0 + $0x6c] sm:$0xff]
  %v67 = vld [vmem:[%s0 + $0x74] sm:$0xff]
  %v68 = vld [vmem:[%s0 + $0x7c] sm:$0xff]
  %v69 = vld [vmem:[%s0 + $0x84] sm:$0xff]
  %v70 = vld [vmem:[%s0 + $0x8c] sm:$0xf]
  %v71 = vld [vmem:[%s0 + $0x90] sm:$0xff]
  %v72 = vld [vmem:[%s0 + $0x98] sm:$0xff]
  %v73 = vld [vmem:[%s0 + $0xa0] sm:$0xff]
  %v74 = vld [vmem:[%s0 + $0xa8] sm:$0xff]
  %v75 = vld [vmem:[%s0 + $0xb0] sm:$0xf]
  %v76 = vld [vmem:[%s0 + $0xb4] sm:$0xff]
  %v77 = vld [vmem:[%s0 + $0xbc] sm:$0xff]
  %v78 = vld [vmem:[%s0 + $0xc4] sm:$0xff]
  %v79 = vld [vmem:[%s0 + $0xcc] sm:$0xff]
  %v80 = vld [vmem:[%s0 + $0xd4] sm:$0xf]
  %v81 = vld [vmem:[%s0 + $0xd8] sm:$0xff]
  %v82 = vld [vmem:[%s0 + $0xe0] sm:$0xff]
  %v83 = vld [vmem:[%s0 + $0xe8] sm:$0xff]
  %v84 = vld [vmem:[%s0 + $0xf0] sm:$0xff]
  %v85 = vld [vmem:[%s0 + $0xf8] sm:$0xf]
  %v86 = vld [vmem:[%s0 + $0xfc] sm:$0xff]
  %v87 = vld [vmem:[%s0 + $0x104] sm:$0xff]
  %v88 = vld [vmem:[%s0 + $0x10c] sm:$0xff]
  %v89 = vld [vmem:[%s0 + $0x114] sm:$0xff]
  %v90 = vld [vmem:[%s0 + $0x11c] sm:$0xf]
  %v91 = vld [vmem:[%s0 + $0x120] sm:$0xff]
  %v92 = vld [vmem:[%s0 + $0x128] sm:$0xff]
  %v93 = vld [vmem:[%s0 + $0x130] sm:$0xff]
  %v94 = vld [vmem:[%s0 + $0x138] sm:$0xff]
  %v95 = vld [vmem:[%s0 + $0x140] sm:$0xf]
  %v96 = vld [vmem:[%s0 + $0x144] sm:$0xff]
  %v97 = vld [vmem:[%s0 + $0x14c] sm:$0xff]
  %v98 = vld [vmem:[%s0 + $0x154] sm:$0xff]
  %v99 = vld [vmem:[%s0 + $0x15c] sm:$0xff]
  %v100 = vld [vmem:[%s0 + $0x164] sm:$0xf]
  %v101 = vld [vmem:[%s0 + $0x168] sm:$0xff]
  %v102 = vld [vmem:[%s0 + $0x170] sm:$0xff]
  %v103 = vld [vmem:[%s0 + $0x178] sm:$0xff]
  %v104 = vld [vmem:[%s0 + $0x180] sm:$0xff]
  %v105 = vld [vmem:[%s0 + $0x188] sm:$0xf]
  %v106 = vld [vmem:[%s0 + $0x18c] sm:$0xff]
  %v107 = vld [vmem:[%s0 + $0x194] sm:$0xff]
  %v108 = vld [vmem:[%s0 + $0x19c] sm:$0xff]
  %v109 = vld [vmem:[%s0 + $0x1a4] sm:$0xff]
  %v110 = vld [vmem:[%s0 + $0x1ac] sm:$0xf]
  %v111 = vld [vmem:[%s0 + $0x1b0] sm:$0xff]
  %v112 = vld [vmem:[%s0 + $0x1b8] sm:$0xff]
  %v113 = vld [vmem:[%s0 + $0x1c0] sm:$0xff]
  %v114 = vld [vmem:[%s0 + $0x1c8] sm:$0xff]
  %v115 = vld [vmem:[%s0 + $0x1d0] sm:$0xf]
  %v116 = vld [vmem:[%s0 + $0x1d4] sm:$0xff]
  %v117 = vld [vmem:[%s0 + $0x1dc] sm:$0xff]
  %v118 = vld [vmem:[%s0 + $0x1e4] sm:$0xff]
  %v119 = vld [vmem:[%s0 + $0x1ec] sm:$0xff]
  %v120 = vld [vmem:[%s0 + $0x1f4] sm:$0xf]
  %v121 = vld [vmem:[%s0 + $0x1f8] sm:$0xff]
  %v122 = vld [vmem:[%s0 + $0x200] sm:$0xff]
  %v123 = vld [vmem:[%s0 + $0x208] sm:$0xff]
  %v124 = vld [vmem:[%s0 + $0x210] sm:$0xff]
  %v125 = vld [vmem:[%s0 + $0x218] sm:$0xf]
  %v126 = vld [vmem:[%s0 + $0x21c] sm:$0xff]
  %v127 = vld [vmem:[%s0 + $0x224] sm:$0xff]
  %v128 = vld [vmem:[%s0 + $0x22c] sm:$0xff]
  %v129 = vld [vmem:[%s0 + $0x234] sm:$0xff]
  %v130 = vld [vmem:[%s0 + $0x23c] sm:$0xf]
  %v131 = vld [vmem:[%s1] sm:$0xf]
  %v132 = vld [vmem:[%s1 + $0x4] sm:$0xf]
  %v133 = vld [vmem:[%s1 + $0x8] sm:$0xf]
  %v134 = vld [vmem:[%s1 + $0xc] sm:$0xf]
  %v135 = vld [vmem:[%s1 + $0x10] sm:$0xf]
  %v136 = vld [vmem:[%s1 + $0x14] sm:$0xf]
  %v137 = vld [vmem:[%s1 + $0x18] sm:$0xf]
  %v138 = vld [vmem:[%s1 + $0x1c] sm:$0xf]
  %v139 = vld [vmem:[%s1 + $0x20] sm:$0xf]
  %v140 = vld [vmem:[%s1 + $0x24] sm:$0xf]
  %v141 = vld [vmem:[%s1 + $0x28] sm:$0xf]
  %v142 = vld [vmem:[%s1 + $0x2c] sm:$0xf]
  %v143 = vld [vmem:[%s1 + $0x30] sm:$0xf]
  %v144 = vld [vmem:[%s1 + $0x34] sm:$0xf]
  %v145 = vld [vmem:[%s1 + $0x38] sm:$0xf]
  %v146 = vld [vmem:[%s1 + $0x3c] sm:$0xf]
  %v147 = vld [vmem:[%s1 + $0x40] sm:$0xf]
  %v148 = vld [vmem:[%s1 + $0x44] sm:$0xf]
  %v149 = vld [vmem:[%s1 + $0x48] sm:$0xf]
  %v150 = vld [vmem:[%s1 + $0x4c] sm:$0xf]
  %v151 = vld [vmem:[%s1 + $0x50] sm:$0xf]
  %v152 = vld [vmem:[%s1 + $0x54] sm:$0xf]
  %v153 = vld [vmem:[%s1 + $0x58] sm:$0xf]
  %v154 = vld [vmem:[%s1 + $0x5c] sm:$0xf]
  %v155 = vld [vmem:[%s1 + $0x60] sm:$0xf]
  %v156 = vld [vmem:[%s1 + $0x64] sm:$0xf]
  %v157 = vld [vmem:[%s1 + $0x68] sm:$0xf]
  %v158 = vld [vmem:[%s1 + $0x6c] sm:$0xf]
  %v159 = vld [vmem:[%s1 + $0x70] sm:$0xf]
  %v160 = vld [vmem:[%s1 + $0x74] sm:$0xf]
  %v161 = vld [vmem:[%s1 + $0x78] sm:$0xf]
  %v162 = vld [vmem:[%s1 + $0x7c] sm:$0xf]
  %v163 = vld [vmem:[%s1 + $0x80] sm:$0xf]
  %v164 = vld [vmem:[%s1 + $0x84] sm:$0xf]
  %v165 = vld [vmem:[%s1 + $0x88] sm:$0xf]
  %v166 = vld [vmem:[%s1 + $0x8c] sm:$0xf]
  %v167 = vld [vmem:[%s1 + $0x90] sm:$0xf]
  %v168 = vld [vmem:[%s1 + $0x94] sm:$0xf]
  %v169 = vld [vmem:[%s1 + $0x98] sm:$0xf]
  %v170 = vld [vmem:[%s1 + $0x9c] sm:$0xf]
  %v171 = vld [vmem:[%s1 + $0xa0] sm:$0xf]
  %v172 = vld [vmem:[%s1 + $0xa4] sm:$0xf]
  %v173 = vld [vmem:[%s1 + $0xa8] sm:$0xf]
  %v174 = vld [vmem:[%s1 + $0xac] sm:$0xf]
  %v175 = vld [vmem:[%s1 + $0xb0] sm:$0xf]
  %v176 = vld [vmem:[%s1 + $0xb4] sm:$0xf]
  %v177 = vld [vmem:[%s1 + $0xb8] sm:$0xf]
  %v178 = vld [vmem:[%s1 + $0xbc] sm:$0xf]
  %v179 = vld [vmem:[%s1 + $0xc0] sm:$0xf]
  %v180 = vld [vmem:[%s1 + $0xc4] sm:$0xf]
  %v181 = vld [vmem:[%s1 + $0xc8] sm:$0xf]
  %v182 = vld [vmem:[%s1 + $0xcc] sm:$0xf]
  %v183 = vld [vmem:[%s1 + $0xd0] sm:$0xf]
  %v184 = vld [vmem:[%s1 + $0xd4] sm:$0xf]
  %v185 = vld [vmem:[%s1 + $0xd8] sm:$0xf]
  %v186 = vld [vmem:[%s1 + $0xdc] sm:$0xf]
  %v187 = vld [vmem:[%s1 + $0xe0] sm:$0xf]
  %v188 = vld [vmem:[%s1 + $0xe4] sm:$0xf]
  %v189 = vld [vmem:[%s1 + $0xe8] sm:$0xf]
  %v190 = vld [vmem:[%s1 + $0xec] sm:$0xf]
  %v191 = vld [vmem:[%s1 + $0xf0] sm:$0xf]
  %v192 = vld [vmem:[%s1 + $0xf4] sm:$0xf]
  %v193 = vld [vmem:[%s1 + $0xf8] sm:$0xf]
  %v194 = vld [vmem:[%s1 + $0xfc] sm:$0xf]
  %v195 = vld [vmem:[%s1 + $0x100] sm:$0xf]
  %v196 = vld [vmem:[%s1 + $0x104] sm:$0xf]
  %v197 = vld [vmem:[%s1 + $0x108] sm:$0xf]
  %v198 = vld [vmem:[%s1 + $0x10c] sm:$0xf]
  %v199 = vld [vmem:[%s1 + $0x110] sm:$0xf]
  %v200 = vld [vmem:[%s1 + $0x114] sm:$0xf]
  %v201 = vld [vmem:[%s1 + $0x118] sm:$0xf]
  %v202 = vld [vmem:[%s1 + $0x11c] sm:$0xf]
  %v203 = vld [vmem:[%s1 + $0x120] sm:$0xf]
  %v204 = vld [vmem:[%s1 + $0x124] sm:$0xf]
  %v205 = vld [vmem:[%s1 + $0x128] sm:$0xf]
  %v206 = vld [vmem:[%s1 + $0x12c] sm:$0xf]
  %v207 = vld [vmem:[%s1 + $0x130] sm:$0xf]
  %v208 = vld [vmem:[%s1 + $0x134] sm:$0xf]
  %v209 = vld [vmem:[%s1 + $0x138] sm:$0xf]
  %v210 = vld [vmem:[%s1 + $0x13c] sm:$0xf]
  %v211 = vld [vmem:[%s1 + $0x140] sm:$0xf]
  %v212 = vld [vmem:[%s1 + $0x144] sm:$0xf]
  %v213 = vld [vmem:[%s1 + $0x148] sm:$0xf]
  %v214 = vld [vmem:[%s1 + $0x14c] sm:$0xf]
  %v215 = vld [vmem:[%s1 + $0x150] sm:$0xf]
  %v216 = vld [vmem:[%s1 + $0x154] sm:$0xf]
  %v217 = vld [vmem:[%s1 + $0x158] sm:$0xf]
  %v218 = vld [vmem:[%s1 + $0x15c] sm:$0xf]
  %v219 = vld [vmem:[%s1 + $0x160] sm:$0xf]
  %v220 = vld [vmem:[%s1 + $0x164] sm:$0xf]
  %v221 = vld [vmem:[%s1 + $0x168] sm:$0xf]
  %v222 = vld [vmem:[%s1 + $0x16c] sm:$0xf]
  %v223 = vld [vmem:[%s1 + $0x170] sm:$0xf]
  %v224 = vld [vmem:[%s1 + $0x174] sm:$0xf]
  %v225 = vld [vmem:[%s1 + $0x178] sm:$0xf]
  %v226 = vld [vmem:[%s1 + $0x17c] sm:$0xf]
  %v227 = vld [vmem:[%s1 + $0x180] sm:$0xf]
  %v228 = vld [vmem:[%s1 + $0x184] sm:$0xf]
  %v229 = vld [vmem:[%s1 + $0x188] sm:$0xf]
  %v230 = vld [vmem:[%s1 + $0x18c] sm:$0xf]
  %v231 = vld [vmem:[%s1 + $0x190] sm:$0xf]
  %v232 = vld [vmem:[%s1 + $0x194] sm:$0xf]
  %v233 = vld [vmem:[%s1 + $0x198] sm:$0xf]
  %v234 = vld [vmem:[%s1 + $0x19c] sm:$0xf]
  %v235 = vld [vmem:[%s1 + $0x1a0] sm:$0xf]
  %v236 = vld [vmem:[%s1 + $0x1a4] sm:$0xf]
  %v237 = vld [vmem:[%s1 + $0x1a8] sm:$0xf]
  %v238 = vld [vmem:[%s1 + $0x1ac] sm:$0xf]
  %v239 = vld [vmem:[%s1 + $0x1b0] sm:$0xf]
  %v240 = vld [vmem:[%s1 + $0x1b4] sm:$0xf]
  %v241 = vld [vmem:[%s1 + $0x1b8] sm:$0xf]
  %v242 = vld [vmem:[%s1 + $0x1bc] sm:$0xf]
  %v243 = vld [vmem:[%s1 + $0x1c0] sm:$0xf]
  %v244 = vld [vmem:[%s1 + $0x1c4] sm:$0xf]
  %v245 = vld [vmem:[%s1 + $0x1c8] sm:$0xf]
  %v246 = vld [vmem:[%s1 + $0x1cc] sm:$0xf]
  %v247 = vld [vmem:[%s1 + $0x1d0] sm:$0xf]
  %v248 = vld [vmem:[%s1 + $0x1d4] sm:$0xf]
  %v249 = vld [vmem:[%s1 + $0x1d8] sm:$0xf]
  %v250 = vld [vmem:[%s1 + $0x1dc] sm:$0xf]
  %v251 = vld [vmem:[%s1 + $0x1e0] sm:$0xf]
  %v252 = vld [vmem:[%s1 + $0x1e4] sm:$0xf]
  %v253 = vld [vmem:[%s1 + $0x1e8] sm:$0xf]
  %v254 = vld [vmem:[%s1 + $0x1ec] sm:$0xf]
  %v255 = vld [vmem:[%s1 + $0x1f0] sm:$0xf]
  %v256 = vld [vmem:[%s1 + $0x1f4] sm:$0xf]
  %v257 = vld [vmem:[%s1 + $0x1f8] sm:$0xf]
  %v258 = vld [vmem:[%s1 + $0x1fc] sm:$0xf]
  %v259 = vld [vmem:[%s1 + $0x200] sm:$0xf]
  %v260 = vld [vmem:[%s1 + $0x204] sm:$0xf]
  %v261 = vld [vmem:[%s1 + $0x208] sm:$0xf]
  %v262 = vld [vmem:[%s1 + $0x20c] sm:$0xf]
  %v263 = vld [vmem:[%s1 + $0x210] sm:$0xf]
  %v264 = vld [vmem:[%s1 + $0x214] sm:$0xf]
  %v265 = vld [vmem:[%s1 + $0x218] sm:$0xf]
  %v266 = vld [vmem:[%s1 + $0x21c] sm:$0xf]
  %v267 = vld [vmem:[%s1 + $0x220] sm:$0xf]
  %v268 = vld [vmem:[%s1 + $0x224] sm:$0xf]
  %v269 = vld [vmem:[%s1 + $0x228] sm:$0xf]
  %v270 = vld [vmem:[%s1 + $0x22c] sm:$0xf]
  %v271 = vld [vmem:[%s1 + $0x230] sm:$0xf]
  %v272 = vld [vmem:[%s1 + $0x234] sm:$0xf]
  %v273 = vld [vmem:[%s1 + $0x238] sm:$0xf]
  %v274 = vld [vmem:[%s1 + $0x23c] sm:$0xf]
  %v355 = vunpack.c.l.b16 %v51
  %v356 = vunpack.c.h.b16 %v51
  %v357 = vunpack.c.l.b16 %v52
  %v358 = vunpack.c.h.b16 %v52
  %v359 = vunpack.c.l.b16 %v53
  %v360 = vunpack.c.h.b16 %v53
  %v361 = vunpack.c.l.b16 %v54
  %v362 = vunpack.c.h.b16 %v54
  %v363 = vunpack.c.l.b16 %v55
  %v364 = vunpack.c.l.b16 %v56
  %v365 = vunpack.c.h.b16 %v56
  %v366 = vunpack.c.l.b16 %v57
  %v367 = vunpack.c.h.b16 %v57
  %v368 = vunpack.c.l.b16 %v58
  %v369 = vunpack.c.h.b16 %v58
  %v370 = vunpack.c.l.b16 %v59
  %v371 = vunpack.c.h.b16 %v59
  %v372 = vunpack.c.l.b16 %v60
  %v373 = vunpack.c.l.b16 %v61
  %v374 = vunpack.c.h.b16 %v61
  %v375 = vunpack.c.l.b16 %v62
  %v376 = vunpack.c.h.b16 %v62
  %v377 = vunpack.c.l.b16 %v63
  %v378 = vunpack.c.h.b16 %v63
  %v379 = vunpack.c.l.b16 %v64
  %v380 = vunpack.c.h.b16 %v64
  %v381 = vunpack.c.l.b16 %v65
  %v382 = vunpack.c.l.b16 %v66
  %v383 = vunpack.c.h.b16 %v66
  %v384 = vunpack.c.l.b16 %v67
  %v385 = vunpack.c.h.b16 %v67
  %v386 = vunpack.c.l.b16 %v68
  %v387 = vunpack.c.h.b16 %v68
  %v388 = vunpack.c.l.b16 %v69
  %v389 = vunpack.c.h.b16 %v69
  %v390 = vunpack.c.l.b16 %v70
  %v391 = vunpack.c.l.b16 %v71
  %v392 = vunpack.c.h.b16 %v71
  %v393 = vunpack.c.l.b16 %v72
  %v394 = vunpack.c.h.b16 %v72
  %v395 = vunpack.c.l.b16 %v73
  %v396 = vunpack.c.h.b16 %v73
  %v397 = vunpack.c.l.b16 %v74
  %v398 = vunpack.c.h.b16 %v74
  %v399 = vunpack.c.l.b16 %v75
  %v400 = vunpack.c.l.b16 %v76
  %v401 = vunpack.c.h.b16 %v76
  %v402 = vunpack.c.l.b16 %v77
  %v403 = vunpack.c.h.b16 %v77
  %v404 = vunpack.c.l.b16 %v78
  %v405 = vunpack.c.h.b16 %v78
  %v406 = vunpack.c.l.b16 %v79
  %v407 = vunpack.c.h.b16 %v79
  %v408 = vunpack.c.l.b16 %v80
  %v409 = vunpack.c.l.b16 %v81
  %v410 = vunpack.c.h.b16 %v81
  %v411 = vunpack.c.l.b16 %v82
  %v412 = vunpack.c.h.b16 %v82
  %v413 = vunpack.c.l.b16 %v83
  %v414 = vunpack.c.h.b16 %v83
  %v415 = vunpack.c.l.b16 %v84
  %v416 = vunpack.c.h.b16 %v84
  %v417 = vunpack.c.l.b16 %v85
  %v418 = vunpack.c.l.b16 %v86
  %v419 = vunpack.c.h.b16 %v86
  %v420 = vunpack.c.l.b16 %v87
  %v421 = vunpack.c.h.b16 %v87
  %v422 = vunpack.c.l.b16 %v88
  %v423 = vunpack.c.h.b16 %v88
  %v424 = vunpack.c.l.b16 %v89
  %v425 = vunpack.c.h.b16 %v89
  %v426 = vunpack.c.l.b16 %v90
  %v427 = vunpack.c.l.b16 %v91
  %v428 = vunpack.c.h.b16 %v91
  %v429 = vunpack.c.l.b16 %v92
  %v430 = vunpack.c.h.b16 %v92
  %v431 = vunpack.c.l.b16 %v93
  %v432 = vunpack.c.h.b16 %v93
  %v433 = vunpack.c.l.b16 %v94
  %v434 = vunpack.c.h.b16 %v94
  %v435 = vunpack.c.l.b16 %v95
  %v436 = vunpack.c.l.b16 %v96
  %v437 = vunpack.c.h.b16 %v96
  %v438 = vunpack.c.l.b16 %v97
  %v439 = vunpack.c.h.b16 %v97
  %v440 = vunpack.c.l.b16 %v98
  %v441 = vunpack.c.h.b16 %v98
  %v442 = vunpack.c.l.b16 %v99
  %v443 = vunpack.c.h.b16 %v99
  %v444 = vunpack.c.l.b16 %v100
  %v445 = vunpack.c.l.b16 %v101
  %v446 = vunpack.c.h.b16 %v101
  %v447 = vunpack.c.l.b16 %v102
  %v448 = vunpack.c.h.b16 %v102
  %v449 = vunpack.c.l.b16 %v103
  %v450 = vunpack.c.h.b16 %v103
  %v451 = vunpack.c.l.b16 %v104
  %v452 = vunpack.c.h.b16 %v104
  %v453 = vunpack.c.l.b16 %v105
  %v454 = vunpack.c.l.b16 %v106
  %v455 = vunpack.c.h.b16 %v106
  %v456 = vunpack.c.l.b16 %v107
  %v457 = vunpack.c.h.b16 %v107
  %v458 = vunpack.c.l.b16 %v108
  %v459 = vunpack.c.h.b16 %v108
  %v460 = vunpack.c.l.b16 %v109
  %v461 = vunpack.c.h.b16 %v109
  %v462 = vunpack.c.l.b16 %v110
  %v463 = vunpack.c.l.b16 %v111
  %v464 = vunpack.c.h.b16 %v111
  %v465 = vunpack.c.l.b16 %v112
  %v466 = vunpack.c.h.b16 %v112
  %v467 = vunpack.c.l.b16 %v113
  %v468 = vunpack.c.h.b16 %v113
  %v469 = vunpack.c.l.b16 %v114
  %v470 = vunpack.c.h.b16 %v114
  %v471 = vunpack.c.l.b16 %v115
  %v472 = vunpack.c.l.b16 %v116
  %v473 = vunpack.c.h.b16 %v116
  %v474 = vunpack.c.l.b16 %v117
  %v475 = vunpack.c.h.b16 %v117
  %v476 = vunpack.c.l.b16 %v118
  %v477 = vunpack.c.h.b16 %v118
  %v478 = vunpack.c.l.b16 %v119
  %v479 = vunpack.c.h.b16 %v119
  %v480 = vunpack.c.l.b16 %v120
  %v481 = vunpack.c.l.b16 %v121
  %v482 = vunpack.c.h.b16 %v121
  %v483 = vunpack.c.l.b16 %v122
  %v484 = vunpack.c.h.b16 %v122
  %v485 = vunpack.c.l.b16 %v123
  %v486 = vunpack.c.h.b16 %v123
  %v487 = vunpack.c.l.b16 %v124
  %v488 = vunpack.c.h.b16 %v124
  %v489 = vunpack.c.l.b16 %v125
  %v490 = vunpack.c.l.b16 %v126
  %v491 = vunpack.c.h.b16 %v126
  %v492 = vunpack.c.l.b16 %v127
  %v493 = vunpack.c.h.b16 %v127
  %v494 = vunpack.c.l.b16 %v128
  %v495 = vunpack.c.h.b16 %v128
  %v496 = vunpack.c.l.b16 %v129
  %v497 = vunpack.c.h.b16 %v129
  %v498 = vunpack.c.l.b16 %v130
  %v499 = vpack.c.b16 %v364, %v355
  %v500 = vpack.c.b16 %v365, %v356
  %v501 = vpack.c.b16 %v366, %v357
  %v502 = vpack.c.b16 %v367, %v358
  %v503 = vpack.c.b16 %v368, %v359
  %v504 = vpack.c.b16 %v369, %v360
  %v505 = vpack.c.b16 %v370, %v361
  %v506 = vpack.c.b16 %v371, %v362
  %v507 = vpack.c.b16 %v372, %v363
  %v508 = vpack.c.b16 %v382, %v373
  %v509 = vpack.c.b16 %v383, %v374
  %v510 = vpack.c.b16 %v384, %v375
  %v511 = vpack.c.b16 %v385, %v376
  %v512 = vpack.c.b16 %v386, %v377
  %v513 = vpack.c.b16 %v387, %v378
  %v514 = vpack.c.b16 %v388, %v379
  %v515 = vpack.c.b16 %v389, %v380
  %v516 = vpack.c.b16 %v390, %v381
  %v517 = vpack.c.b16 %v400, %v391
  %v518 = vpack.c.b16 %v401, %v392
  %v519 = vpack.c.b16 %v402, %v393
  %v520 = vpack.c.b16 %v403, %v394
  %v521 = vpack.c.b16 %v404, %v395
  %v522 = vpack.c.b16 %v405, %v396
  %v523 = vpack.c.b16 %v406, %v397
  %v524 = vpack.c.b16 %v407, %v398
  %v525 = vpack.c.b16 %v408, %v399
  %v526 = vpack.c.b16 %v418, %v409
  %v527 = vpack.c.b16 %v419, %v410
  %v528 = vpack.c.b16 %v420, %v411
  %v529 = vpack.c.b16 %v421, %v412
  %v530 = vpack.c.b16 %v422, %v413
  %v531 = vpack.c.b16 %v423, %v414
  %v532 = vpack.c.b16 %v424, %v415
  %v533 = vpack.c.b16 %v425, %v416
  %v534 = vpack.c.b16 %v426, %v417
  %v535 = vpack.c.b16 %v436, %v427
  %v536 = vpack.c.b16 %v437, %v428
  %v537 = vpack.c.b16 %v438, %v429
  %v538 = vpack.c.b16 %v439, %v430
  %v539 = vpack.c.b16 %v440, %v431
  %v540 = vpack.c.b16 %v441, %v432
  %v541 = vpack.c.b16 %v442, %v433
  %v542 = vpack.c.b16 %v443, %v434
  %v543 = vpack.c.b16 %v444, %v435
  %v544 = vpack.c.b16 %v454, %v445
  %v545 = vpack.c.b16 %v455, %v446
  %v546 = vpack.c.b16 %v456, %v447
  %v547 = vpack.c.b16 %v457, %v448
  %v548 = vpack.c.b16 %v458, %v449
  %v549 = vpack.c.b16 %v459, %v450
  %v550 = vpack.c.b16 %v460, %v451
  %v551 = vpack.c.b16 %v461, %v452
  %v552 = vpack.c.b16 %v462, %v453
  %v553 = vpack.c.b16 %v472, %v463
  %v554 = vpack.c.b16 %v473, %v464
  %v555 = vpack.c.b16 %v474, %v465
  %v556 = vpack.c.b16 %v475, %v466
  %v557 = vpack.c.b16 %v476, %v467
  %v558 = vpack.c.b16 %v477, %v468
  %v559 = vpack.c.b16 %v478, %v469
  %v560 = vpack.c.b16 %v479, %v470
  %v561 = vpack.c.b16 %v480, %v471
  %v562 = vpack.c.b16 %v490, %v481
  %v563 = vpack.c.b16 %v491, %v482
  %v564 = vpack.c.b16 %v492, %v483
  %v565 = vpack.c.b16 %v493, %v484
  %v566 = vpack.c.b16 %v494, %v485
  %v567 = vpack.c.b16 %v495, %v486
  %v568 = vpack.c.b16 %v496, %v487
  %v569 = vpack.c.b16 %v497, %v488
  %v570 = vpack.c.b16 %v498, %v489
  %v787 = vunpack.c.l.b16 %v131
  %v788 = vunpack.c.l.b16 %v132
  %v789 = vunpack.c.l.b16 %v133
  %v790 = vunpack.c.l.b16 %v134
  %v791 = vunpack.c.l.b16 %v135
  %v792 = vunpack.c.l.b16 %v136
  %v793 = vunpack.c.l.b16 %v137
  %v794 = vunpack.c.l.b16 %v138
  %v795 = vunpack.c.l.b16 %v139
  %v796 = vunpack.c.l.b16 %v140
  %v797 = vunpack.c.l.b16 %v141
  %v798 = vunpack.c.l.b16 %v142
  %v799 = vunpack.c.l.b16 %v143
  %v800 = vunpack.c.l.b16 %v144
  %v801 = vunpack.c.l.b16 %v145
  %v802 = vunpack.c.l.b16 %v146
  %v803 = vunpack.c.l.b16 %v147
  %v804 = vunpack.c.l.b16 %v148
  %v805 = vunpack.c.l.b16 %v149
  %v806 = vunpack.c.l.b16 %v150
  %v807 = vunpack.c.l.b16 %v151
  %v808 = vunpack.c.l.b16 %v152
  %v809 = vunpack.c.l.b16 %v153
  %v810 = vunpack.c.l.b16 %v154
  %v811 = vunpack.c.l.b16 %v155
  %v812 = vunpack.c.l.b16 %v156
  %v813 = vunpack.c.l.b16 %v157
  %v814 = vunpack.c.l.b16 %v158
  %v815 = vunpack.c.l.b16 %v159
  %v816 = vunpack.c.l.b16 %v160
  %v817 = vunpack.c.l.b16 %v161
  %v818 = vunpack.c.l.b16 %v162
  %v819 = vunpack.c.l.b16 %v163
  %v820 = vunpack.c.l.b16 %v164
  %v821 = vunpack.c.l.b16 %v165
  %v822 = vunpack.c.l.b16 %v166
  %v823 = vunpack.c.l.b16 %v167
  %v824 = vunpack.c.l.b16 %v168
  %v825 = vunpack.c.l.b16 %v169
  %v826 = vunpack.c.l.b16 %v170
  %v827 = vunpack.c.l.b16 %v171
  %v828 = vunpack.c.l.b16 %v172
  %v829 = vunpack.c.l.b16 %v173
  %v830 = vunpack.c.l.b16 %v174
  %v831 = vunpack.c.l.b16 %v175
  %v832 = vunpack.c.l.b16 %v176
  %v833 = vunpack.c.l.b16 %v177
  %v834 = vunpack.c.l.b16 %v178
  %v835 = vunpack.c.l.b16 %v179
  %v836 = vunpack.c.l.b16 %v180
  %v837 = vunpack.c.l.b16 %v181
  %v838 = vunpack.c.l.b16 %v182
  %v839 = vunpack.c.l.b16 %v183
  %v840 = vunpack.c.l.b16 %v184
  %v841 = vunpack.c.l.b16 %v185
  %v842 = vunpack.c.l.b16 %v186
  %v843 = vunpack.c.l.b16 %v187
  %v844 = vunpack.c.l.b16 %v188
  %v845 = vunpack.c.l.b16 %v189
  %v846 = vunpack.c.l.b16 %v190
  %v847 = vunpack.c.l.b16 %v191
  %v848 = vunpack.c.l.b16 %v192
  %v849 = vunpack.c.l.b16 %v193
  %v850 = vunpack.c.l.b16 %v194
  %v851 = vunpack.c.l.b16 %v195
  %v852 = vunpack.c.l.b16 %v196
  %v853 = vunpack.c.l.b16 %v197
  %v854 = vunpack.c.l.b16 %v198
  %v855 = vunpack.c.l.b16 %v199
  %v856 = vunpack.c.l.b16 %v200
  %v857 = vunpack.c.l.b16 %v201
  %v858 = vunpack.c.l.b16 %v202
  %v859 = vunpack.c.l.b16 %v203
  %v860 = vunpack.c.l.b16 %v204
  %v861 = vunpack.c.l.b16 %v205
  %v862 = vunpack.c.l.b16 %v206
  %v863 = vunpack.c.l.b16 %v207
  %v864 = vunpack.c.l.b16 %v208
  %v865 = vunpack.c.l.b16 %v209
  %v866 = vunpack.c.l.b16 %v210
  %v867 = vunpack.c.l.b16 %v211
  %v868 = vunpack.c.l.b16 %v212
  %v869 = vunpack.c.l.b16 %v213
  %v870 = vunpack.c.l.b16 %v214
  %v871 = vunpack.c.l.b16 %v215
  %v872 = vunpack.c.l.b16 %v216
  %v873 = vunpack.c.l.b16 %v217
  %v874 = vunpack.c.l.b16 %v218
  %v875 = vunpack.c.l.b16 %v219
  %v876 = vunpack.c.l.b16 %v220
  %v877 = vunpack.c.l.b16 %v221
  %v878 = vunpack.c.l.b16 %v222
  %v879 = vunpack.c.l.b16 %v223
  %v880 = vunpack.c.l.b16 %v224
  %v881 = vunpack.c.l.b16 %v225
  %v882 = vunpack.c.l.b16 %v226
  %v883 = vunpack.c.l.b16 %v227
  %v884 = vunpack.c.l.b16 %v228
  %v885 = vunpack.c.l.b16 %v229
  %v886 = vunpack.c.l.b16 %v230
  %v887 = vunpack.c.l.b16 %v231
  %v888 = vunpack.c.l.b16 %v232
  %v889 = vunpack.c.l.b16 %v233
  %v890 = vunpack.c.l.b16 %v234
  %v891 = vunpack.c.l.b16 %v235
  %v892 = vunpack.c.l.b16 %v236
  %v893 = vunpack.c.l.b16 %v237
  %v894 = vunpack.c.l.b16 %v238
  %v895 = vunpack.c.l.b16 %v239
  %v896 = vunpack.c.l.b16 %v240
  %v897 = vunpack.c.l.b16 %v241
  %v898 = vunpack.c.l.b16 %v242
  %v899 = vunpack.c.l.b16 %v243
  %v900 = vunpack.c.l.b16 %v244
  %v901 = vunpack.c.l.b16 %v245
  %v902 = vunpack.c.l.b16 %v246
  %v903 = vunpack.c.l.b16 %v247
  %v904 = vunpack.c.l.b16 %v248
  %v905 = vunpack.c.l.b16 %v249
  %v906 = vunpack.c.l.b16 %v250
  %v907 = vunpack.c.l.b16 %v251
  %v908 = vunpack.c.l.b16 %v252
  %v909 = vunpack.c.l.b16 %v253
  %v910 = vunpack.c.l.b16 %v254
  %v911 = vunpack.c.l.b16 %v255
  %v912 = vunpack.c.l.b16 %v256
  %v913 = vunpack.c.l.b16 %v257
  %v914 = vunpack.c.l.b16 %v258
  %v915 = vunpack.c.l.b16 %v259
  %v916 = vunpack.c.l.b16 %v260
  %v917 = vunpack.c.l.b16 %v261
  %v918 = vunpack.c.l.b16 %v262
  %v919 = vunpack.c.l.b16 %v263
  %v920 = vunpack.c.l.b16 %v264
  %v921 = vunpack.c.l.b16 %v265
  %v922 = vunpack.c.l.b16 %v266
  %v923 = vunpack.c.l.b16 %v267
  %v924 = vunpack.c.l.b16 %v268
  %v925 = vunpack.c.l.b16 %v269
  %v926 = vunpack.c.l.b16 %v270
  %v927 = vunpack.c.l.b16 %v271
  %v928 = vunpack.c.l.b16 %v272
  %v929 = vunpack.c.l.b16 %v273
  %v930 = vunpack.c.l.b16 %v274
  %v931 = vpack.c.b16 %v788, %v787
  %v932 = vpack.c.b16 %v790, %v789
  %v933 = vpack.c.b16 %v792, %v791
  %v934 = vpack.c.b16 %v794, %v793
  %v935 = vpack.c.b16 %v796, %v795
  %v936 = vpack.c.b16 %v798, %v797
  %v937 = vpack.c.b16 %v800, %v799
  %v938 = vpack.c.b16 %v802, %v801
  %v939 = vpack.c.b16 %v804, %v803
  %v940 = vpack.c.b16 %v806, %v805
  %v941 = vpack.c.b16 %v808, %v807
  %v942 = vpack.c.b16 %v810, %v809
  %v943 = vpack.c.b16 %v812, %v811
  %v944 = vpack.c.b16 %v814, %v813
  %v945 = vpack.c.b16 %v816, %v815
  %v946 = vpack.c.b16 %v818, %v817
  %v947 = vpack.c.b16 %v820, %v819
  %v948 = vpack.c.b16 %v822, %v821
  %v949 = vpack.c.b16 %v824, %v823
  %v950 = vpack.c.b16 %v826, %v825
  %v951 = vpack.c.b16 %v828, %v827
  %v952 = vpack.c.b16 %v830, %v829
  %v953 = vpack.c.b16 %v832, %v831
  %v954 = vpack.c.b16 %v834, %v833
  %v955 = vpack.c.b16 %v836, %v835
  %v956 = vpack.c.b16 %v838, %v837
  %v957 = vpack.c.b16 %v840, %v839
  %v958 = vpack.c.b16 %v842, %v841
  %v959 = vpack.c.b16 %v844, %v843
  %v960 = vpack.c.b16 %v846, %v845
  %v961 = vpack.c.b16 %v848, %v847
  %v962 = vpack.c.b16 %v850, %v849
  %v963 = vpack.c.b16 %v852, %v851
  %v964 = vpack.c.b16 %v854, %v853
  %v965 = vpack.c.b16 %v856, %v855
  %v966 = vpack.c.b16 %v858, %v857
  %v967 = vpack.c.b16 %v860, %v859
  %v968 = vpack.c.b16 %v862, %v861
  %v969 = vpack.c.b16 %v864, %v863
  %v970 = vpack.c.b16 %v866, %v865
  %v971 = vpack.c.b16 %v868, %v867
  %v972 = vpack.c.b16 %v870, %v869
  %v973 = vpack.c.b16 %v872, %v871
  %v974 = vpack.c.b16 %v874, %v873
  %v975 = vpack.c.b16 %v876, %v875
  %v976 = vpack.c.b16 %v878, %v877
  %v977 = vpack.c.b16 %v880, %v879
  %v978 = vpack.c.b16 %v882, %v881
  %v979 = vpack.c.b16 %v884, %v883
  %v980 = vpack.c.b16 %v886, %v885
  %v981 = vpack.c.b16 %v888, %v887
  %v982 = vpack.c.b16 %v890, %v889
  %v983 = vpack.c.b16 %v892, %v891
  %v984 = vpack.c.b16 %v894, %v893
  %v985 = vpack.c.b16 %v896, %v895
  %v986 = vpack.c.b16 %v898, %v897
  %v987 = vpack.c.b16 %v900, %v899
  %v988 = vpack.c.b16 %v902, %v901
  %v989 = vpack.c.b16 %v904, %v903
  %v990 = vpack.c.b16 %v906, %v905
  %v991 = vpack.c.b16 %v908, %v907
  %v992 = vpack.c.b16 %v910, %v909
  %v993 = vpack.c.b16 %v912, %v911
  %v994 = vpack.c.b16 %v914, %v913
  %v995 = vpack.c.b16 %v916, %v915
  %v996 = vpack.c.b16 %v918, %v917
  %v997 = vpack.c.b16 %v920, %v919
  %v998 = vpack.c.b16 %v922, %v921
  %v999 = vpack.c.b16 %v924, %v923
  %v1000 = vpack.c.b16 %v926, %v925
  %v1001 = vpack.c.b16 %v928, %v927
  %v1002 = vpack.c.b16 %v930, %v929
  %1075 = vmatprep.subr.bf16.mxu0 0
  %1076 = vmatpush1.bf16.msra.mxu0 %v931
  %1077 = vmatprep.subr.bf16.mxu0 0
  %1078 = vmatpush1.bf16.msra.mxu0 %v932
  %1079 = vmatprep.subr.bf16.mxu0 0
  %1080 = vmatpush1.bf16.msra.mxu0 %v933
  %1081 = vmatprep.subr.bf16.mxu0 0
  %1082 = vmatpush1.bf16.msra.mxu0 %v934
  %1083 = vmatprep.subr.bf16.mxu0 0
  %1084 = vmatpush1.bf16.msra.mxu0 %v935
  %1085 = vmatprep.subr.bf16.mxu0 0
  %1086 = vmatpush1.bf16.msra.mxu0 %v936
  %1087 = vmatprep.subr.bf16.mxu0 0
  %1088 = vmatpush1.bf16.msra.mxu0 %v937
  %1089 = vmatprep.subr.bf16.mxu0 0
  %1090 = vmatpush1.bf16.msra.mxu0 %v938
  %1091 = vmatprep.subr.bf16.mxu0 0
  %1092 = vmatpush1.bf16.msra.mxu0 %v939
  %1093 = vmatprep.subr.bf16.mxu0 0
  %1094 = vmatpush1.bf16.msra.mxu0 %v940
  %1095 = vmatprep.subr.bf16.mxu0 0
  %1096 = vmatpush1.bf16.msra.mxu0 %v941
  %1097 = vmatprep.subr.bf16.mxu0 0
  %1098 = vmatpush1.bf16.msra.mxu0 %v942
  %1099 = vmatprep.subr.bf16.mxu0 0
  %1100 = vmatpush1.bf16.msra.mxu0 %v943
  %1101 = vmatprep.subr.bf16.mxu0 0
  %1102 = vmatpush1.bf16.msra.mxu0 %v944
  %1103 = vmatprep.subr.bf16.mxu0 0
  %1104 = vmatpush1.bf16.msra.mxu0 %v945
  %1105 = vmatprep.subr.bf16.mxu0 0
  %1106 = vmatpush1.bf16.msra.mxu0 %v946
  %1107 = vmatprep.mubr.bf16.mxu0 %v500
  %1108 = vmatmul.mubr.bf16.gmra.mrb[0].mxu0 %v499
  %v1109 = vpop.f32.mrb[0].mxu0
  %v1110 = vadd.f32 0.0, %v1109
  %v1111 = vpop.f32.mrb[0].mxu0
  %v1112 = vpop.f32.mrb[0].mxu0
  %v1113 = vadd.f32 0.0, %v1112
  %v1114 = vpop.f32.mrb[0].mxu0
  %1115 = vmatprep.mubr.bf16.mxu0 %v509
  %1116 = vmatmul.mubr.bf16.gmra.mrb[0].mxu0 %v508
  %v1117 = vpop.f32.mrb[0].mxu0
  %v1118 = vadd.f32 0.0, %v1117
  %v1119 = vpop.f32.mrb[0].mxu0
  %v1120 = vpop.f32.mrb[0].mxu0
  %v1121 = vadd.f32 0.0, %v1120
  %v1122 = vpop.f32.mrb[0].mxu0
  %1123 = vmatprep.mubr.bf16.mxu0 %v518
  %1124 = vmatmul.mubr.bf16.gmra.mrb[0].mxu0 %v517
  %v1125 = vpop.f32.mrb[0].mxu0
  %v1126 = vadd.f32 0.0, %v1125
  %v1127 = vpop.f32.mrb[0].mxu0
  %v1128 = vpop.f32.mrb[0].mxu0
  %v1129 = vadd.f32 0.0, %v1128
  %v1130 = vpop.f32.mrb[0].mxu0
  %1131 = vmatprep.mubr.bf16.mxu0 %v527
  %1132 = vmatmul.mubr.bf16.gmra.mrb[0].mxu0 %v526
  %v1133 = vpop.f32.mrb[0].mxu0
  %v1134 = vadd.f32 0.0, %v1133
  %v1135 = vpop.f32.mrb[0].mxu0
  %v1136 = vpop.f32.mrb[0].mxu0
  %v1137 = vadd.f32 0.0, %v1136
  %v1138 = vpop.f32.mrb[0].mxu0
  %1139 = vmatprep.mubr.bf16.mxu0 %v536
  %1140 = vmatmul.mubr.bf16.gmra.mrb[0].mxu0 %v535
  %v1141 = vpop.f32.mrb[0].mxu0
  %v1142 = vadd.f32 0.0, %v1141
  %v1143 = vpop.f32.mrb[0].mxu0
  %v1144 = vpop.f32.mrb[0].mxu0
  %v1145 = vadd.f32 0.0, %v1144
  %v1146 = vpop.f32.mrb[0].mxu0
  %1147 = vmatprep.mubr.bf16.mxu0 %v545
  %1148 = vmatmul.mubr.bf16.gmra.mrb[0].mxu0 %v544
  %v1149 = vpop.f32.mrb[0].mxu0
  %v1150 = vadd.f32 0.0, %v1149
  %v1151 = vpop.f32.mrb[0].mxu0
  %v1152 = vpop.f32.mrb[0].mxu0
  %v1153 = vadd.f32 0.0, %v1152
  %v1154 = vpop.f32.mrb[0].mxu0
  %1155 = vmatprep.mubr.bf16.mxu0 %v554
  %1156 = vmatmul.mubr.bf16.gmra.mrb[0].mxu0 %v553
  %v1157 = vpop.f32.mrb[0].mxu0
  %v1158 = vadd.f32 0.0, %v1157
  %v1159 = vpop.f32.mrb[0].mxu0
  %v1160 = vpop.f32.mrb[0].mxu0
  %v1161 = vadd.f32 0.0, %v1160
  %v1162 = vpop.f32.mrb[0].mxu0
  %1163 = vmatprep.mubr.bf16.mxu0 %v563
  %1164 = vmatmul.mubr.bf16.gmra.mrb[0].mxu0 %v562
  %v1165 = vpop.f32.mrb[0].mxu0
  %v1166 = vadd.f32 0.0, %v1165
  %v1167 = vpop.f32.mrb[0].mxu0
  %v1168 = vpop.f32.mrb[0].mxu0
  %v1169 = vadd.f32 0.0, %v1168
  %v1170 = vpop.f32.mrb[0].mxu0
  %1171 = vdwg.mxu0
  %1172 = vmatprep.subr.bf16.mxu0 0
  %1173 = vmatpush1.bf16.msra.mxu0 %v947
  %1174 = vmatprep.subr.bf16.mxu0 0
  %1175 = vmatpush1.bf16.msra.mxu0 %v948
  %1176 = vmatprep.subr.bf16.mxu0 0
  %1177 = vmatpush1.bf16.msra.mxu0 %v949
  %1178 = vmatprep.subr.bf16.mxu0 0
  %1179 = vmatpush1.bf16.msra.mxu0 %v950
  %1180 = vmatprep.subr.bf16.mxu0 0
  %1181 = vmatpush1.bf16.msra.mxu0 %v951
  %1182 = vmatprep.subr.bf16.mxu0 0
  %1183 = vmatpush1.bf16.msra.mxu0 %v952
  %1184 = vmatprep.subr.bf16.mxu0 0
  %1185 = vmatpush1.bf16.msra.mxu0 %v953
  %1186 = vmatprep.subr.bf16.mxu0 0
  %1187 = vmatpush1.bf16.msra.mxu0 %v954
  %1188 = vmatprep.subr.bf16.mxu0 0
  %1189 = vmatpush1.bf16.msra.mxu0 %v955
  %1190 = vmatprep.subr.bf16.mxu0 0
  %1191 = vmatpush1.bf16.msra.mxu0 %v956
  %1192 = vmatprep.subr.bf16.mxu0 0
  %1193 = vmatpush1.bf16.msra.mxu0 %v957
  %1194 = vmatprep.subr.bf16.mxu0 0
  %1195 = vmatpush1.bf16.msra.mxu0 %v958
  %1196 = vmatprep.subr.bf16.mxu0 0
  %1197 = vmatpush1.bf16.msra.mxu0 %v959
  %1198 = vmatprep.subr.bf16.mxu0 0
  %1199 = vmatpush1.bf16.msra.mxu0 %v960
  %1200 = vmatprep.subr.bf16.mxu0 0
  %1201 = vmatpush1.bf16.msra.mxu0 %v961
  %1202 = vmatprep.subr.bf16.mxu0 0
  %1203 = vmatpush1.bf16.msra.mxu0 %v962
  %1204 = vmatprep.mubr.bf16.mxu0 %v502
  %1205 = vmatmul.mubr.bf16.gmra.mrb[0].mxu0 %v501
  %v1206 = vpop.f32.mrb[0].mxu0
  %v1207 = vadd.f32 %v1110, %v1206
  %v1208 = vpop.f32.mrb[0].mxu0
  %v1209 = vpop.f32.mrb[0].mxu0
  %v1210 = vadd.f32 %v1113, %v1209
  %v1211 = vpop.f32.mrb[0].mxu0
  %1212 = vmatprep.mubr.bf16.mxu0 %v511
  %1213 = vmatmul.mubr.bf16.gmra.mrb[0].mxu0 %v510
  %v1214 = vpop.f32.mrb[0].mxu0
  %v1215 = vadd.f32 %v1118, %v1214
  %v1216 = vpop.f32.mrb[0].mxu0
  %v1217 = vpop.f32.mrb[0].mxu0
  %v1218 = vadd.f32 %v1121, %v1217
  %v1219 = vpop.f32.mrb[0].mxu0
  %1220 = vmatprep.mubr.bf16.mxu0 %v520
  %1221 = vmatmul.mubr.bf16.gmra.mrb[0].mxu0 %v519
  %v1222 = vpop.f32.mrb[0].mxu0
  %v1223 = vadd.f32 %v1126, %v1222
  %v1224 = vpop.f32.mrb[0].mxu0
  %v1225 = vpop.f32.mrb[0].mxu0
  %v1226 = vadd.f32 %v1129, %v1225
  %v1227 = vpop.f32.mrb[0].mxu0
  %1228 = vmatprep.mubr.bf16.mxu0 %v529
  %1229 = vmatmul.mubr.bf16.gmra.mrb[0].mxu0 %v528
  %v1230 = vpop.f32.mrb[0].mxu0
  %v1231 = vadd.f32 %v1134, %v1230
  %v1232 = vpop.f32.mrb[0].mxu0
  %v1233 = vpop.f32.mrb[0].mxu0
  %v1234 = vadd.f32 %v1137, %v1233
  %v1235 = vpop.f32.mrb[0].mxu0
  %1236 = vmatprep.mubr.bf16.mxu0 %v538
  %1237 = vmatmul.mubr.bf16.gmra.mrb[0].mxu0 %v537
  %v1238 = vpop.f32.mrb[0].mxu0
  %v1239 = vadd.f32 %v1142, %v1238
  %v1240 = vpop.f32.mrb[0].mxu0
  %v1241 = vpop.f32.mrb[0].mxu0
  %v1242 = vadd.f32 %v1145, %v1241
  %v1243 = vpop.f32.mrb[0].mxu0
  %1244 = vmatprep.mubr.bf16.mxu0 %v547
  %1245 = vmatmul.mubr.bf16.gmra.mrb[0].mxu0 %v546
  %v1246 = vpop.f32.mrb[0].mxu0
  %v1247 = vadd.f32 %v1150, %v1246
  %v1248 = vpop.f32.mrb[0].mxu0
  %v1249 = vpop.f32.mrb[0].mxu0
  %v1250 = vadd.f32 %v1153, %v1249
  %v1251 = vpop.f32.mrb[0].mxu0
  %1252 = vmatprep.mubr.bf16.mxu0 %v556
  %1253 = vmatmul.mubr.bf16.gmra.mrb[0].mxu0 %v555
  %v1254 = vpop.f32.mrb[0].mxu0
  %v1255 = vadd.f32 %v1158, %v1254
  %v1256 = vpop.f32.mrb[0].mxu0
  %v1257 = vpop.f32.mrb[0].mxu0
  %v1258 = vadd.f32 %v1161, %v1257
  %v1259 = vpop.f32.mrb[0].mxu0
  %1260 = vmatprep.mubr.bf16.mxu0 %v565
  %1261 = vmatmul.mubr.bf16.gmra.mrb[0].mxu0 %v564
  %v1262 = vpop.f32.mrb[0].mxu0
  %v1263 = vadd.f32 %v1166, %v1262
  %v1264 = vpop.f32.mrb[0].mxu0
  %v1265 = vpop.f32.mrb[0].mxu0
  %v1266 = vadd.f32 %v1169, %v1265
  %v1267 = vpop.f32.mrb[0].mxu0
  %1268 = vdwg.mxu0
  %1269 = vmatprep.subr.bf16.mxu0 0
  %1270 = vmatpush1.bf16.msra.mxu0 %v963
  %1271 = vmatprep.subr.bf16.mxu0 0
  %1272 = vmatpush1.bf16.msra.mxu0 %v964
  %1273 = vmatprep.subr.bf16.mxu0 0
  %1274 = vmatpush1.bf16.msra.mxu0 %v965
  %1275 = vmatprep.subr.bf16.mxu0 0
  %1276 = vmatpush1.bf16.msra.mxu0 %v966
  %1277 = vmatprep.subr.bf16.mxu0 0
  %1278 = vmatpush1.bf16.msra.mxu0 %v967
  %1279 = vmatprep.subr.bf16.mxu0 0
  %1280 = vmatpush1.bf16.msra.mxu0 %v968
  %1281 = vmatprep.subr.bf16.mxu0 0
  %1282 = vmatpush1.bf16.msra.mxu0 %v969
  %1283 = vmatprep.subr.bf16.mxu0 0
  %1284 = vmatpush1.bf16.msra.mxu0 %v970
  %1285 = vmatprep.subr.bf16.mxu0 0
  %1286 = vmatpush1.bf16.msra.mxu0 %v971
  %1287 = vmatprep.subr.bf16.mxu0 0
  %1288 = vmatpush1.bf16.msra.mxu0 %v972
  %1289 = vmatprep.subr.bf16.mxu0 0
  %1290 = vmatpush1.bf16.msra.mxu0 %v973
  %1291 = vmatprep.subr.bf16.mxu0 0
  %1292 = vmatpush1.bf16.msra.mxu0 %v974
  %1293 = vmatprep.subr.bf16.mxu0 0
  %1294 = vmatpush1.bf16.msra.mxu0 %v975
  %1295 = vmatprep.subr.bf16.mxu0 0
  %1296 = vmatpush1.bf16.msra.mxu0 %v976
  %1297 = vmatprep.subr.bf16.mxu0 0
  %1298 = vmatpush1.bf16.msra.mxu0 %v977
  %1299 = vmatprep.subr.bf16.mxu0 0
  %1300 = vmatpush1.bf16.msra.mxu0 %v978
  %1301 = vmatprep.mubr.bf16.mxu0 %v504
  %1302 = vmatmul.mubr.bf16.gmra.mrb[0].mxu0 %v503
  %v1303 = vpop.f32.mrb[0].mxu0
  %v1304 = vadd.f32 %v1207, %v1303
  %v1305 = vpop.f32.mrb[0].mxu0
  %v1306 = vpop.f32.mrb[0].mxu0
  %v1307 = vadd.f32 %v1210, %v1306
  %v1308 = vpop.f32.mrb[0].mxu0
  %1309 = vmatprep.mubr.bf16.mxu0 %v513
  %1310 = vmatmul.mubr.bf16.gmra.mrb[0].mxu0 %v512
  %v1311 = vpop.f32.mrb[0].mxu0
  %v1312 = vadd.f32 %v1215, %v1311
  %v1313 = vpop.f32.mrb[0].mxu0
  %v1314 = vpop.f32.mrb[0].mxu0
  %v1315 = vadd.f32 %v1218, %v1314
  %v1316 = vpop.f32.mrb[0].mxu0
  %1317 = vmatprep.mubr.bf16.mxu0 %v522
  %1318 = vmatmul.mubr.bf16.gmra.mrb[0].mxu0 %v521
  %v1319 = vpop.f32.mrb[0].mxu0
  %v1320 = vadd.f32 %v1223, %v1319
  %v1321 = vpop.f32.mrb[0].mxu0
  %v1322 = vpop.f32.mrb[0].mxu0
  %v1323 = vadd.f32 %v1226, %v1322
  %v1324 = vpop.f32.mrb[0].mxu0
  %1325 = vmatprep.mubr.bf16.mxu0 %v531
  %1326 = vmatmul.mubr.bf16.gmra.mrb[0].mxu0 %v530
  %v1327 = vpop.f32.mrb[0].mxu0
  %v1328 = vadd.f32 %v1231, %v1327
  %v1329 = vpop.f32.mrb[0].mxu0
  %v1330 = vpop.f32.mrb[0].mxu0
  %v1331 = vadd.f32 %v1234, %v1330
  %v1332 = vpop.f32.mrb[0].mxu0
  %1333 = vmatprep.mubr.bf16.mxu0 %v540
  %1334 = vmatmul.mubr.bf16.gmra.mrb[0].mxu0 %v539
  %v1335 = vpop.f32.mrb[0].mxu0
  %v1336 = vadd.f32 %v1239, %v1335
  %v1337 = vpop.f32.mrb[0].mxu0
  %v1338 = vpop.f32.mrb[0].mxu0
  %v1339 = vadd.f32 %v1242, %v1338
  %v1340 = vpop.f32.mrb[0].mxu0
  %1341 = vmatprep.mubr.bf16.mxu0 %v549
  %1342 = vmatmul.mubr.bf16.gmra.mrb[0].mxu0 %v548
  %v1343 = vpop.f32.mrb[0].mxu0
  %v1344 = vadd.f32 %v1247, %v1343
  %v1345 = vpop.f32.mrb[0].mxu0
  %v1346 = vpop.f32.mrb[0].mxu0
  %v1347 = vadd.f32 %v1250, %v1346
  %v1348 = vpop.f32.mrb[0].mxu0
  %1349 = vmatprep.mubr.bf16.mxu0 %v558
  %1350 = vmatmul.mubr.bf16.gmra.mrb[0].mxu0 %v557
  %v1351 = vpop.f32.mrb[0].mxu0
  %v1352 = vadd.f32 %v1255, %v1351
  %v1353 = vpop.f32.mrb[0].mxu0
  %v1354 = vpop.f32.mrb[0].mxu0
  %v1355 = vadd.f32 %v1258, %v1354
  %v1356 = vpop.f32.mrb[0].mxu0
  %1357 = vmatprep.mubr.bf16.mxu0 %v567
  %1358 = vmatmul.mubr.bf16.gmra.mrb[0].mxu0 %v566
  %v1359 = vpop.f32.mrb[0].mxu0
  %v1360 = vadd.f32 %v1263, %v1359
  %v1361 = vpop.f32.mrb[0].mxu0
  %v1362 = vpop.f32.mrb[0].mxu0
  %v1363 = vadd.f32 %v1266, %v1362
  %v1364 = vpop.f32.mrb[0].mxu0
  %1365 = vdwg.mxu0
  %1366 = vmatprep.subr.bf16.mxu0 0
  %1367 = vmatpush1.bf16.msra.mxu0 %v979
  %1368 = vmatprep.subr.bf16.mxu0 0
  %1369 = vmatpush1.bf16.msra.mxu0 %v980
  %1370 = vmatprep.subr.bf16.mxu0 0
  %1371 = vmatpush1.bf16.msra.mxu0 %v981
  %1372 = vmatprep.subr.bf16.mxu0 0
  %1373 = vmatpush1.bf16.msra.mxu0 %v982
  %1374 = vmatprep.subr.bf16.mxu0 0
  %1375 = vmatpush1.bf16.msra.mxu0 %v983
  %1376 = vmatprep.subr.bf16.mxu0 0
  %1377 = vmatpush1.bf16.msra.mxu0 %v984
  %1378 = vmatprep.subr.bf16.mxu0 0
  %1379 = vmatpush1.bf16.msra.mxu0 %v985
  %1380 = vmatprep.subr.bf16.mxu0 0
  %1381 = vmatpush1.bf16.msra.mxu0 %v986
  %1382 = vmatprep.subr.bf16.mxu0 0
  %1383 = vmatpush1.bf16.msra.mxu0 %v987
  %1384 = vmatprep.subr.bf16.mxu0 0
  %1385 = vmatpush1.bf16.msra.mxu0 %v988
  %1386 = vmatprep.subr.bf16.mxu0 0
  %1387 = vmatpush1.bf16.msra.mxu0 %v989
  %1388 = vmatprep.subr.bf16.mxu0 0
  %1389 = vmatpush1.bf16.msra.mxu0 %v990
  %1390 = vmatprep.subr.bf16.mxu0 0
  %1391 = vmatpush1.bf16.msra.mxu0 %v991
  %1392 = vmatprep.subr.bf16.mxu0 0
  %1393 = vmatpush1.bf16.msra.mxu0 %v992
  %1394 = vmatprep.subr.bf16.mxu0 0
  %1395 = vmatpush1.bf16.msra.mxu0 %v993
  %1396 = vmatprep.subr.bf16.mxu0 0
  %1397 = vmatpush1.bf16.msra.mxu0 %v994
  %1398 = vmatprep.mubr.bf16.mxu0 %v506
  %1399 = vmatmul.mubr.bf16.gmra.mrb[0].mxu0 %v505
  %v1400 = vpop.f32.mrb[0].mxu0
  %v1401 = vadd.f32 %v1304, %v1400
  %v1402 = vpop.f32.mrb[0].mxu0
  %v1403 = vpop.f32.mrb[0].mxu0
  %v1404 = vadd.f32 %v1307, %v1403
  %v1405 = vpop.f32.mrb[0].mxu0
  %1406 = vmatprep.mubr.bf16.mxu0 %v515
  %1407 = vmatmul.mubr.bf16.gmra.mrb[0].mxu0 %v514
  %v1408 = vpop.f32.mrb[0].mxu0
  %v1409 = vadd.f32 %v1312, %v1408
  %v1410 = vpop.f32.mrb[0].mxu0
  %v1411 = vpop.f32.mrb[0].mxu0
  %v1412 = vadd.f32 %v1315, %v1411
  %v1413 = vpop.f32.mrb[0].mxu0
  %1414 = vmatprep.mubr.bf16.mxu0 %v524
  %1415 = vmatmul.mubr.bf16.gmra.mrb[0].mxu0 %v523
  %v1416 = vpop.f32.mrb[0].mxu0
  %v1417 = vadd.f32 %v1320, %v1416
  %v1418 = vpop.f32.mrb[0].mxu0
  %v1419 = vpop.f32.mrb[0].mxu0
  %v1420 = vadd.f32 %v1323, %v1419
  %v1421 = vpop.f32.mrb[0].mxu0
  %1422 = vmatprep.mubr.bf16.mxu0 %v533
  %1423 = vmatmul.mubr.bf16.gmra.mrb[0].mxu0 %v532
  %v1424 = vpop.f32.mrb[0].mxu0
  %v1425 = vadd.f32 %v1328, %v1424
  %v1426 = vpop.f32.mrb[0].mxu0
  %v1427 = vpop.f32.mrb[0].mxu0
  %v1428 = vadd.f32 %v1331, %v1427
  %v1429 = vpop.f32.mrb[0].mxu0
  %1430 = vmatprep.mubr.bf16.mxu0 %v542
  %1431 = vmatmul.mubr.bf16.gmra.mrb[0].mxu0 %v541
  %v1432 = vpop.f32.mrb[0].mxu0
  %v1433 = vadd.f32 %v1336, %v1432
  %v1434 = vpop.f32.mrb[0].mxu0
  %v1435 = vpop.f32.mrb[0].mxu0
  %v1436 = vadd.f32 %v1339, %v1435
  %v1437 = vpop.f32.mrb[0].mxu0
  %1438 = vmatprep.mubr.bf16.mxu0 %v551
  %1439 = vmatmul.mubr.bf16.gmra.mrb[0].mxu0 %v550
  %v1440 = vpop.f32.mrb[0].mxu0
  %v1441 = vadd.f32 %v1344, %v1440
  %v1442 = vpop.f32.mrb[0].mxu0
  %v1443 = vpop.f32.mrb[0].mxu0
  %v1444 = vadd.f32 %v1347, %v1443
  %v1445 = vpop.f32.mrb[0].mxu0
  %1446 = vmatprep.mubr.bf16.mxu0 %v560
  %1447 = vmatmul.mubr.bf16.gmra.mrb[0].mxu0 %v559
  %v1448 = vpop.f32.mrb[0].mxu0
  %v1449 = vadd.f32 %v1352, %v1448
  %v1450 = vpop.f32.mrb[0].mxu0
  %v1451 = vpop.f32.mrb[0].mxu0
  %v1452 = vadd.f32 %v1355, %v1451
  %v1453 = vpop.f32.mrb[0].mxu0
  %1454 = vmatprep.mubr.bf16.mxu0 %v569
  %1455 = vmatmul.mubr.bf16.gmra.mrb[0].mxu0 %v568
  %v1456 = vpop.f32.mrb[0].mxu0
  %v1457 = vadd.f32 %v1360, %v1456
  %v1458 = vpop.f32.mrb[0].mxu0
  %v1459 = vpop.f32.mrb[0].mxu0
  %v1460 = vadd.f32 %v1363, %v1459
  %v1461 = vpop.f32.mrb[0].mxu0
  %1462 = vdwg.mxu0
  %1463 = vmatprep.subr.bf16.mxu0 0
  %1464 = vmatpush1.bf16.msra.mxu0 %v995
  %1465 = vmatprep.subr.bf16.mxu0 0
  %1466 = vmatpush1.bf16.msra.mxu0 %v996
  %1467 = vmatprep.subr.bf16.mxu0 0
  %1468 = vmatpush1.bf16.msra.mxu0 %v997
  %1469 = vmatprep.subr.bf16.mxu0 0
  %1470 = vmatpush1.bf16.msra.mxu0 %v998
  %1471 = vmatprep.subr.bf16.mxu0 0
  %1472 = vmatpush1.bf16.msra.mxu0 %v999
  %1473 = vmatprep.subr.bf16.mxu0 0
  %1474 = vmatpush1.bf16.msra.mxu0 %v1000
  %1475 = vmatprep.subr.bf16.mxu0 0
  %1476 = vmatpush1.bf16.msra.mxu0 %v1001
  %1477 = vmatprep.subr.bf16.mxu0 0
  %1478 = vmatpush1.bf16.msra.mxu0 %v1002
  %1479 = vmatprep.subr.bf16.mxu0 0
  %1480 = vmatpush1.bf16.msra.mxu0 0
  %1481 = vmatprep.subr.bf16.mxu0 0
  %1482 = vmatpush1.bf16.msra.mxu0 0
  %1483 = vmatprep.subr.bf16.mxu0 0
  %1484 = vmatpush1.bf16.msra.mxu0 0
  %1485 = vmatprep.subr.bf16.mxu0 0
  %1486 = vmatpush1.bf16.msra.mxu0 0
  %1487 = vmatprep.subr.bf16.mxu0 0
  %1488 = vmatpush1.bf16.msra.mxu0 0
  %1489 = vmatprep.subr.bf16.mxu0 0
  %1490 = vmatpush1.bf16.msra.mxu0 0
  %1491 = vmatprep.subr.bf16.mxu0 0
  %1492 = vmatpush1.bf16.msra.mxu0 0
  %1493 = vmatprep.subr.bf16.mxu0 0
  %1494 = vmatpush1.bf16.msra.mxu0 0
  %1495 = vmatprep.mubr.bf16.mxu0 0
  %1496 = vmatmul.mubr.bf16.gmra.mrb[0].mxu0 %v507
  %v1497 = vpop.f32.mrb[0].mxu0
  %v1498 = vadd.f32 %v1401, %v1497
  %v1499 = vpop.f32.mrb[0].mxu0
  %v1500 = vpop.f32.mrb[0].mxu0
  %v1501 = vadd.f32 %v1404, %v1500
  %v1502 = vpop.f32.mrb[0].mxu0
  %1503 = vmatprep.mubr.bf16.mxu0 0
  %1504 = vmatmul.mubr.bf16.gmra.mrb[0].mxu0 %v516
  %v1505 = vpop.f32.mrb[0].mxu0
  %v1506 = vadd.f32 %v1409, %v1505
  %v1507 = vpop.f32.mrb[0].mxu0
  %v1508 = vpop.f32.mrb[0].mxu0
  %v1509 = vadd.f32 %v1412, %v1508
  %v1510 = vpop.f32.mrb[0].mxu0
  %1511 = vmatprep.mubr.bf16.mxu0 0
  %1512 = vmatmul.mubr.bf16.gmra.mrb[0].mxu0 %v525
  %v1513 = vpop.f32.mrb[0].mxu0
  %v1514 = vadd.f32 %v1417, %v1513
  %v1515 = vpop.f32.mrb[0].mxu0
  %v1516 = vpop.f32.mrb[0].mxu0
  %v1517 = vadd.f32 %v1420, %v1516
  %v1518 = vpop.f32.mrb[0].mxu0
  %1519 = vmatprep.mubr.bf16.mxu0 0
  %1520 = vmatmul.mubr.bf16.gmra.mrb[0].mxu0 %v534
  %v1521 = vpop.f32.mrb[0].mxu0
  %v1522 = vadd.f32 %v1425, %v1521
  %v1523 = vpop.f32.mrb[0].mxu0
  %v1524 = vpop.f32.mrb[0].mxu0
  %v1525 = vadd.f32 %v1428, %v1524
  %v1526 = vpop.f32.mrb[0].mxu0
  %1527 = vmatprep.mubr.bf16.mxu0 0
  %1528 = vmatmul.mubr.bf16.gmra.mrb[0].mxu0 %v543
  %v1529 = vpop.f32.mrb[0].mxu0
  %v1530 = vadd.f32 %v1433, %v1529
  %v1531 = vpop.f32.mrb[0].mxu0
  %v1532 = vpop.f32.mrb[0].mxu0
  %v1533 = vadd.f32 %v1436, %v1532
  %v1534 = vpop.f32.mrb[0].mxu0
  %1535 = vmatprep.mubr.bf16.mxu0 0
  %1536 = vmatmul.mubr.bf16.gmra.mrb[0].mxu0 %v552
  %v1537 = vpop.f32.mrb[0].mxu0
  %v1538 = vadd.f32 %v1441, %v1537
  %v1539 = vpop.f32.mrb[0].mxu0
  %v1540 = vpop.f32.mrb[0].mxu0
  %v1541 = vadd.f32 %v1444, %v1540
  %v1542 = vpop.f32.mrb[0].mxu0
  %1543 = vmatprep.mubr.bf16.mxu0 0
  %1544 = vmatmul.mubr.bf16.gmra.mrb[0].mxu0 %v561
  %v1545 = vpop.f32.mrb[0].mxu0
  %v1546 = vadd.f32 %v1449, %v1545
  %v1547 = vpop.f32.mrb[0].mxu0
  %v1548 = vpop.f32.mrb[0].mxu0
  %v1549 = vadd.f32 %v1452, %v1548
  %v1550 = vpop.f32.mrb[0].mxu0
  %1551 = vmatprep.mubr.bf16.mxu0 0
  %1552 = vmatmul.mubr.bf16.gmra.mrb[0].mxu0 %v570
  %v1553 = vpop.f32.mrb[0].mxu0
  %v1554 = vadd.f32 %v1457, %v1553
  %v1555 = vpop.f32.mrb[0].mxu0
  %v1556 = vpop.f32.mrb[0].mxu0
  %v1557 = vadd.f32 %v1460, %v1556
  %v1558 = vpop.f32.mrb[0].mxu0
  %1559 = vdwg.mxu0
  %v1560 = vadd.f32 %v35, %v1498
  %v1561 = vadd.f32 %v36, %v1501
  %v1562 = vadd.f32 %v37, %v1506
  %v1563 = vadd.f32 %v38, %v1509
  %v1564 = vadd.f32 %v39, %v1514
  %v1565 = vadd.f32 %v40, %v1517
  %v1566 = vadd.f32 %v41, %v1522
  %v1567 = vadd.f32 %v42, %v1525
  %v1568 = vadd.f32 %v43, %v1530
  %v1569 = vadd.f32 %v44, %v1533
  %v1570 = vadd.f32 %v45, %v1538
  %v1571 = vadd.f32 %v46, %v1541
  %v1572 = vadd.f32 %v47, %v1546
  %v1573 = vadd.f32 %v48, %v1549
  %v1574 = vadd.f32 %v49, %v1554
  %v1575 = vadd.f32 %v50, %v1557
  %1576 = vst [vmem:[%s3] sm:$0xff] %v1560
  %1577 = vst [vmem:[%s3 + $0x8] sm:$0xff] %v1561
  %1578 = vst [vmem:[%s3 + $0x10] sm:$0xff] %v1562
  %1579 = vst [vmem:[%s3 + $0x18] sm:$0xff] %v1563
  %1580 = vst [vmem:[%s3 + $0x20] sm:$0xff] %v1564
  %1581 = vst [vmem:[%s3 + $0x28] sm:$0xff] %v1565
  %1582 = vst [vmem:[%s3 + $0x30] sm:$0xff] %v1566
  %1583 = vst [vmem:[%s3 + $0x38] sm:$0xff] %v1567
  %1584 = vst [vmem:[%s3 + $0x40] sm:$0xff] %v1568
  %1585 = vst [vmem:[%s3 + $0x48] sm:$0xff] %v1569
  %1586 = vst [vmem:[%s3 + $0x50] sm:$0xff] %v1570
  %1587 = vst [vmem:[%s3 + $0x58] sm:$0xff] %v1571
  %1588 = vst [vmem:[%s3 + $0x60] sm:$0xff] %v1572
  %1589 = vst [vmem:[%s3 + $0x68] sm:$0xff] %v1573
  %1590 = vst [vmem:[%s3 + $0x70] sm:$0xff] %v1574
  %1591 = vst [vmem:[%s3 + $0x78] sm:$0xff] %v1575
  // Predicated region
  $region18: #{embedding_node_classifier_forward.5} parent=0 // pred_check
    %p1592 = pneg %p15
  $region19: #{embedding_node_classifier_forward.5} parent=0 // pred_check_branch
    %1594 = sbr.rel (%p1592) target = $region21
  $region20: #{embedding_node_classifier_forward.5} parent=0 // pred_region
    %v1595 = vld [vmem:[%s3] sm:$0xff]
    %v1596 = vld [vmem:[%s3 + $0x8] sm:$0xff]
    %v1597 = vld [vmem:[%s3 + $0x10] sm:$0xff]
    %v1598 = vld [vmem:[%s3 + $0x18] sm:$0xff]
    %v1599 = vld [vmem:[%s3 + $0x20] sm:$0xff]
    %v1600 = vld [vmem:[%s3 + $0x28] sm:$0xff]
    %v1601 = vld [vmem:[%s3 + $0x30] sm:$0xff]
    %v1602 = vld [vmem:[%s3 + $0x38] sm:$0xff]
    %v1603 = vld [vmem:[%s3 + $0x40] sm:$0xff]
    %v1604 = vld [vmem:[%s3 + $0x48] sm:$0xff]
    %v1605 = vld [vmem:[%s3 + $0x50] sm:$0xff]
    %v1606 = vld [vmem:[%s3 + $0x58] sm:$0xff]
    %v1607 = vld [vmem:[%s3 + $0x60] sm:$0xff]
    %v1608 = vld [vmem:[%s3 + $0x68] sm:$0xff]
    %v1609 = vld [vmem:[%s3 + $0x70] sm:$0xff]
    %v1610 = vld [vmem:[%s3 + $0x78] sm:$0xff]
    %v1611 = vld [vmem:[%s2] sm:$0x1]
    %v1613 = vlaneseq
    %v1614 = vshrl.u32 %v1613, 7
    %v1615 = vsub.s32 0, %v1614
    %v1616 = vrot.slane %v1611, %v1615
    %v1618 = vadd.f32 %v1595, %v1616
    %v1619 = vadd.f32 %v1596, %v1616
    %v1620 = vadd.f32 %v1597, %v1616
    %v1621 = vadd.f32 %v1598, %v1616
    %v1622 = vadd.f32 %v1599, %v1616
    %v1623 = vadd.f32 %v1600, %v1616
    %v1624 = vadd.f32 %v1601, %v1616
    %v1625 = vadd.f32 %v1602, %v1616
    %v1626 = vadd.f32 %v1603, %v1616
    %v1627 = vadd.f32 %v1604, %v1616
    %v1628 = vadd.f32 %v1605, %v1616
    %v1629 = vadd.f32 %v1606, %v1616
    %v1630 = vadd.f32 %v1607, %v1616
    %v1631 = vadd.f32 %v1608, %v1616
    %v1632 = vadd.f32 %v1609, %v1616
    %v1633 = vadd.f32 %v1610, %v1616
    %v1634 = vmax.f32 %v1618, 0.0
    %v1635 = vmax.f32 %v1619, 0.0
    %v1636 = vmax.f32 %v1620, 0.0
    %v1637 = vmax.f32 %v1621, 0.0
    %v1638 = vmax.f32 %v1622, 0.0
    %v1639 = vmax.f32 %v1623, 0.0
    %v1640 = vmax.f32 %v1624, 0.0
    %v1641 = vmax.f32 %v1625, 0.0
    %v1642 = vmax.f32 %v1626, 0.0
    %v1643 = vmax.f32 %v1627, 0.0
    %v1644 = vmax.f32 %v1628, 0.0
    %v1645 = vmax.f32 %v1629, 0.0
    %v1646 = vmax.f32 %v1630, 0.0
    %v1647 = vmax.f32 %v1631, 0.0
    %v1648 = vmax.f32 %v1632, 0.0
    %v1649 = vmax.f32 %v1633, 0.0
    %1650 = vst [vmem:[%s3] sm:$0xff] %v1634
    %1651 = vst [vmem:[%s3 + $0x8] sm:$0xff] %v1635
    %1652 = vst [vmem:[%s3 + $0x10] sm:$0xff] %v1636
    %1653 = vst [vmem:[%s3 + $0x18] sm:$0xff] %v1637
    %1654 = vst [vmem:[%s3 + $0x20] sm:$0xff] %v1638
    %1655 = vst [vmem:[%s3 + $0x28] sm:$0xff] %v1639
    %1656 = vst [vmem:[%s3 + $0x30] sm:$0xff] %v1640
    %1657 = vst [vmem:[%s3 + $0x38] sm:$0xff] %v1641
    %1658 = vst [vmem:[%s3 + $0x40] sm:$0xff] %v1642
    %1659 = vst [vmem:[%s3 + $0x48] sm:$0xff] %v1643
    %1660 = vst [vmem:[%s3 + $0x50] sm:$0xff] %v1644
    %1661 = vst [vmem:[%s3 + $0x58] sm:$0xff] %v1645
    %1662 = vst [vmem:[%s3 + $0x60] sm:$0xff] %v1646
    %1663 = vst [vmem:[%s3 + $0x68] sm:$0xff] %v1647
    %1664 = vst [vmem:[%s3 + $0x70] sm:$0xff] %v1648
    %1665 = vst [vmem:[%s3 + $0x78] sm:$0xff] %v1649
  $region21: #{embedding_node_classifier_forward.5} parent=0 // pred_fallthru
    _
  // Predicated region
  $region22: #{embedding_node_classifier_forward.5} parent=0 // pred_check
    _
  $region23: #{embedding_node_classifier_forward.5} parent=0 // pred_check_branch
    %1667 = sbr.rel (0) target = $region25
  $region24: #{embedding_node_classifier_forward.5} parent=0 // pred_region
    _
  $region25: #{embedding_node_classifier_forward.5} parent=0 // pred_fallthru
    _
  // Predicated region
  $region26: #{embedding_node_classifier_forward.5} parent=0 // pred_check
    _
  $region27: #{embedding_node_classifier_forward.5} parent=0 // pred_check_branch
    %1669 = sbr.rel (0) target = $region29
  $region28: #{embedding_node_classifier_forward.5} parent=0 // pred_region
    _
  $region29: #{embedding_node_classifier_forward.5} parent=0 // pred_fallthru
    _

// kernel: embedding_node_classifier_forward.7
$region0: #{embedding_node_classifier_forward.7}
  #allocation0 [shape = 'u32[]', space=smem, size = 0x4, offset = 0x4, fixed_abs, tag = 'smem constant byte address 0x4 - core index']
  #allocation1 [shape = 'u32[144,128]{1,0:T(1,128)}', space=vmem, size = 0x12000, scoped, tag = 'internal scratch']
  %s0 = inlined_call_operand.vmem [shape: bf16[128,1152], index: 0, kind: input, shape index: {}]
  %s1 = inlined_call_operand.vmem [shape: bf16[1152,128], index: 1, kind: input, shape index: {}]
  %s2 = inlined_call_operand.vmem [shape: f32[1,128], index: 2, kind: input, shape index: {}]
  %s3 = inlined_call_operand.vmem [shape: f32[128,128], index: 3, kind: output, shape index: {}]
  %s4 = sld [smem:[#allocation0]]
  $region30: #{embedding_node_classifier_forward.7} parent=0
    _
  %s6 = ssub.s32 1, %s4
  %s7 = scalar_select 0, %s6, %s4
  // Predicated region
  $region2: #{embedding_node_classifier_forward.7} parent=0 // pred_check
    _
  $region3: #{embedding_node_classifier_forward.7} parent=0 // pred_check_branch
    %9 = sbr.rel (0) target = $region5
  $region4: #{embedding_node_classifier_forward.7} parent=0 // pred_region
    _
  $region5: #{embedding_node_classifier_forward.7} parent=0 // pred_fallthru
    _
  // Predicated region
  $region6: #{embedding_node_classifier_forward.7} parent=0 // pred_check
    _
  $region7: #{embedding_node_classifier_forward.7} parent=0 // pred_check_branch
    %11 = sbr.rel (0) target = $region9
  $region8: #{embedding_node_classifier_forward.7} parent=0 // pred_region
    _
  $region9: #{embedding_node_classifier_forward.7} parent=0 // pred_fallthru
    _
  // Predicated region
  $region10: #{embedding_node_classifier_forward.7} parent=0 // pred_check
    _
  $region11: #{embedding_node_classifier_forward.7} parent=0 // pred_check_branch
    %13 = sbr.rel (0) target = $region13
  $region12: #{embedding_node_classifier_forward.7} parent=0 // pred_region
    _
  $region13: #{embedding_node_classifier_forward.7} parent=0 // pred_fallthru
    _
  %p15 = scmp.eq.s32.totalorder 0, 0
  // Predicated region
  $region14: #{embedding_node_classifier_forward.7} parent=0 // pred_check
    %p16 = pneg %p15
  $region15: #{embedding_node_classifier_forward.7} parent=0 // pred_check_branch
    %18 = sbr.rel (%p16) target = $region17
  $region16: #{embedding_node_classifier_forward.7} parent=0 // pred_region
    %19 = vst [vmem:[%s3] sm:$0xff] 0.0
    %20 = vst [vmem:[%s3 + $0x8] sm:$0xff] 0.0
    %21 = vst [vmem:[%s3 + $0x10] sm:$0xff] 0.0
    %22 = vst [vmem:[%s3 + $0x18] sm:$0xff] 0.0
    %23 = vst [vmem:[%s3 + $0x20] sm:$0xff] 0.0
    %24 = vst [vmem:[%s3 + $0x28] sm:$0xff] 0.0
    %25 = vst [vmem:[%s3 + $0x30] sm:$0xff] 0.0
    %26 = vst [vmem:[%s3 + $0x38] sm:$0xff] 0.0
    %27 = vst [vmem:[%s3 + $0x40] sm:$0xff] 0.0
    %28 = vst [vmem:[%s3 + $0x48] sm:$0xff] 0.0
    %29 = vst [vmem:[%s3 + $0x50] sm:$0xff] 0.0
    %30 = vst [vmem:[%s3 + $0x58] sm:$0xff] 0.0
    %31 = vst [vmem:[%s3 + $0x60] sm:$0xff] 0.0
    %32 = vst [vmem:[%s3 + $0x68] sm:$0xff] 0.0
    %33 = vst [vmem:[%s3 + $0x70] sm:$0xff] 0.0
    %34 = vst [vmem:[%s3 + $0x78] sm:$0xff] 0.0
  $region17: #{embedding_node_classifier_forward.7} parent=0 // pred_fallthru
    _
  %v35 = vld [vmem:[%s3] sm:$0xff]
  %v36 = vld [vmem:[%s3 + $0x8] sm:$0xff]
  %v37 = vld [vmem:[%s3 + $0x10] sm:$0xff]
  %v38 = vld [vmem:[%s3 + $0x18] sm:$0xff]
  %v39 = vld [vmem:[%s3 + $0x20] sm:$0xff]
  %v40 = vld [vmem:[%s3 + $0x28] sm:$0xff]
  %v41 = vld [vmem:[%s3 + $0x30] sm:$0xff]
  %v42 = vld [vmem:[%s3 + $0x38] sm:$0xff]
  %v43 = vld [vmem:[%s3 + $0x40] sm:$0xff]
  %v44 = vld [vmem:[%s3 + $0x48] sm:$0xff]
  %v45 = vld [vmem:[%s3 + $0x50] sm:$0xff]
  %v46 = vld [vmem:[%s3 + $0x58] sm:$0xff]
  %v47 = vld [vmem:[%s3 + $0x60] sm:$0xff]
  %v48 = vld [vmem:[%s3 + $0x68] sm:$0xff]
  %v49 = vld [vmem:[%s3 + $0x70] sm:$0xff]
  %v50 = vld [vmem:[%s3 + $0x78] sm:$0xff]
  %v51 = vld [vmem:[%s0] sm:$0xff]
  %v52 = vld [vmem:[%s0 + $0x8] sm:$0xff]
  %v53 = vld [vmem:[%s0 + $0x10] sm:$0xff]
  %v54 = vld [vmem:[%s0 + $0x18] sm:$0xff]
  %v55 = vld [vmem:[%s0 + $0x20] sm:$0xf]
  %v56 = vld [vmem:[%s0 + $0x24] sm:$0xff]
  %v57 = vld [vmem:[%s0 + $0x2c] sm:$0xff]
  %v58 = vld [vmem:[%s0 + $0x34] sm:$0xff]
  %v59 = vld [vmem:[%s0 + $0x3c] sm:$0xff]
  %v60 = vld [vmem:[%s0 + $0x44] sm:$0xf]
  %v61 = vld [vmem:[%s0 + $0x48] sm:$0xff]
  %v62 = vld [vmem:[%s0 + $0x50] sm:$0xff]
  %v63 = vld [vmem:[%s0 + $0x58] sm:$0xff]
  %v64 = vld [vmem:[%s0 + $0x60] sm:$0xff]
  %v65 = vld [vmem:[%s0 + $0x68] sm:$0xf]
  %v66 = vld [vmem:[%s0 + $0x6c] sm:$0xff]
  %v67 = vld [vmem:[%s0 + $0x74] sm:$0xff]
  %v68 = vld [vmem:[%s0 + $0x7c] sm:$0xff]
  %v69 = vld [vmem:[%s0 + $0x84] sm:$0xff]
  %v70 = vld [vmem:[%s0 + $0x8c] sm:$0xf]
  %v71 = vld [vmem:[%s0 + $0x90] sm:$0xff]
  %v72 = vld [vmem:[%s0 + $0x98] sm:$0xff]
  %v73 = vld [vmem:[%s0 + $0xa0] sm:$0xff]
  %v74 = vld [vmem:[%s0 + $0xa8] sm:$0xff]
  %v75 = vld [vmem:[%s0 + $0xb0] sm:$0xf]
  %v76 = vld [vmem:[%s0 + $0xb4] sm:$0xff]
  %v77 = vld [vmem:[%s0 + $0xbc] sm:$0xff]
  %v78 = vld [vmem:[%s0 + $0xc4] sm:$0xff]
  %v79 = vld [vmem:[%s0 + $0xcc] sm:$0xff]
  %v80 = vld [vmem:[%s0 + $0xd4] sm:$0xf]
  %v81 = vld [vmem:[%s0 + $0xd8] sm:$0xff]
  %v82 = vld [vmem:[%s0 + $0xe0] sm:$0xff]
  %v83 = vld [vmem:[%s0 + $0xe8] sm:$0xff]
  %v84 = vld [vmem:[%s0 + $0xf0] sm:$0xff]
  %v85 = vld [vmem:[%s0 + $0xf8] sm:$0xf]
  %v86 = vld [vmem:[%s0 + $0xfc] sm:$0xff]
  %v87 = vld [vmem:[%s0 + $0x104] sm:$0xff]
  %v88 = vld [vmem:[%s0 + $0x10c] sm:$0xff]
  %v89 = vld [vmem:[%s0 + $0x114] sm:$0xff]
  %v90 = vld [vmem:[%s0 + $0x11c] sm:$0xf]
  %v91 = vld [vmem:[%s0 + $0x120] sm:$0xff]
  %v92 = vld [vmem:[%s0 + $0x128] sm:$0xff]
  %v93 = vld [vmem:[%s0 + $0x130] sm:$0xff]
  %v94 = vld [vmem:[%s0 + $0x138] sm:$0xff]
  %v95 = vld [vmem:[%s0 + $0x140] sm:$0xf]
  %v96 = vld [vmem:[%s0 + $0x144] sm:$0xff]
  %v97 = vld [vmem:[%s0 + $0x14c] sm:$0xff]
  %v98 = vld [vmem:[%s0 + $0x154] sm:$0xff]
  %v99 = vld [vmem:[%s0 + $0x15c] sm:$0xff]
  %v100 = vld [vmem:[%s0 + $0x164] sm:$0xf]
  %v101 = vld [vmem:[%s0 + $0x168] sm:$0xff]
  %v102 = vld [vmem:[%s0 + $0x170] sm:$0xff]
  %v103 = vld [vmem:[%s0 + $0x178] sm:$0xff]
  %v104 = vld [vmem:[%s0 + $0x180] sm:$0xff]
  %v105 = vld [vmem:[%s0 + $0x188] sm:$0xf]
  %v106 = vld [vmem:[%s0 + $0x18c] sm:$0xff]
  %v107 = vld [vmem:[%s0 + $0x194] sm:$0xff]
  %v108 = vld [vmem:[%s0 + $0x19c] sm:$0xff]
  %v109 = vld [vmem:[%s0 + $0x1a4] sm:$0xff]
  %v110 = vld [vmem:[%s0 + $0x1ac] sm:$0xf]
  %v111 = vld [vmem:[%s0 + $0x1b0] sm:$0xff]
  %v112 = vld [vmem:[%s0 + $0x1b8] sm:$0xff]
  %v113 = vld [vmem:[%s0 + $0x1c0] sm:$0xff]
  %v114 = vld [vmem:[%s0 + $0x1c8] sm:$0xff]
  %v115 = vld [vmem:[%s0 + $0x1d0] sm:$0xf]
  %v116 = vld [vmem:[%s0 + $0x1d4] sm:$0xff]
  %v117 = vld [vmem:[%s0 + $0x1dc] sm:$0xff]
  %v118 = vld [vmem:[%s0 + $0x1e4] sm:$0xff]
  %v119 = vld [vmem:[%s0 + $0x1ec] sm:$0xff]
  %v120 = vld [vmem:[%s0 + $0x1f4] sm:$0xf]
  %v121 = vld [vmem:[%s0 + $0x1f8] sm:$0xff]
  %v122 = vld [vmem:[%s0 + $0x200] sm:$0xff]
  %v123 = vld [vmem:[%s0 + $0x208] sm:$0xff]
  %v124 = vld [vmem:[%s0 + $0x210] sm:$0xff]
  %v125 = vld [vmem:[%s0 + $0x218] sm:$0xf]
  %v126 = vld [vmem:[%s0 + $0x21c] sm:$0xff]
  %v127 = vld [vmem:[%s0 + $0x224] sm:$0xff]
  %v128 = vld [vmem:[%s0 + $0x22c] sm:$0xff]
  %v129 = vld [vmem:[%s0 + $0x234] sm:$0xff]
  %v130 = vld [vmem:[%s0 + $0x23c] sm:$0xf]
  %v131 = vld [vmem:[%s1] sm:$0xf]
  %v132 = vld [vmem:[%s1 + $0x4] sm:$0xf]
  %v133 = vld [vmem:[%s1 + $0x8] sm:$0xf]
  %v134 = vld [vmem:[%s1 + $0xc] sm:$0xf]
  %v135 = vld [vmem:[%s1 + $0x10] sm:$0xf]
  %v136 = vld [vmem:[%s1 + $0x14] sm:$0xf]
  %v137 = vld [vmem:[%s1 + $0x18] sm:$0xf]
  %v138 = vld [vmem:[%s1 + $0x1c] sm:$0xf]
  %v139 = vld [vmem:[%s1 + $0x20] sm:$0xf]
  %v140 = vld [vmem:[%s1 + $0x24] sm:$0xf]
  %v141 = vld [vmem:[%s1 + $0x28] sm:$0xf]
  %v142 = vld [vmem:[%s1 + $0x2c] sm:$0xf]
  %v143 = vld [vmem:[%s1 + $0x30] sm:$0xf]
  %v144 = vld [vmem:[%s1 + $0x34] sm:$0xf]
  %v145 = vld [vmem:[%s1 + $0x38] sm:$0xf]
  %v146 = vld [vmem:[%s1 + $0x3c] sm:$0xf]
  %v147 = vld [vmem:[%s1 + $0x40] sm:$0xf]
  %v148 = vld [vmem:[%s1 + $0x44] sm:$0xf]
  %v149 = vld [vmem:[%s1 + $0x48] sm:$0xf]
  %v150 = vld [vmem:[%s1 + $0x4c] sm:$0xf]
  %v151 = vld [vmem:[%s1 + $0x50] sm:$0xf]
  %v152 = vld [vmem:[%s1 + $0x54] sm:$0xf]
  %v153 = vld [vmem:[%s1 + $0x58] sm:$0xf]
  %v154 = vld [vmem:[%s1 + $0x5c] sm:$0xf]
  %v155 = vld [vmem:[%s1 + $0x60] sm:$0xf]
  %v156 = vld [vmem:[%s1 + $0x64] sm:$0xf]
  %v157 = vld [vmem:[%s1 + $0x68] sm:$0xf]
  %v158 = vld [vmem:[%s1 + $0x6c] sm:$0xf]
  %v159 = vld [vmem:[%s1 + $0x70] sm:$0xf]
  %v160 = vld [vmem:[%s1 + $0x74] sm:$0xf]
  %v161 = vld [vmem:[%s1 + $0x78] sm:$0xf]
  %v162 = vld [vmem:[%s1 + $0x7c] sm:$0xf]
  %v163 = vld [vmem:[%s1 + $0x80] sm:$0xf]
  %v164 = vld [vmem:[%s1 + $0x84] sm:$0xf]
  %v165 = vld [vmem:[%s1 + $0x88] sm:$0xf]
  %v166 = vld [vmem:[%s1 + $0x8c] sm:$0xf]
  %v167 = vld [vmem:[%s1 + $0x90] sm:$0xf]
  %v168 = vld [vmem:[%s1 + $0x94] sm:$0xf]
  %v169 = vld [vmem:[%s1 + $0x98] sm:$0xf]
  %v170 = vld [vmem:[%s1 + $0x9c] sm:$0xf]
  %v171 = vld [vmem:[%s1 + $0xa0] sm:$0xf]
  %v172 = vld [vmem:[%s1 + $0xa4] sm:$0xf]
  %v173 = vld [vmem:[%s1 + $0xa8] sm:$0xf]
  %v174 = vld [vmem:[%s1 + $0xac] sm:$0xf]
  %v175 = vld [vmem:[%s1 + $0xb0] sm:$0xf]
  %v176 = vld [vmem:[%s1 + $0xb4] sm:$0xf]
  %v177 = vld [vmem:[%s1 + $0xb8] sm:$0xf]
  %v178 = vld [vmem:[%s1 + $0xbc] sm:$0xf]
  %v179 = vld [vmem:[%s1 + $0xc0] sm:$0xf]
  %v180 = vld [vmem:[%s1 + $0xc4] sm:$0xf]
  %v181 = vld [vmem:[%s1 + $0xc8] sm:$0xf]
  %v182 = vld [vmem:[%s1 + $0xcc] sm:$0xf]
  %v183 = vld [vmem:[%s1 + $0xd0] sm:$0xf]
  %v184 = vld [vmem:[%s1 + $0xd4] sm:$0xf]
  %v185 = vld [vmem:[%s1 + $0xd8] sm:$0xf]
  %v186 = vld [vmem:[%s1 + $0xdc] sm:$0xf]
  %v187 = vld [vmem:[%s1 + $0xe0] sm:$0xf]
  %v188 = vld [vmem:[%s1 + $0xe4] sm:$0xf]
  %v189 = vld [vmem:[%s1 + $0xe8] sm:$0xf]
  %v190 = vld [vmem:[%s1 + $0xec] sm:$0xf]
  %v191 = vld [vmem:[%s1 + $0xf0] sm:$0xf]
  %v192 = vld [vmem:[%s1 + $0xf4] sm:$0xf]
  %v193 = vld [vmem:[%s1 + $0xf8] sm:$0xf]
  %v194 = vld [vmem:[%s1 + $0xfc] sm:$0xf]
  %v195 = vld [vmem:[%s1 + $0x100] sm:$0xf]
  %v196 = vld [vmem:[%s1 + $0x104] sm:$0xf]
  %v197 = vld [vmem:[%s1 + $0x108] sm:$0xf]
  %v198 = vld [vmem:[%s1 + $0x10c] sm:$0xf]
  %v199 = vld [vmem:[%s1 + $0x110] sm:$0xf]
  %v200 = vld [vmem:[%s1 + $0x114] sm:$0xf]
  %v201 = vld [vmem:[%s1 + $0x118] sm:$0xf]
  %v202 = vld [vmem:[%s1 + $0x11c] sm:$0xf]
  %v203 = vld [vmem:[%s1 + $0x120] sm:$0xf]
  %v204 = vld [vmem:[%s1 + $0x124] sm:$0xf]
  %v205 = vld [vmem:[%s1 + $0x128] sm:$0xf]
  %v206 = vld [vmem:[%s1 + $0x12c] sm:$0xf]
  %v207 = vld [vmem:[%s1 + $0x130] sm:$0xf]
  %v208 = vld [vmem:[%s1 + $0x134] sm:$0xf]
  %v209 = vld [vmem:[%s1 + $0x138] sm:$0xf]
  %v210 = vld [vmem:[%s1 + $0x13c] sm:$0xf]
  %v211 = vld [vmem:[%s1 + $0x140] sm:$0xf]
  %v212 = vld [vmem:[%s1 + $0x144] sm:$0xf]
  %v213 = vld [vmem:[%s1 + $0x148] sm:$0xf]
  %v214 = vld [vmem:[%s1 + $0x14c] sm:$0xf]
  %v215 = vld [vmem:[%s1 + $0x150] sm:$0xf]
  %v216 = vld [vmem:[%s1 + $0x154] sm:$0xf]
  %v217 = vld [vmem:[%s1 + $0x158] sm:$0xf]
  %v218 = vld [vmem:[%s1 + $0x15c] sm:$0xf]
  %v219 = vld [vmem:[%s1 + $0x160] sm:$0xf]
  %v220 = vld [vmem:[%s1 + $0x164] sm:$0xf]
  %v221 = vld [vmem:[%s1 + $0x168] sm:$0xf]
  %v222 = vld [vmem:[%s1 + $0x16c] sm:$0xf]
  %v223 = vld [vmem:[%s1 + $0x170] sm:$0xf]
  %v224 = vld [vmem:[%s1 + $0x174] sm:$0xf]
  %v225 = vld [vmem:[%s1 + $0x178] sm:$0xf]
  %v226 = vld [vmem:[%s1 + $0x17c] sm:$0xf]
  %v227 = vld [vmem:[%s1 + $0x180] sm:$0xf]
  %v228 = vld [vmem:[%s1 + $0x184] sm:$0xf]
  %v229 = vld [vmem:[%s1 + $0x188] sm:$0xf]
  %v230 = vld [vmem:[%s1 + $0x18c] sm:$0xf]
  %v231 = vld [vmem:[%s1 + $0x190] sm:$0xf]
  %v232 = vld [vmem:[%s1 + $0x194] sm:$0xf]
  %v233 = vld [vmem:[%s1 + $0x198] sm:$0xf]
  %v234 = vld [vmem:[%s1 + $0x19c] sm:$0xf]
  %v235 = vld [vmem:[%s1 + $0x1a0] sm:$0xf]
  %v236 = vld [vmem:[%s1 + $0x1a4] sm:$0xf]
  %v237 = vld [vmem:[%s1 + $0x1a8] sm:$0xf]
  %v238 = vld [vmem:[%s1 + $0x1ac] sm:$0xf]
  %v239 = vld [vmem:[%s1 + $0x1b0] sm:$0xf]
  %v240 = vld [vmem:[%s1 + $0x1b4] sm:$0xf]
  %v241 = vld [vmem:[%s1 + $0x1b8] sm:$0xf]
  %v242 = vld [vmem:[%s1 + $0x1bc] sm:$0xf]
  %v243 = vld [vmem:[%s1 + $0x1c0] sm:$0xf]
  %v244 = vld [vmem:[%s1 + $0x1c4] sm:$0xf]
  %v245 = vld [vmem:[%s1 + $0x1c8] sm:$0xf]
  %v246 = vld [vmem:[%s1 + $0x1cc] sm:$0xf]
  %v247 = vld [vmem:[%s1 + $0x1d0] sm:$0xf]
  %v248 = vld [vmem:[%s1 + $0x1d4] sm:$0xf]
  %v249 = vld [vmem:[%s1 + $0x1d8] sm:$0xf]
  %v250 = vld [vmem:[%s1 + $0x1dc] sm:$0xf]
  %v251 = vld [vmem:[%s1 + $0x1e0] sm:$0xf]
  %v252 = vld [vmem:[%s1 + $0x1e4] sm:$0xf]
  %v253 = vld [vmem:[%s1 + $0x1e8] sm:$0xf]
  %v254 = vld [vmem:[%s1 + $0x1ec] sm:$0xf]
  %v255 = vld [vmem:[%s1 + $0x1f0] sm:$0xf]
  %v256 = vld [vmem:[%s1 + $0x1f4] sm:$0xf]
  %v257 = vld [vmem:[%s1 + $0x1f8] sm:$0xf]
  %v258 = vld [vmem:[%s1 + $0x1fc] sm:$0xf]
  %v259 = vld [vmem:[%s1 + $0x200] sm:$0xf]
  %v260 = vld [vmem:[%s1 + $0x204] sm:$0xf]
  %v261 = vld [vmem:[%s1 + $0x208] sm:$0xf]
  %v262 = vld [vmem:[%s1 + $0x20c] sm:$0xf]
  %v263 = vld [vmem:[%s1 + $0x210] sm:$0xf]
  %v264 = vld [vmem:[%s1 + $0x214] sm:$0xf]
  %v265 = vld [vmem:[%s1 + $0x218] sm:$0xf]
  %v266 = vld [vmem:[%s1 + $0x21c] sm:$0xf]
  %v267 = vld [vmem:[%s1 + $0x220] sm:$0xf]
  %v268 = vld [vmem:[%s1 + $0x224] sm:$0xf]
  %v269 = vld [vmem:[%s1 + $0x228] sm:$0xf]
  %v270 = vld [vmem:[%s1 + $0x22c] sm:$0xf]
  %v271 = vld [vmem:[%s1 + $0x230] sm:$0xf]
  %v272 = vld [vmem:[%s1 + $0x234] sm:$0xf]
  %v273 = vld [vmem:[%s1 + $0x238] sm:$0xf]
  %v274 = vld [vmem:[%s1 + $0x23c] sm:$0xf]
  %v355 = vunpack.c.l.b16 %v51
  %v356 = vunpack.c.h.b16 %v51
  %v357 = vunpack.c.l.b16 %v52
  %v358 = vunpack.c.h.b16 %v52
  %v359 = vunpack.c.l.b16 %v53
  %v360 = vunpack.c.h.b16 %v53
  %v361 = vunpack.c.l.b16 %v54
  %v362 = vunpack.c.h.b16 %v54
  %v363 = vunpack.c.l.b16 %v55
  %v364 = vunpack.c.l.b16 %v56
  %v365 = vunpack.c.h.b16 %v56
  %v366 = vunpack.c.l.b16 %v57
  %v367 = vunpack.c.h.b16 %v57
  %v368 = vunpack.c.l.b16 %v58
  %v369 = vunpack.c.h.b16 %v58
  %v370 = vunpack.c.l.b16 %v59
  %v371 = vunpack.c.h.b16 %v59
  %v372 = vunpack.c.l.b16 %v60
  %v373 = vunpack.c.l.b16 %v61
  %v374 = vunpack.c.h.b16 %v61
  %v375 = vunpack.c.l.b16 %v62
  %v376 = vunpack.c.h.b16 %v62
  %v377 = vunpack.c.l.b16 %v63
  %v378 = vunpack.c.h.b16 %v63
  %v379 = vunpack.c.l.b16 %v64
  %v380 = vunpack.c.h.b16 %v64
  %v381 = vunpack.c.l.b16 %v65
  %v382 = vunpack.c.l.b16 %v66
  %v383 = vunpack.c.h.b16 %v66
  %v384 = vunpack.c.l.b16 %v67
  %v385 = vunpack.c.h.b16 %v67
  %v386 = vunpack.c.l.b16 %v68
  %v387 = vunpack.c.h.b16 %v68
  %v388 = vunpack.c.l.b16 %v69
  %v389 = vunpack.c.h.b16 %v69
  %v390 = vunpack.c.l.b16 %v70
  %v391 = vunpack.c.l.b16 %v71
  %v392 = vunpack.c.h.b16 %v71
  %v393 = vunpack.c.l.b16 %v72
  %v394 = vunpack.c.h.b16 %v72
  %v395 = vunpack.c.l.b16 %v73
  %v396 = vunpack.c.h.b16 %v73
  %v397 = vunpack.c.l.b16 %v74
  %v398 = vunpack.c.h.b16 %v74
  %v399 = vunpack.c.l.b16 %v75
  %v400 = vunpack.c.l.b16 %v76
  %v401 = vunpack.c.h.b16 %v76
  %v402 = vunpack.c.l.b16 %v77
  %v403 = vunpack.c.h.b16 %v77
  %v404 = vunpack.c.l.b16 %v78
  %v405 = vunpack.c.h.b16 %v78
  %v406 = vunpack.c.l.b16 %v79
  %v407 = vunpack.c.h.b16 %v79
  %v408 = vunpack.c.l.b16 %v80
  %v409 = vunpack.c.l.b16 %v81
  %v410 = vunpack.c.h.b16 %v81
  %v411 = vunpack.c.l.b16 %v82
  %v412 = vunpack.c.h.b16 %v82
  %v413 = vunpack.c.l.b16 %v83
  %v414 = vunpack.c.h.b16 %v83
  %v415 = vunpack.c.l.b16 %v84
  %v416 = vunpack.c.h.b16 %v84
  %v417 = vunpack.c.l.b16 %v85
  %v418 = vunpack.c.l.b16 %v86
  %v419 = vunpack.c.h.b16 %v86
  %v420 = vunpack.c.l.b16 %v87
  %v421 = vunpack.c.h.b16 %v87
  %v422 = vunpack.c.l.b16 %v88
  %v423 = vunpack.c.h.b16 %v88
  %v424 = vunpack.c.l.b16 %v89
  %v425 = vunpack.c.h.b16 %v89
  %v426 = vunpack.c.l.b16 %v90
  %v427 = vunpack.c.l.b16 %v91
  %v428 = vunpack.c.h.b16 %v91
  %v429 = vunpack.c.l.b16 %v92
  %v430 = vunpack.c.h.b16 %v92
  %v431 = vunpack.c.l.b16 %v93
  %v432 = vunpack.c.h.b16 %v93
  %v433 = vunpack.c.l.b16 %v94
  %v434 = vunpack.c.h.b16 %v94
  %v435 = vunpack.c.l.b16 %v95
  %v436 = vunpack.c.l.b16 %v96
  %v437 = vunpack.c.h.b16 %v96
  %v438 = vunpack.c.l.b16 %v97
  %v439 = vunpack.c.h.b16 %v97
  %v440 = vunpack.c.l.b16 %v98
  %v441 = vunpack.c.h.b16 %v98
  %v442 = vunpack.c.l.b16 %v99
  %v443 = vunpack.c.h.b16 %v99
  %v444 = vunpack.c.l.b16 %v100
  %v445 = vunpack.c.l.b16 %v101
  %v446 = vunpack.c.h.b16 %v101
  %v447 = vunpack.c.l.b16 %v102
  %v448 = vunpack.c.h.b16 %v102
  %v449 = vunpack.c.l.b16 %v103
  %v450 = vunpack.c.h.b16 %v103
  %v451 = vunpack.c.l.b16 %v104
  %v452 = vunpack.c.h.b16 %v104
  %v453 = vunpack.c.l.b16 %v105
  %v454 = vunpack.c.l.b16 %v106
  %v455 = vunpack.c.h.b16 %v106
  %v456 = vunpack.c.l.b16 %v107
  %v457 = vunpack.c.h.b16 %v107
  %v458 = vunpack.c.l.b16 %v108
  %v459 = vunpack.c.h.b16 %v108
  %v460 = vunpack.c.l.b16 %v109
  %v461 = vunpack.c.h.b16 %v109
  %v462 = vunpack.c.l.b16 %v110
  %v463 = vunpack.c.l.b16 %v111
  %v464 = vunpack.c.h.b16 %v111
  %v465 = vunpack.c.l.b16 %v112
  %v466 = vunpack.c.h.b16 %v112
  %v467 = vunpack.c.l.b16 %v113
  %v468 = vunpack.c.h.b16 %v113
  %v469 = vunpack.c.l.b16 %v114
  %v470 = vunpack.c.h.b16 %v114
  %v471 = vunpack.c.l.b16 %v115
  %v472 = vunpack.c.l.b16 %v116
  %v473 = vunpack.c.h.b16 %v116
  %v474 = vunpack.c.l.b16 %v117
  %v475 = vunpack.c.h.b16 %v117
  %v476 = vunpack.c.l.b16 %v118
  %v477 = vunpack.c.h.b16 %v118
  %v478 = vunpack.c.l.b16 %v119
  %v479 = vunpack.c.h.b16 %v119
  %v480 = vunpack.c.l.b16 %v120
  %v481 = vunpack.c.l.b16 %v121
  %v482 = vunpack.c.h.b16 %v121
  %v483 = vunpack.c.l.b16 %v122
  %v484 = vunpack.c.h.b16 %v122
  %v485 = vunpack.c.l.b16 %v123
  %v486 = vunpack.c.h.b16 %v123
  %v487 = vunpack.c.l.b16 %v124
  %v488 = vunpack.c.h.b16 %v124
  %v489 = vunpack.c.l.b16 %v125
  %v490 = vunpack.c.l.b16 %v126
  %v491 = vunpack.c.h.b16 %v126
  %v492 = vunpack.c.l.b16 %v127
  %v493 = vunpack.c.h.b16 %v127
  %v494 = vunpack.c.l.b16 %v128
  %v495 = vunpack.c.h.b16 %v128
  %v496 = vunpack.c.l.b16 %v129
  %v497 = vunpack.c.h.b16 %v129
  %v498 = vunpack.c.l.b16 %v130
  %v499 = vpack.c.b16 %v364, %v355
  %v500 = vpack.c.b16 %v365, %v356
  %v501 = vpack.c.b16 %v366, %v357
  %v502 = vpack.c.b16 %v367, %v358
  %v503 = vpack.c.b16 %v368, %v359
  %v504 = vpack.c.b16 %v369, %v360
  %v505 = vpack.c.b16 %v370, %v361
  %v506 = vpack.c.b16 %v371, %v362
  %v507 = vpack.c.b16 %v372, %v363
  %v508 = vpack.c.b16 %v382, %v373
  %v509 = vpack.c.b16 %v383, %v374
  %v510 = vpack.c.b16 %v384, %v375
  %v511 = vpack.c.b16 %v385, %v376
  %v512 = vpack.c.b16 %v386, %v377
  %v513 = vpack.c.b16 %v387, %v378
  %v514 = vpack.c.b16 %v388, %v379
  %v515 = vpack.c.b16 %v389, %v380
  %v516 = vpack.c.b16 %v390, %v381
  %v517 = vpack.c.b16 %v400, %v391
  %v518 = vpack.c.b16 %v401, %v392
  %v519 = vpack.c.b16 %v402, %v393
  %v520 = vpack.c.b16 %v403, %v394
  %v521 = vpack.c.b16 %v404, %v395
  %v522 = vpack.c.b16 %v405, %v396
  %v523 = vpack.c.b16 %v406, %v397
  %v524 = vpack.c.b16 %v407, %v398
  %v525 = vpack.c.b16 %v408, %v399
  %v526 = vpack.c.b16 %v418, %v409
  %v527 = vpack.c.b16 %v419, %v410
  %v528 = vpack.c.b16 %v420, %v411
  %v529 = vpack.c.b16 %v421, %v412
  %v530 = vpack.c.b16 %v422, %v413
  %v531 = vpack.c.b16 %v423, %v414
  %v532 = vpack.c.b16 %v424, %v415
  %v533 = vpack.c.b16 %v425, %v416
  %v534 = vpack.c.b16 %v426, %v417
  %v535 = vpack.c.b16 %v436, %v427
  %v536 = vpack.c.b16 %v437, %v428
  %v537 = vpack.c.b16 %v438, %v429
  %v538 = vpack.c.b16 %v439, %v430
  %v539 = vpack.c.b16 %v440, %v431
  %v540 = vpack.c.b16 %v441, %v432
  %v541 = vpack.c.b16 %v442, %v433
  %v542 = vpack.c.b16 %v443, %v434
  %v543 = vpack.c.b16 %v444, %v435
  %v544 = vpack.c.b16 %v454, %v445
  %v545 = vpack.c.b16 %v455, %v446
  %v546 = vpack.c.b16 %v456, %v447
  %v547 = vpack.c.b16 %v457, %v448
  %v548 = vpack.c.b16 %v458, %v449
  %v549 = vpack.c.b16 %v459, %v450
  %v550 = vpack.c.b16 %v460, %v451
  %v551 = vpack.c.b16 %v461, %v452
  %v552 = vpack.c.b16 %v462, %v453
  %v553 = vpack.c.b16 %v472, %v463
  %v554 = vpack.c.b16 %v473, %v464
  %v555 = vpack.c.b16 %v474, %v465
  %v556 = vpack.c.b16 %v475, %v466
  %v557 = vpack.c.b16 %v476, %v467
  %v558 = vpack.c.b16 %v477, %v468
  %v559 = vpack.c.b16 %v478, %v469
  %v560 = vpack.c.b16 %v479, %v470
  %v561 = vpack.c.b16 %v480, %v471
  %v562 = vpack.c.b16 %v490, %v481
  %v563 = vpack.c.b16 %v491, %v482
  %v564 = vpack.c.b16 %v492, %v483
  %v565 = vpack.c.b16 %v493, %v484
  %v566 = vpack.c.b16 %v494, %v485
  %v567 = vpack.c.b16 %v495, %v486
  %v568 = vpack.c.b16 %v496, %v487
  %v569 = vpack.c.b16 %v497, %v488
  %v570 = vpack.c.b16 %v498, %v489
  %v787 = vunpack.c.l.b16 %v131
  %v788 = vunpack.c.l.b16 %v132
  %v789 = vunpack.c.l.b16 %v133
  %v790 = vunpack.c.l.b16 %v134
  %v791 = vunpack.c.l.b16 %v135
  %v792 = vunpack.c.l.b16 %v136
  %v793 = vunpack.c.l.b16 %v137
  %v794 = vunpack.c.l.b16 %v138
  %v795 = vunpack.c.l.b16 %v139
  %v796 = vunpack.c.l.b16 %v140
  %v797 = vunpack.c.l.b16 %v141
  %v798 = vunpack.c.l.b16 %v142
  %v799 = vunpack.c.l.b16 %v143
  %v800 = vunpack.c.l.b16 %v144
  %v801 = vunpack.c.l.b16 %v145
  %v802 = vunpack.c.l.b16 %v146
  %v803 = vunpack.c.l.b16 %v147
  %v804 = vunpack.c.l.b16 %v148
  %v805 = vunpack.c.l.b16 %v149
  %v806 = vunpack.c.l.b16 %v150
  %v807 = vunpack.c.l.b16 %v151
  %v808 = vunpack.c.l.b16 %v152
  %v809 = vunpack.c.l.b16 %v153
  %v810 = vunpack.c.l.b16 %v154
  %v811 = vunpack.c.l.b16 %v155
  %v812 = vunpack.c.l.b16 %v156
  %v813 = vunpack.c.l.b16 %v157
  %v814 = vunpack.c.l.b16 %v158
  %v815 = vunpack.c.l.b16 %v159
  %v816 = vunpack.c.l.b16 %v160
  %v817 = vunpack.c.l.b16 %v161
  %v818 = vunpack.c.l.b16 %v162
  %v819 = vunpack.c.l.b16 %v163
  %v820 = vunpack.c.l.b16 %v164
  %v821 = vunpack.c.l.b16 %v165
  %v822 = vunpack.c.l.b16 %v166
  %v823 = vunpack.c.l.b16 %v167
  %v824 = vunpack.c.l.b16 %v168
  %v825 = vunpack.c.l.b16 %v169
  %v826 = vunpack.c.l.b16 %v170
  %v827 = vunpack.c.l.b16 %v171
  %v828 = vunpack.c.l.b16 %v172
  %v829 = vunpack.c.l.b16 %v173
  %v830 = vunpack.c.l.b16 %v174
  %v831 = vunpack.c.l.b16 %v175
  %v832 = vunpack.c.l.b16 %v176
  %v833 = vunpack.c.l.b16 %v177
  %v834 = vunpack.c.l.b16 %v178
  %v835 = vunpack.c.l.b16 %v179
  %v836 = vunpack.c.l.b16 %v180
  %v837 = vunpack.c.l.b16 %v181
  %v838 = vunpack.c.l.b16 %v182
  %v839 = vunpack.c.l.b16 %v183
  %v840 = vunpack.c.l.b16 %v184
  %v841 = vunpack.c.l.b16 %v185
  %v842 = vunpack.c.l.b16 %v186
  %v843 = vunpack.c.l.b16 %v187
  %v844 = vunpack.c.l.b16 %v188
  %v845 = vunpack.c.l.b16 %v189
  %v846 = vunpack.c.l.b16 %v190
  %v847 = vunpack.c.l.b16 %v191
  %v848 = vunpack.c.l.b16 %v192
  %v849 = vunpack.c.l.b16 %v193
  %v850 = vunpack.c.l.b16 %v194
  %v851 = vunpack.c.l.b16 %v195
  %v852 = vunpack.c.l.b16 %v196
  %v853 = vunpack.c.l.b16 %v197
  %v854 = vunpack.c.l.b16 %v198
  %v855 = vunpack.c.l.b16 %v199
  %v856 = vunpack.c.l.b16 %v200
  %v857 = vunpack.c.l.b16 %v201
  %v858 = vunpack.c.l.b16 %v202
  %v859 = vunpack.c.l.b16 %v203
  %v860 = vunpack.c.l.b16 %v204
  %v861 = vunpack.c.l.b16 %v205
  %v862 = vunpack.c.l.b16 %v206
  %v863 = vunpack.c.l.b16 %v207
  %v864 = vunpack.c.l.b16 %v208
  %v865 = vunpack.c.l.b16 %v209
  %v866 = vunpack.c.l.b16 %v210
  %v867 = vunpack.c.l.b16 %v211
  %v868 = vunpack.c.l.b16 %v212
  %v869 = vunpack.c.l.b16 %v213
  %v870 = vunpack.c.l.b16 %v214
  %v871 = vunpack.c.l.b16 %v215
  %v872 = vunpack.c.l.b16 %v216
  %v873 = vunpack.c.l.b16 %v217
  %v874 = vunpack.c.l.b16 %v218
  %v875 = vunpack.c.l.b16 %v219
  %v876 = vunpack.c.l.b16 %v220
  %v877 = vunpack.c.l.b16 %v221
  %v878 = vunpack.c.l.b16 %v222
  %v879 = vunpack.c.l.b16 %v223
  %v880 = vunpack.c.l.b16 %v224
  %v881 = vunpack.c.l.b16 %v225
  %v882 = vunpack.c.l.b16 %v226
  %v883 = vunpack.c.l.b16 %v227
  %v884 = vunpack.c.l.b16 %v228
  %v885 = vunpack.c.l.b16 %v229
  %v886 = vunpack.c.l.b16 %v230
  %v887 = vunpack.c.l.b16 %v231
  %v888 = vunpack.c.l.b16 %v232
  %v889 = vunpack.c.l.b16 %v233
  %v890 = vunpack.c.l.b16 %v234
  %v891 = vunpack.c.l.b16 %v235
  %v892 = vunpack.c.l.b16 %v236
  %v893 = vunpack.c.l.b16 %v237
  %v894 = vunpack.c.l.b16 %v238
  %v895 = vunpack.c.l.b16 %v239
  %v896 = vunpack.c.l.b16 %v240
  %v897 = vunpack.c.l.b16 %v241
  %v898 = vunpack.c.l.b16 %v242
  %v899 = vunpack.c.l.b16 %v243
  %v900 = vunpack.c.l.b16 %v244
  %v901 = vunpack.c.l.b16 %v245
  %v902 = vunpack.c.l.b16 %v246
  %v903 = vunpack.c.l.b16 %v247
  %v904 = vunpack.c.l.b16 %v248
  %v905 = vunpack.c.l.b16 %v249
  %v906 = vunpack.c.l.b16 %v250
  %v907 = vunpack.c.l.b16 %v251
  %v908 = vunpack.c.l.b16 %v252
  %v909 = vunpack.c.l.b16 %v253
  %v910 = vunpack.c.l.b16 %v254
  %v911 = vunpack.c.l.b16 %v255
  %v912 = vunpack.c.l.b16 %v256
  %v913 = vunpack.c.l.b16 %v257
  %v914 = vunpack.c.l.b16 %v258
  %v915 = vunpack.c.l.b16 %v259
  %v916 = vunpack.c.l.b16 %v260
  %v917 = vunpack.c.l.b16 %v261
  %v918 = vunpack.c.l.b16 %v262
  %v919 = vunpack.c.l.b16 %v263
  %v920 = vunpack.c.l.b16 %v264
  %v921 = vunpack.c.l.b16 %v265
  %v922 = vunpack.c.l.b16 %v266
  %v923 = vunpack.c.l.b16 %v267
  %v924 = vunpack.c.l.b16 %v268
  %v925 = vunpack.c.l.b16 %v269
  %v926 = vunpack.c.l.b16 %v270
  %v927 = vunpack.c.l.b16 %v271
  %v928 = vunpack.c.l.b16 %v272
  %v929 = vunpack.c.l.b16 %v273
  %v930 = vunpack.c.l.b16 %v274
  %v931 = vpack.c.b16 %v788, %v787
  %v932 = vpack.c.b16 %v790, %v789
  %v933 = vpack.c.b16 %v792, %v791
  %v934 = vpack.c.b16 %v794, %v793
  %v935 = vpack.c.b16 %v796, %v795
  %v936 = vpack.c.b16 %v798, %v797
  %v937 = vpack.c.b16 %v800, %v799
  %v938 = vpack.c.b16 %v802, %v801
  %v939 = vpack.c.b16 %v804, %v803
  %v940 = vpack.c.b16 %v806, %v805
  %v941 = vpack.c.b16 %v808, %v807
  %v942 = vpack.c.b16 %v810, %v809
  %v943 = vpack.c.b16 %v812, %v811
  %v944 = vpack.c.b16 %v814, %v813
  %v945 = vpack.c.b16 %v816, %v815
  %v946 = vpack.c.b16 %v818, %v817
  %v947 = vpack.c.b16 %v820, %v819
  %v948 = vpack.c.b16 %v822, %v821
  %v949 = vpack.c.b16 %v824, %v823
  %v950 = vpack.c.b16 %v826, %v825
  %v951 = vpack.c.b16 %v828, %v827
  %v952 = vpack.c.b16 %v830, %v829
  %v953 = vpack.c.b16 %v832, %v831
  %v954 = vpack.c.b16 %v834, %v833
  %v955 = vpack.c.b16 %v836, %v835
  %v956 = vpack.c.b16 %v838, %v837
  %v957 = vpack.c.b16 %v840, %v839
  %v958 = vpack.c.b16 %v842, %v841
  %v959 = vpack.c.b16 %v844, %v843
  %v960 = vpack.c.b16 %v846, %v845
  %v961 = vpack.c.b16 %v848, %v847
  %v962 = vpack.c.b16 %v850, %v849
  %v963 = vpack.c.b16 %v852, %v851
  %v964 = vpack.c.b16 %v854, %v853
  %v965 = vpack.c.b16 %v856, %v855
  %v966 = vpack.c.b16 %v858, %v857
  %v967 = vpack.c.b16 %v860, %v859
  %v968 = vpack.c.b16 %v862, %v861
  %v969 = vpack.c.b16 %v864, %v863
  %v970 = vpack.c.b16 %v866, %v865
  %v971 = vpack.c.b16 %v868, %v867
  %v972 = vpack.c.b16 %v870, %v869
  %v973 = vpack.c.b16 %v872, %v871
  %v974 = vpack.c.b16 %v874, %v873
  %v975 = vpack.c.b16 %v876, %v875
  %v976 = vpack.c.b16 %v878, %v877
  %v977 = vpack.c.b16 %v880, %v879
  %v978 = vpack.c.b16 %v882, %v881
  %v979 = vpack.c.b16 %v884, %v883
  %v980 = vpack.c.b16 %v886, %v885
  %v981 = vpack.c.b16 %v888, %v887
  %v982 = vpack.c.b16 %v890, %v889
  %v983 = vpack.c.b16 %v892, %v891
  %v984 = vpack.c.b16 %v894, %v893
  %v985 = vpack.c.b16 %v896, %v895
  %v986 = vpack.c.b16 %v898, %v897
  %v987 = vpack.c.b16 %v900, %v899
  %v988 = vpack.c.b16 %v902, %v901
  %v989 = vpack.c.b16 %v904, %v903
  %v990 = vpack.c.b16 %v906, %v905
  %v991 = vpack.c.b16 %v908, %v907
  %v992 = vpack.c.b16 %v910, %v909
  %v993 = vpack.c.b16 %v912, %v911
  %v994 = vpack.c.b16 %v914, %v913
  %v995 = vpack.c.b16 %v916, %v915
  %v996 = vpack.c.b16 %v918, %v917
  %v997 = vpack.c.b16 %v920, %v919
  %v998 = vpack.c.b16 %v922, %v921
  %v999 = vpack.c.b16 %v924, %v923
  %v1000 = vpack.c.b16 %v926, %v925
  %v1001 = vpack.c.b16 %v928, %v927
  %v1002 = vpack.c.b16 %v930, %v929
  %1075 = vmatprep.subr.bf16.mxu0 0
  %1076 = vmatpush1.bf16.msra.mxu0 %v931
  %1077 = vmatprep.subr.bf16.mxu0 0
  %1078 = vmatpush1.bf16.msra.mxu0 %v932
  %1079 = vmatprep.subr.bf16.mxu0 0
  %1080 = vmatpush1.bf16.msra.mxu0 %v933
  %1081 = vmatprep.subr.bf16.mxu0 0
  %1082 = vmatpush1.bf16.msra.mxu0 %v934
  %1083 = vmatprep.subr.bf16.mxu0 0
  %1084 = vmatpush1.bf16.msra.mxu0 %v935
  %1085 = vmatprep.subr.bf16.mxu0 0
  %1086 = vmatpush1.bf16.msra.mxu0 %v936
  %1087 = vmatprep.subr.bf16.mxu0 0
  %1088 = vmatpush1.bf16.msra.mxu0 %v937
  %1089 = vmatprep.subr.bf16.mxu0 0
  %1090 = vmatpush1.bf16.msra.mxu0 %v938
  %1091 = vmatprep.subr.bf16.mxu0 0
  %1092 = vmatpush1.bf16.msra.mxu0 %v939
  %1093 = vmatprep.subr.bf16.mxu0 0
  %1094 = vmatpush1.bf16.msra.mxu0 %v940
  %1095 = vmatprep.subr.bf16.mxu0 0
  %1096 = vmatpush1.bf16.msra.mxu0 %v941
  %1097 = vmatprep.subr.bf16.mxu0 0
  %1098 = vmatpush1.bf16.msra.mxu0 %v942
  %1099 = vmatprep.subr.bf16.mxu0 0
  %1100 = vmatpush1.bf16.msra.mxu0 %v943
  %1101 = vmatprep.subr.bf16.mxu0 0
  %1102 = vmatpush1.bf16.msra.mxu0 %v944
  %1103 = vmatprep.subr.bf16.mxu0 0
  %1104 = vmatpush1.bf16.msra.mxu0 %v945
  %1105 = vmatprep.subr.bf16.mxu0 0
  %1106 = vmatpush1.bf16.msra.mxu0 %v946
  %1107 = vmatprep.mubr.bf16.mxu0 %v500
  %1108 = vmatmul.mubr.bf16.gmra.mrb[0].mxu0 %v499
  %v1109 = vpop.f32.mrb[0].mxu0
  %v1110 = vadd.f32 0.0, %v1109
  %v1111 = vpop.f32.mrb[0].mxu0
  %v1112 = vpop.f32.mrb[0].mxu0
  %v1113 = vadd.f32 0.0, %v1112
  %v1114 = vpop.f32.mrb[0].mxu0
  %1115 = vmatprep.mubr.bf16.mxu0 %v509
  %1116 = vmatmul.mubr.bf16.gmra.mrb[0].mxu0 %v508
  %v1117 = vpop.f32.mrb[0].mxu0
  %v1118 = vadd.f32 0.0, %v1117
  %v1119 = vpop.f32.mrb[0].mxu0
  %v1120 = vpop.f32.mrb[0].mxu0
  %v1121 = vadd.f32 0.0, %v1120
  %v1122 = vpop.f32.mrb[0].mxu0
  %1123 = vmatprep.mubr.bf16.mxu0 %v518
  %1124 = vmatmul.mubr.bf16.gmra.mrb[0].mxu0 %v517
  %v1125 = vpop.f32.mrb[0].mxu0
  %v1126 = vadd.f32 0.0, %v1125
  %v1127 = vpop.f32.mrb[0].mxu0
  %v1128 = vpop.f32.mrb[0].mxu0
  %v1129 = vadd.f32 0.0, %v1128
  %v1130 = vpop.f32.mrb[0].mxu0
  %1131 = vmatprep.mubr.bf16.mxu0 %v527
  %1132 = vmatmul.mubr.bf16.gmra.mrb[0].mxu0 %v526
  %v1133 = vpop.f32.mrb[0].mxu0
  %v1134 = vadd.f32 0.0, %v1133
  %v1135 = vpop.f32.mrb[0].mxu0
  %v1136 = vpop.f32.mrb[0].mxu0
  %v1137 = vadd.f32 0.0, %v1136
  %v1138 = vpop.f32.mrb[0].mxu0
  %1139 = vmatprep.mubr.bf16.mxu0 %v536
  %1140 = vmatmul.mubr.bf16.gmra.mrb[0].mxu0 %v535
  %v1141 = vpop.f32.mrb[0].mxu0
  %v1142 = vadd.f32 0.0, %v1141
  %v1143 = vpop.f32.mrb[0].mxu0
  %v1144 = vpop.f32.mrb[0].mxu0
  %v1145 = vadd.f32 0.0, %v1144
  %v1146 = vpop.f32.mrb[0].mxu0
  %1147 = vmatprep.mubr.bf16.mxu0 %v545
  %1148 = vmatmul.mubr.bf16.gmra.mrb[0].mxu0 %v544
  %v1149 = vpop.f32.mrb[0].mxu0
  %v1150 = vadd.f32 0.0, %v1149
  %v1151 = vpop.f32.mrb[0].mxu0
  %v1152 = vpop.f32.mrb[0].mxu0
  %v1153 = vadd.f32 0.0, %v1152
  %v1154 = vpop.f32.mrb[0].mxu0
  %1155 = vmatprep.mubr.bf16.mxu0 %v554
  %1156 = vmatmul.mubr.bf16.gmra.mrb[0].mxu0 %v553
  %v1157 = vpop.f32.mrb[0].mxu0
  %v1158 = vadd.f32 0.0, %v1157
  %v1159 = vpop.f32.mrb[0].mxu0
  %v1160 = vpop.f32.mrb[0].mxu0
  %v1161 = vadd.f32 0.0, %v1160
  %v1162 = vpop.f32.mrb[0].mxu0
  %1163 = vmatprep.mubr.bf16.mxu0 %v563
  %1164 = vmatmul.mubr.bf16.gmra.mrb[0].mxu0 %v562
  %v1165 = vpop.f32.mrb[0].mxu0
  %v1166 = vadd.f32 0.0, %v1165
  %v1167 = vpop.f32.mrb[0].mxu0
  %v1168 = vpop.f32.mrb[0].mxu0
  %v1169 = vadd.f32 0.0, %v1168
  %v1170 = vpop.f32.mrb[0].mxu0
  %1171 = vdwg.mxu0
  %1172 = vmatprep.subr.bf16.mxu0 0
  %1173 = vmatpush1.bf16.msra.mxu0 %v947
  %1174 = vmatprep.subr.bf16.mxu0 0
  %1175 = vmatpush1.bf16.msra.mxu0 %v948
  %1176 = vmatprep.subr.bf16.mxu0 0
  %1177 = vmatpush1.bf16.msra.mxu0 %v949
  %1178 = vmatprep.subr.bf16.mxu0 0
  %1179 = vmatpush1.bf16.msra.mxu0 %v950
  %1180 = vmatprep.subr.bf16.mxu0 0
  %1181 = vmatpush1.bf16.msra.mxu0 %v951
  %1182 = vmatprep.subr.bf16.mxu0 0
  %1183 = vmatpush1.bf16.msra.mxu0 %v952
  %1184 = vmatprep.subr.bf16.mxu0 0
  %1185 = vmatpush1.bf16.msra.mxu0 %v953
  %1186 = vmatprep.subr.bf16.mxu0 0
  %1187 = vmatpush1.bf16.msra.mxu0 %v954
  %1188 = vmatprep.subr.bf16.mxu0 0
  %1189 = vmatpush1.bf16.msra.mxu0 %v955
  %1190 = vmatprep.subr.bf16.mxu0 0
  %1191 = vmatpush1.bf16.msra.mxu0 %v956
  %1192 = vmatprep.subr.bf16.mxu0 0
  %1193 = vmatpush1.bf16.msra.mxu0 %v957
  %1194 = vmatprep.subr.bf16.mxu0 0
  %1195 = vmatpush1.bf16.msra.mxu0 %v958
  %1196 = vmatprep.subr.bf16.mxu0 0
  %1197 = vmatpush1.bf16.msra.mxu0 %v959
  %1198 = vmatprep.subr.bf16.mxu0 0
  %1199 = vmatpush1.bf16.msra.mxu0 %v960
  %1200 = vmatprep.subr.bf16.mxu0 0
  %1201 = vmatpush1.bf16.msra.mxu0 %v961
  %1202 = vmatprep.subr.bf16.mxu0 0
  %1203 = vmatpush1.bf16.msra.mxu0 %v962
  %1204 = vmatprep.mubr.bf16.mxu0 %v502
  %1205 = vmatmul.mubr.bf16.gmra.mrb[0].mxu0 %v501
  %v1206 = vpop.f32.mrb[0].mxu0
  %v1207 = vadd.f32 %v1110, %v1206
  %v1208 = vpop.f32.mrb[0].mxu0
  %v1209 = vpop.f32.mrb[0].mxu0
  %v1210 = vadd.f32 %v1113, %v1209
  %v1211 = vpop.f32.mrb[0].mxu0
  %1212 = vmatprep.mubr.bf16.mxu0 %v511
  %1213 = vmatmul.mubr.bf16.gmra.mrb[0].mxu0 %v510
  %v1214 = vpop.f32.mrb[0].mxu0
  %v1215 = vadd.f32 %v1118, %v1214
  %v1216 = vpop.f32.mrb[0].mxu0
  %v1217 = vpop.f32.mrb[0].mxu0
  %v1218 = vadd.f32 %v1121, %v1217
  %v1219 = vpop.f32.mrb[0].mxu0
  %1220 = vmatprep.mubr.bf16.mxu0 %v520
  %1221 = vmatmul.mubr.bf16.gmra.mrb[0].mxu0 %v519
  %v1222 = vpop.f32.mrb[0].mxu0
  %v1223 = vadd.f32 %v1126, %v1222
  %v1224 = vpop.f32.mrb[0].mxu0
  %v1225 = vpop.f32.mrb[0].mxu0
  %v1226 = vadd.f32 %v1129, %v1225
  %v1227 = vpop.f32.mrb[0].mxu0
  %1228 = vmatprep.mubr.bf16.mxu0 %v529
  %1229 = vmatmul.mubr.bf16.gmra.mrb[0].mxu0 %v528
  %v1230 = vpop.f32.mrb[0].mxu0
  %v1231 = vadd.f32 %v1134, %v1230
  %v1232 = vpop.f32.mrb[0].mxu0
  %v1233 = vpop.f32.mrb[0].mxu0
  %v1234 = vadd.f32 %v1137, %v1233
  %v1235 = vpop.f32.mrb[0].mxu0
  %1236 = vmatprep.mubr.bf16.mxu0 %v538
  %1237 = vmatmul.mubr.bf16.gmra.mrb[0].mxu0 %v537
  %v1238 = vpop.f32.mrb[0].mxu0
  %v1239 = vadd.f32 %v1142, %v1238
  %v1240 = vpop.f32.mrb[0].mxu0
  %v1241 = vpop.f32.mrb[0].mxu0
  %v1242 = vadd.f32 %v1145, %v1241
  %v1243 = vpop.f32.mrb[0].mxu0
  %1244 = vmatprep.mubr.bf16.mxu0 %v547
  %1245 = vmatmul.mubr.bf16.gmra.mrb[0].mxu0 %v546
  %v1246 = vpop.f32.mrb[0].mxu0
  %v1247 = vadd.f32 %v1150, %v1246
  %v1248 = vpop.f32.mrb[0].mxu0
  %v1249 = vpop.f32.mrb[0].mxu0
  %v1250 = vadd.f32 %v1153, %v1249
  %v1251 = vpop.f32.mrb[0].mxu0
  %1252 = vmatprep.mubr.bf16.mxu0 %v556
  %1253 = vmatmul.mubr.bf16.gmra.mrb[0].mxu0 %v555
  %v1254 = vpop.f32.mrb[0].mxu0
  %v1255 = vadd.f32 %v1158, %v1254
  %v1256 = vpop.f32.mrb[0].mxu0
  %v1257 = vpop.f32.mrb[0].mxu0
  %v1258 = vadd.f32 %v1161, %v1257
  %v1259 = vpop.f32.mrb[0].mxu0
  %1260 = vmatprep.mubr.bf16.mxu0 %v565
  %1261 = vmatmul.mubr.bf16.gmra.mrb[0].mxu0 %v564
  %v1262 = vpop.f32.mrb[0].mxu0
  %v1263 = vadd.f32 %v1166, %v1262
  %v1264 = vpop.f32.mrb[0].mxu0
  %v1265 = vpop.f32.mrb[0].mxu0
  %v1266 = vadd.f32 %v1169, %v1265
  %v1267 = vpop.f32.mrb[0].mxu0
  %1268 = vdwg.mxu0
  %1269 = vmatprep.subr.bf16.mxu0 0
  %1270 = vmatpush1.bf16.msra.mxu0 %v963
  %1271 = vmatprep.subr.bf16.mxu0 0
  %1272 = vmatpush1.bf16.msra.mxu0 %v964
  %1273 = vmatprep.subr.bf16.mxu0 0
  %1274 = vmatpush1.bf16.msra.mxu0 %v965
  %1275 = vmatprep.subr.bf16.mxu0 0
  %1276 = vmatpush1.bf16.msra.mxu0 %v966
  %1277 = vmatprep.subr.bf16.mxu0 0
  %1278 = vmatpush1.bf16.msra.mxu0 %v967
  %1279 = vmatprep.subr.bf16.mxu0 0
  %1280 = vmatpush1.bf16.msra.mxu0 %v968
  %1281 = vmatprep.subr.bf16.mxu0 0
  %1282 = vmatpush1.bf16.msra.mxu0 %v969
  %1283 = vmatprep.subr.bf16.mxu0 0
  %1284 = vmatpush1.bf16.msra.mxu0 %v970
  %1285 = vmatprep.subr.bf16.mxu0 0
  %1286 = vmatpush1.bf16.msra.mxu0 %v971
  %1287 = vmatprep.subr.bf16.mxu0 0
  %1288 = vmatpush1.bf16.msra.mxu0 %v972
  %1289 = vmatprep.subr.bf16.mxu0 0
  %1290 = vmatpush1.bf16.msra.mxu0 %v973
  %1291 = vmatprep.subr.bf16.mxu0 0
  %1292 = vmatpush1.bf16.msra.mxu0 %v974
  %1293 = vmatprep.subr.bf16.mxu0 0
  %1294 = vmatpush1.bf16.msra.mxu0 %v975
  %1295 = vmatprep.subr.bf16.mxu0 0
  %1296 = vmatpush1.bf16.msra.mxu0 %v976
  %1297 = vmatprep.subr.bf16.mxu0 0
  %1298 = vmatpush1.bf16.msra.mxu0 %v977
  %1299 = vmatprep.subr.bf16.mxu0 0
  %1300 = vmatpush1.bf16.msra.mxu0 %v978
  %1301 = vmatprep.mubr.bf16.mxu0 %v504
  %1302 = vmatmul.mubr.bf16.gmra.mrb[0].mxu0 %v503
  %v1303 = vpop.f32.mrb[0].mxu0
  %v1304 = vadd.f32 %v1207, %v1303
  %v1305 = vpop.f32.mrb[0].mxu0
  %v1306 = vpop.f32.mrb[0].mxu0
  %v1307 = vadd.f32 %v1210, %v1306
  %v1308 = vpop.f32.mrb[0].mxu0
  %1309 = vmatprep.mubr.bf16.mxu0 %v513
  %1310 = vmatmul.mubr.bf16.gmra.mrb[0].mxu0 %v512
  %v1311 = vpop.f32.mrb[0].mxu0
  %v1312 = vadd.f32 %v1215, %v1311
  %v1313 = vpop.f32.mrb[0].mxu0
  %v1314 = vpop.f32.mrb[0].mxu0
  %v1315 = vadd.f32 %v1218, %v1314
  %v1316 = vpop.f32.mrb[0].mxu0
  %1317 = vmatprep.mubr.bf16.mxu0 %v522
  %1318 = vmatmul.mubr.bf16.gmra.mrb[0].mxu0 %v521
  %v1319 = vpop.f32.mrb[0].mxu0
  %v1320 = vadd.f32 %v1223, %v1319
  %v1321 = vpop.f32.mrb[0].mxu0
  %v1322 = vpop.f32.mrb[0].mxu0
  %v1323 = vadd.f32 %v1226, %v1322
  %v1324 = vpop.f32.mrb[0].mxu0
  %1325 = vmatprep.mubr.bf16.mxu0 %v531
  %1326 = vmatmul.mubr.bf16.gmra.mrb[0].mxu0 %v530
  %v1327 = vpop.f32.mrb[0].mxu0
  %v1328 = vadd.f32 %v1231, %v1327
  %v1329 = vpop.f32.mrb[0].mxu0
  %v1330 = vpop.f32.mrb[0].mxu0
  %v1331 = vadd.f32 %v1234, %v1330
  %v1332 = vpop.f32.mrb[0].mxu0
  %1333 = vmatprep.mubr.bf16.mxu0 %v540
  %1334 = vmatmul.mubr.bf16.gmra.mrb[0].mxu0 %v539
  %v1335 = vpop.f32.mrb[0].mxu0
  %v1336 = vadd.f32 %v1239, %v1335
  %v1337 = vpop.f32.mrb[0].mxu0
  %v1338 = vpop.f32.mrb[0].mxu0
  %v1339 = vadd.f32 %v1242, %v1338
  %v1340 = vpop.f32.mrb[0].mxu0
  %1341 = vmatprep.mubr.bf16.mxu0 %v549
  %1342 = vmatmul.mubr.bf16.gmra.mrb[0].mxu0 %v548
  %v1343 = vpop.f32.mrb[0].mxu0
  %v1344 = vadd.f32 %v1247, %v1343
  %v1345 = vpop.f32.mrb[0].mxu0
  %v1346 = vpop.f32.mrb[0].mxu0
  %v1347 = vadd.f32 %v1250, %v1346
  %v1348 = vpop.f32.mrb[0].mxu0
  %1349 = vmatprep.mubr.bf16.mxu0 %v558
  %1350 = vmatmul.mubr.bf16.gmra.mrb[0].mxu0 %v557
  %v1351 = vpop.f32.mrb[0].mxu0
  %v1352 = vadd.f32 %v1255, %v1351
  %v1353 = vpop.f32.mrb[0].mxu0
  %v1354 = vpop.f32.mrb[0].mxu0
  %v1355 = vadd.f32 %v1258, %v1354
  %v1356 = vpop.f32.mrb[0].mxu0
  %1357 = vmatprep.mubr.bf16.mxu0 %v567
  %1358 = vmatmul.mubr.bf16.gmra.mrb[0].mxu0 %v566
  %v1359 = vpop.f32.mrb[0].mxu0
  %v1360 = vadd.f32 %v1263, %v1359
  %v1361 = vpop.f32.mrb[0].mxu0
  %v1362 = vpop.f32.mrb[0].mxu0
  %v1363 = vadd.f32 %v1266, %v1362
  %v1364 = vpop.f32.mrb[0].mxu0
  %1365 = vdwg.mxu0
  %1366 = vmatprep.subr.bf16.mxu0 0
  %1367 = vmatpush1.bf16.msra.mxu0 %v979
  %1368 = vmatprep.subr.bf16.mxu0 0
  %1369 = vmatpush1.bf16.msra.mxu0 %v980
  %1370 = vmatprep.subr.bf16.mxu0 0
  %1371 = vmatpush1.bf16.msra.mxu0 %v981
  %1372 = vmatprep.subr.bf16.mxu0 0
  %1373 = vmatpush1.bf16.msra.mxu0 %v982
  %1374 = vmatprep.subr.bf16.mxu0 0
  %1375 = vmatpush1.bf16.msra.mxu0 %v983
  %1376 = vmatprep.subr.bf16.mxu0 0
  %1377 = vmatpush1.bf16.msra.mxu0 %v984
  %1378 = vmatprep.subr.bf16.mxu0 0
  %1379 = vmatpush1.bf16.msra.mxu0 %v985
  %1380 = vmatprep.subr.bf16.mxu0 0
  %1381 = vmatpush1.bf16.msra.mxu0 %v986
  %1382 = vmatprep.subr.bf16.mxu0 0
  %1383 = vmatpush1.bf16.msra.mxu0 %v987
  %1384 = vmatprep.subr.bf16.mxu0 0
  %1385 = vmatpush1.bf16.msra.mxu0 %v988
  %1386 = vmatprep.subr.bf16.mxu0 0
  %1387 = vmatpush1.bf16.msra.mxu0 %v989
  %1388 = vmatprep.subr.bf16.mxu0 0
  %1389 = vmatpush1.bf16.msra.mxu0 %v990
  %1390 = vmatprep.subr.bf16.mxu0 0
  %1391 = vmatpush1.bf16.msra.mxu0 %v991
  %1392 = vmatprep.subr.bf16.mxu0 0
  %1393 = vmatpush1.bf16.msra.mxu0 %v992
  %1394 = vmatprep.subr.bf16.mxu0 0
  %1395 = vmatpush1.bf16.msra.mxu0 %v993
  %1396 = vmatprep.subr.bf16.mxu0 0
  %1397 = vmatpush1.bf16.msra.mxu0 %v994
  %1398 = vmatprep.mubr.bf16.mxu0 %v506
  %1399 = vmatmul.mubr.bf16.gmra.mrb[0].mxu0 %v505
  %v1400 = vpop.f32.mrb[0].mxu0
  %v1401 = vadd.f32 %v1304, %v1400
  %v1402 = vpop.f32.mrb[0].mxu0
  %v1403 = vpop.f32.mrb[0].mxu0
  %v1404 = vadd.f32 %v1307, %v1403
  %v1405 = vpop.f32.mrb[0].mxu0
  %1406 = vmatprep.mubr.bf16.mxu0 %v515
  %1407 = vmatmul.mubr.bf16.gmra.mrb[0].mxu0 %v514
  %v1408 = vpop.f32.mrb[0].mxu0
  %v1409 = vadd.f32 %v1312, %v1408
  %v1410 = vpop.f32.mrb[0].mxu0
  %v1411 = vpop.f32.mrb[0].mxu0
  %v1412 = vadd.f32 %v1315, %v1411
  %v1413 = vpop.f32.mrb[0].mxu0
  %1414 = vmatprep.mubr.bf16.mxu0 %v524
  %1415 = vmatmul.mubr.bf16.gmra.mrb[0].mxu0 %v523
  %v1416 = vpop.f32.mrb[0].mxu0
  %v1417 = vadd.f32 %v1320, %v1416
  %v1418 = vpop.f32.mrb[0].mxu0
  %v1419 = vpop.f32.mrb[0].mxu0
  %v1420 = vadd.f32 %v1323, %v1419
  %v1421 = vpop.f32.mrb[0].mxu0
  %1422 = vmatprep.mubr.bf16.mxu0 %v533
  %1423 = vmatmul.mubr.bf16.gmra.mrb[0].mxu0 %v532
  %v1424 = vpop.f32.mrb[0].mxu0
  %v1425 = vadd.f32 %v1328, %v1424
  %v1426 = vpop.f32.mrb[0].mxu0
  %v1427 = vpop.f32.mrb[0].mxu0
  %v1428 = vadd.f32 %v1331, %v1427
  %v1429 = vpop.f32.mrb[0].mxu0
  %1430 = vmatprep.mubr.bf16.mxu0 %v542
  %1431 = vmatmul.mubr.bf16.gmra.mrb[0].mxu0 %v541
  %v1432 = vpop.f32.mrb[0].mxu0
  %v1433 = vadd.f32 %v1336, %v1432
  %v1434 = vpop.f32.mrb[0].mxu0
  %v1435 = vpop.f32.mrb[0].mxu0
  %v1436 = vadd.f32 %v1339, %v1435
  %v1437 = vpop.f32.mrb[0].mxu0
  %1438 = vmatprep.mubr.bf16.mxu0 %v551
  %1439 = vmatmul.mubr.bf16.gmra.mrb[0].mxu0 %v550
  %v1440 = vpop.f32.mrb[0].mxu0
  %v1441 = vadd.f32 %v1344, %v1440
  %v1442 = vpop.f32.mrb[0].mxu0
  %v1443 = vpop.f32.mrb[0].mxu0
  %v1444 = vadd.f32 %v1347, %v1443
  %v1445 = vpop.f32.mrb[0].mxu0
  %1446 = vmatprep.mubr.bf16.mxu0 %v560
  %1447 = vmatmul.mubr.bf16.gmra.mrb[0].mxu0 %v559
  %v1448 = vpop.f32.mrb[0].mxu0
  %v1449 = vadd.f32 %v1352, %v1448
  %v1450 = vpop.f32.mrb[0].mxu0
  %v1451 = vpop.f32.mrb[0].mxu0
  %v1452 = vadd.f32 %v1355, %v1451
  %v1453 = vpop.f32.mrb[0].mxu0
  %1454 = vmatprep.mubr.bf16.mxu0 %v569
  %1455 = vmatmul.mubr.bf16.gmra.mrb[0].mxu0 %v568
  %v1456 = vpop.f32.mrb[0].mxu0
  %v1457 = vadd.f32 %v1360, %v1456
  %v1458 = vpop.f32.mrb[0].mxu0
  %v1459 = vpop.f32.mrb[0].mxu0
  %v1460 = vadd.f32 %v1363, %v1459
  %v1461 = vpop.f32.mrb[0].mxu0
  %1462 = vdwg.mxu0
  %1463 = vmatprep.subr.bf16.mxu0 0
  %1464 = vmatpush1.bf16.msra.mxu0 %v995
  %1465 = vmatprep.subr.bf16.mxu0 0
  %1466 = vmatpush1.bf16.msra.mxu0 %v996
  %1467 = vmatprep.subr.bf16.mxu0 0
  %1468 = vmatpush1.bf16.msra.mxu0 %v997
  %1469 = vmatprep.subr.bf16.mxu0 0
  %1470 = vmatpush1.bf16.msra.mxu0 %v998
  %1471 = vmatprep.subr.bf16.mxu0 0
  %1472 = vmatpush1.bf16.msra.mxu0 %v999
  %1473 = vmatprep.subr.bf16.mxu0 0
  %1474 = vmatpush1.bf16.msra.mxu0 %v1000
  %1475 = vmatprep.subr.bf16.mxu0 0
  %1476 = vmatpush1.bf16.msra.mxu0 %v1001
  %1477 = vmatprep.subr.bf16.mxu0 0
  %1478 = vmatpush1.bf16.msra.mxu0 %v1002
  %1479 = vmatprep.subr.bf16.mxu0 0
  %1480 = vmatpush1.bf16.msra.mxu0 0
  %1481 = vmatprep.subr.bf16.mxu0 0
  %1482 = vmatpush1.bf16.msra.mxu0 0
  %1483 = vmatprep.subr.bf16.mxu0 0
  %1484 = vmatpush1.bf16.msra.mxu0 0
  %1485 = vmatprep.subr.bf16.mxu0 0
  %1486 = vmatpush1.bf16.msra.mxu0 0
  %1487 = vmatprep.subr.bf16.mxu0 0
  %1488 = vmatpush1.bf16.msra.mxu0 0
  %1489 = vmatprep.subr.bf16.mxu0 0
  %1490 = vmatpush1.bf16.msra.mxu0 0
  %1491 = vmatprep.subr.bf16.mxu0 0
  %1492 = vmatpush1.bf16.msra.mxu0 0
  %1493 = vmatprep.subr.bf16.mxu0 0
  %1494 = vmatpush1.bf16.msra.mxu0 0
  %1495 = vmatprep.mubr.bf16.mxu0 0
  %1496 = vmatmul.mubr.bf16.gmra.mrb[0].mxu0 %v507
  %v1497 = vpop.f32.mrb[0].mxu0
  %v1498 = vadd.f32 %v1401, %v1497
  %v1499 = vpop.f32.mrb[0].mxu0
  %v1500 = vpop.f32.mrb[0].mxu0
  %v1501 = vadd.f32 %v1404, %v1500
  %v1502 = vpop.f32.mrb[0].mxu0
  %1503 = vmatprep.mubr.bf16.mxu0 0
  %1504 = vmatmul.mubr.bf16.gmra.mrb[0].mxu0 %v516
  %v1505 = vpop.f32.mrb[0].mxu0
  %v1506 = vadd.f32 %v1409, %v1505
  %v1507 = vpop.f32.mrb[0].mxu0
  %v1508 = vpop.f32.mrb[0].mxu0
  %v1509 = vadd.f32 %v1412, %v1508
  %v1510 = vpop.f32.mrb[0].mxu0
  %1511 = vmatprep.mubr.bf16.mxu0 0
  %1512 = vmatmul.mubr.bf16.gmra.mrb[0].mxu0 %v525
  %v1513 = vpop.f32.mrb[0].mxu0
  %v1514 = vadd.f32 %v1417, %v1513
  %v1515 = vpop.f32.mrb[0].mxu0
  %v1516 = vpop.f32.mrb[0].mxu0
  %v1517 = vadd.f32 %v1420, %v1516
  %v1518 = vpop.f32.mrb[0].mxu0
  %1519 = vmatprep.mubr.bf16.mxu0 0
  %1520 = vmatmul.mubr.bf16.gmra.mrb[0].mxu0 %v534
  %v1521 = vpop.f32.mrb[0].mxu0
  %v1522 = vadd.f32 %v1425, %v1521
  %v1523 = vpop.f32.mrb[0].mxu0
  %v1524 = vpop.f32.mrb[0].mxu0
  %v1525 = vadd.f32 %v1428, %v1524
  %v1526 = vpop.f32.mrb[0].mxu0
  %1527 = vmatprep.mubr.bf16.mxu0 0
  %1528 = vmatmul.mubr.bf16.gmra.mrb[0].mxu0 %v543
  %v1529 = vpop.f32.mrb[0].mxu0
  %v1530 = vadd.f32 %v1433, %v1529
  %v1531 = vpop.f32.mrb[0].mxu0
  %v1532 = vpop.f32.mrb[0].mxu0
  %v1533 = vadd.f32 %v1436, %v1532
  %v1534 = vpop.f32.mrb[0].mxu0
  %1535 = vmatprep.mubr.bf16.mxu0 0
  %1536 = vmatmul.mubr.bf16.gmra.mrb[0].mxu0 %v552
  %v1537 = vpop.f32.mrb[0].mxu0
  %v1538 = vadd.f32 %v1441, %v1537
  %v1539 = vpop.f32.mrb[0].mxu0
  %v1540 = vpop.f32.mrb[0].mxu0
  %v1541 = vadd.f32 %v1444, %v1540
  %v1542 = vpop.f32.mrb[0].mxu0
  %1543 = vmatprep.mubr.bf16.mxu0 0
  %1544 = vmatmul.mubr.bf16.gmra.mrb[0].mxu0 %v561
  %v1545 = vpop.f32.mrb[0].mxu0
  %v1546 = vadd.f32 %v1449, %v1545
  %v1547 = vpop.f32.mrb[0].mxu0
  %v1548 = vpop.f32.mrb[0].mxu0
  %v1549 = vadd.f32 %v1452, %v1548
  %v1550 = vpop.f32.mrb[0].mxu0
  %1551 = vmatprep.mubr.bf16.mxu0 0
  %1552 = vmatmul.mubr.bf16.gmra.mrb[0].mxu0 %v570
  %v1553 = vpop.f32.mrb[0].mxu0
  %v1554 = vadd.f32 %v1457, %v1553
  %v1555 = vpop.f32.mrb[0].mxu0
  %v1556 = vpop.f32.mrb[0].mxu0
  %v1557 = vadd.f32 %v1460, %v1556
  %v1558 = vpop.f32.mrb[0].mxu0
  %1559 = vdwg.mxu0
  %v1560 = vadd.f32 %v35, %v1498
  %v1561 = vadd.f32 %v36, %v1501
  %v1562 = vadd.f32 %v37, %v1506
  %v1563 = vadd.f32 %v38, %v1509
  %v1564 = vadd.f32 %v39, %v1514
  %v1565 = vadd.f32 %v40, %v1517
  %v1566 = vadd.f32 %v41, %v1522
  %v1567 = vadd.f32 %v42, %v1525
  %v1568 = vadd.f32 %v43, %v1530
  %v1569 = vadd.f32 %v44, %v1533
  %v1570 = vadd.f32 %v45, %v1538
  %v1571 = vadd.f32 %v46, %v1541
  %v1572 = vadd.f32 %v47, %v1546
  %v1573 = vadd.f32 %v48, %v1549
  %v1574 = vadd.f32 %v49, %v1554
  %v1575 = vadd.f32 %v50, %v1557
  %1576 = vst [vmem:[%s3] sm:$0xff] %v1560
  %1577 = vst [vmem:[%s3 + $0x8] sm:$0xff] %v1561
  %1578 = vst [vmem:[%s3 + $0x10] sm:$0xff] %v1562
  %1579 = vst [vmem:[%s3 + $0x18] sm:$0xff] %v1563
  %1580 = vst [vmem:[%s3 + $0x20] sm:$0xff] %v1564
  %1581 = vst [vmem:[%s3 + $0x28] sm:$0xff] %v1565
  %1582 = vst [vmem:[%s3 + $0x30] sm:$0xff] %v1566
  %1583 = vst [vmem:[%s3 + $0x38] sm:$0xff] %v1567
  %1584 = vst [vmem:[%s3 + $0x40] sm:$0xff] %v1568
  %1585 = vst [vmem:[%s3 + $0x48] sm:$0xff] %v1569
  %1586 = vst [vmem:[%s3 + $0x50] sm:$0xff] %v1570
  %1587 = vst [vmem:[%s3 + $0x58] sm:$0xff] %v1571
  %1588 = vst [vmem:[%s3 + $0x60] sm:$0xff] %v1572
  %1589 = vst [vmem:[%s3 + $0x68] sm:$0xff] %v1573
  %1590 = vst [vmem:[%s3 + $0x70] sm:$0xff] %v1574
  %1591 = vst [vmem:[%s3 + $0x78] sm:$0xff] %v1575
  // Predicated region
  $region18: #{embedding_node_classifier_forward.7} parent=0 // pred_check
    %p1592 = pneg %p15
  $region19: #{embedding_node_classifier_forward.7} parent=0 // pred_check_branch
    %1594 = sbr.rel (%p1592) target = $region21
  $region20: #{embedding_node_classifier_forward.7} parent=0 // pred_region
    %v1595 = vld [vmem:[%s3] sm:$0xff]
    %v1596 = vld [vmem:[%s3 + $0x8] sm:$0xff]
    %v1597 = vld [vmem:[%s3 + $0x10] sm:$0xff]
    %v1598 = vld [vmem:[%s3 + $0x18] sm:$0xff]
    %v1599 = vld [vmem:[%s3 + $0x20] sm:$0xff]
    %v1600 = vld [vmem:[%s3 + $0x28] sm:$0xff]
    %v1601 = vld [vmem:[%s3 + $0x30] sm:$0xff]
    %v1602 = vld [vmem:[%s3 + $0x38] sm:$0xff]
    %v1603 = vld [vmem:[%s3 + $0x40] sm:$0xff]
    %v1604 = vld [vmem:[%s3 + $0x48] sm:$0xff]
    %v1605 = vld [vmem:[%s3 + $0x50] sm:$0xff]
    %v1606 = vld [vmem:[%s3 + $0x58] sm:$0xff]
    %v1607 = vld [vmem:[%s3 + $0x60] sm:$0xff]
    %v1608 = vld [vmem:[%s3 + $0x68] sm:$0xff]
    %v1609 = vld [vmem:[%s3 + $0x70] sm:$0xff]
    %v1610 = vld [vmem:[%s3 + $0x78] sm:$0xff]
    %v1611 = vld [vmem:[%s2] sm:$0x1]
    %v1613 = vlaneseq
    %v1614 = vshrl.u32 %v1613, 7
    %v1615 = vsub.s32 0, %v1614
    %v1616 = vrot.slane %v1611, %v1615
    %v1618 = vadd.f32 %v1595, %v1616
    %v1619 = vadd.f32 %v1596, %v1616
    %v1620 = vadd.f32 %v1597, %v1616
    %v1621 = vadd.f32 %v1598, %v1616
    %v1622 = vadd.f32 %v1599, %v1616
    %v1623 = vadd.f32 %v1600, %v1616
    %v1624 = vadd.f32 %v1601, %v1616
    %v1625 = vadd.f32 %v1602, %v1616
    %v1626 = vadd.f32 %v1603, %v1616
    %v1627 = vadd.f32 %v1604, %v1616
    %v1628 = vadd.f32 %v1605, %v1616
    %v1629 = vadd.f32 %v1606, %v1616
    %v1630 = vadd.f32 %v1607, %v1616
    %v1631 = vadd.f32 %v1608, %v1616
    %v1632 = vadd.f32 %v1609, %v1616
    %v1633 = vadd.f32 %v1610, %v1616
    %1634 = vst [vmem:[%s3] sm:$0xff] %v1618
    %1635 = vst [vmem:[%s3 + $0x8] sm:$0xff] %v1619
    %1636 = vst [vmem:[%s3 + $0x10] sm:$0xff] %v1620
    %1637 = vst [vmem:[%s3 + $0x18] sm:$0xff] %v1621
    %1638 = vst [vmem:[%s3 + $0x20] sm:$0xff] %v1622
    %1639 = vst [vmem:[%s3 + $0x28] sm:$0xff] %v1623
    %1640 = vst [vmem:[%s3 + $0x30] sm:$0xff] %v1624
    %1641 = vst [vmem:[%s3 + $0x38] sm:$0xff] %v1625
    %1642 = vst [vmem:[%s3 + $0x40] sm:$0xff] %v1626
    %1643 = vst [vmem:[%s3 + $0x48] sm:$0xff] %v1627
    %1644 = vst [vmem:[%s3 + $0x50] sm:$0xff] %v1628
    %1645 = vst [vmem:[%s3 + $0x58] sm:$0xff] %v1629
    %1646 = vst [vmem:[%s3 + $0x60] sm:$0xff] %v1630
    %1647 = vst [vmem:[%s3 + $0x68] sm:$0xff] %v1631
    %1648 = vst [vmem:[%s3 + $0x70] sm:$0xff] %v1632
    %1649 = vst [vmem:[%s3 + $0x78] sm:$0xff] %v1633
  $region21: #{embedding_node_classifier_forward.7} parent=0 // pred_fallthru
    _
  // Predicated region
  $region22: #{embedding_node_classifier_forward.7} parent=0 // pred_check
    _
  $region23: #{embedding_node_classifier_forward.7} parent=0 // pred_check_branch
    %1651 = sbr.rel (0) target = $region25
  $region24: #{embedding_node_classifier_forward.7} parent=0 // pred_region
    _
  $region25: #{embedding_node_classifier_forward.7} parent=0 // pred_fallthru
    _
  // Predicated region
  $region26: #{embedding_node_classifier_forward.7} parent=0 // pred_check
    _
  $region27: #{embedding_node_classifier_forward.7} parent=0 // pred_check_branch
    %1653 = sbr.rel (0) target = $region29
  $region28: #{embedding_node_classifier_forward.7} parent=0 // pred_region
    _
  $region29: #{embedding_node_classifier_forward.7} parent=0 // pred_fallthru
    _

</llo_original>
